<compile_context>
chip_gen: v5e
topology: v5e:2x2
jax: 0.10.0
libtpu: 0.0.40
codegen_flags: <defaults>
</compile_context>

<pallas_src>
import jax
import jax.numpy as jnp
from jax import lax
from jax.experimental import pallas as pl
from jax.experimental.pallas import tpu as pltpu

# ---------------- synthetic configuration (args) ----------------
B = 16       # total batch (multiple of BT so sublanes are filled)
BT = 8       # batch tile per grid step (one full sublane group)
S = 8        # question sequence length
E = 32       # word embedding dim (PyTorch code uses 300)
H = 32       # num_hid
V = 64       # v_dim
G = 2        # glimpse (args.gamma)
K = 3        # BCNet k used by BiAttention -> projected dim H*K
HK = H * K
GH = G * H
VOCAB = 20   # ntoken (row VOCAB is the zero padding row)


def ban_kernel(w_emb_ref, v_ref,
               w_ih_ref, w_hh_ref, b_ih_ref, b_hh_ref,
               wv_att_ref, bv_att_ref, wq_att_ref, bq_att_ref,
               h_mat_ref, h_bias_ref,
               wvb_ref, bvb_ref, wqb_ref, bqb_ref,
               wp_ref, bp_ref,
               out_ref, qs_ref):
    x = w_emb_ref[...]          # (BT, S, E)
    v = v_ref[...]              # (BT, V)

    # ---------- QuestionEmbedding.forward_all : 1-layer unidirectional GRU (fused gates) ----------
    w_ih = w_ih_ref[...]        # (E, 3H)   gates [r | z | n]
    w_hh = w_hh_ref[...]        # (H, 3H)
    b_ih = b_ih_ref[...]        # (1, 3H)
    b_hh = b_hh_ref[...]        # (1, 3H)

    x2 = x.reshape(BT * S, E)
    xg = (jnp.dot(x2, w_ih, preferred_element_type=jnp.float32) + b_ih).reshape(BT, S, 3 * H)

    h = jnp.zeros((BT, H), jnp.float32)
    for t in range(S):          # static unroll, S is small
        hg = jnp.dot(h, w_hh, preferred_element_type=jnp.float32) + b_hh   # (BT, 3H)
        xt = xg[:, t, :]
        r = jax.nn.sigmoid(xt[:, 0:H] + hg[:, 0:H])
        z = jax.nn.sigmoid(xt[:, H:2 * H] + hg[:, H:2 * H])
        n = jnp.tanh(xt[:, 2 * H:3 * H] + r * hg[:, 2 * H:3 * H])
        h = (1.0 - z) * n + z * h
        qs_ref[:, t, :] = h     # per-step store into VMEM scratch (no concatenate)

    q_emb0 = qs_ref[...]        # (BT, S, H)

    # ---------- BiAttention.forward_all  (BCNet k=3, h_out = G) ----------
    v_att = jax.nn.relu(
        jnp.dot(v, wv_att_ref[...], preferred_element_type=jnp.float32) + bv_att_ref[...])      # (BT, HK)
    q_att = jax.nn.relu(
        jnp.dot(q_emb0.reshape(BT * S, H), wq_att_ref[...],
                preferred_element_type=jnp.float32) + bq_att_ref[...]).reshape(BT, S, HK)        # (BT, S, HK)

    h_mat = h_mat_ref[...]      # (G, HK)
    h_bias = h_bias_ref[...]    # (G, 1)

    # logits[b, g, s] = sum_k v_att[b,k] * h_mat[g,k] * q_att[b,s,k] + h_bias[g]   (v_num == 1)
    hv = v_att[:, None, :] * h_mat[None, :, :]                                    # (BT, G, HK)
    logits = lax.dot_general(hv, q_att,
                             dimension_numbers=(((2,), (2,)), ((0,), (0,))),
                             preferred_element_type=jnp.float32) + h_bias[None, :, :]  # (BT, G, S)

    # v_mask: rows of v_emb that are exactly zero get -inf logits (mirrors reference)
    v_zero = (jnp.sum(jnp.abs(v), axis=-1, keepdims=True) == 0.0)                 # (BT, 1)
    logits = jnp.where(v_zero[:, :, None], -jnp.inf, logits)

    att = jax.nn.softmax(logits, axis=-1)                                         # (BT, G, S)

    # ---------- glimpse loop: BCNet(k=1).forward_with_weights + q_prj residual ----------
    # glimpse-invariant v-side matmul fused across glimpses: (BT,V) x (V, G*H)
    vb_all = jax.nn.relu(
        jnp.dot(v, wvb_ref[...], preferred_element_type=jnp.float32) + bvb_ref[...])             # (BT, G*H)

    q_emb = q_emb0
    for g in range(G):
        qb = jax.nn.relu(
            jnp.dot(q_emb.reshape(BT * S, H), wqb_ref[g],
                    preferred_element_type=jnp.float32) + bqb_ref[g]).reshape(BT, S, H)          # (BT, S, H)
        # attention-weighted sum over the sequence axis on the MXU
        att_g = att[:, g:g + 1, :]                                                # (BT, 1, S)
        wq = lax.dot_general(att_g, qb,
                             dimension_numbers=(((2,), (1,)), ((0,), (0,))),
                             preferred_element_type=jnp.float32)[:, 0, :]         # (BT, H)
        b_emb = vb_all[:, g * H:(g + 1) * H] * wq                                 # (BT, H)
        proj = jnp.dot(b_emb, wp_ref[g], preferred_element_type=jnp.float32) + bp_ref[g]         # (BT, H)
        q_emb = q_emb + proj[:, None, :]                                          # broadcast over seq
        # NOTE: `atten, _ = logits[:, g].max(2)` in the reference forward is dead code.

    out_ref[...] = jnp.sum(q_emb, axis=1)                                         # (BT, H)


def init_params(key):
    ks = jax.random.split(key, 16)
    s = 0.1
    emb_table = jax.random.normal(ks[0], (VOCAB + 1, E), jnp.float32) * s
    emb_table = emb_table.at[VOCAB].set(0.0)                       # padding_idx row

    p = dict(
        emb_table=emb_table,
        # GRU (gate order r, z, n), weights pre-transposed to (in, out)
        w_ih=jax.random.normal(ks[1], (3, E, H), jnp.float32) * s,
        w_hh=jax.random.normal(ks[2], (3, H, H), jnp.float32) * s,
        b_ih=jax.random.normal(ks[3], (3, 1, H), jnp.float32) * s,
        b_hh=jax.random.normal(ks[4], (3, 1, H), jnp.float32) * s,
        # BiAttention BCNet (k=3): v_net (V -> H*K), q_net (H -> H*K), h_mat, h_bias
        wv_att=jax.random.normal(ks[5], (V, HK), jnp.float32) * s,
        bv_att=jax.random.normal(ks[6], (1, HK), jnp.float32) * s,
        wq_att=jax.random.normal(ks[7], (H, HK), jnp.float32) * s,
        bq_att=jax.random.normal(ks[8], (1, HK), jnp.float32) * s,
        h_mat=jax.random.normal(ks[9], (G, HK), jnp.float32) * s,
        h_bias=jax.random.normal(ks[10], (G, 1), jnp.float32) * s,
        # per-glimpse BCNet (k=1): v_net (V -> H), q_net (H -> H)
        wvb=jax.random.normal(ks[11], (G, V, H), jnp.float32) * s,
        bvb=jax.random.normal(ks[12], (G, 1, H), jnp.float32) * s,
        wqb=jax.random.normal(ks[13], (G, H, H), jnp.float32) * s,
        bqb=jax.random.normal(ks[14], (G, 1, H), jnp.float32) * s,
        # q_prj: FCNet([H, H], act='') -> plain linear
        wp=jax.random.normal(ks[15], (G, H, H), jnp.float32) * s,
        bp=jnp.zeros((G, 1, H), jnp.float32),
    )
    return p


def _full_spec(shape):
    nd = len(shape)
    return pl.BlockSpec(shape, lambda i, _nd=nd: (0,) * _nd)


def ban_forward(v, q_tokens, p):
    # glue: embedding lookup (gather) stays in plain JAX
    w_emb = jnp.take(p['emb_table'], q_tokens, axis=0)             # (B, S, E)

    # host-side weight fusion (no per-call cost once jitted / constant-folded)
    w_ih_f = jnp.concatenate([p['w_ih'][0], p['w_ih'][1], p['w_ih'][2]], axis=1)   # (E, 3H)
    w_hh_f = jnp.concatenate([p['w_hh'][0], p['w_hh'][1], p['w_hh'][2]], axis=1)   # (H, 3H)
    b_ih_f = jnp.concatenate([p['b_ih'][0], p['b_ih'][1], p['b_ih'][2]], axis=1)   # (1, 3H)
    b_hh_f = jnp.concatenate([p['b_hh'][0], p['b_hh'][1], p['b_hh'][2]], axis=1)   # (1, 3H)
    wvb_f = jnp.concatenate([p['wvb'][g] for g in range(G)], axis=1)               # (V, G*H)
    bvb_f = jnp.concatenate([p['bvb'][g] for g in range(G)], axis=1)               # (1, G*H)

    args = (w_emb, v,
            w_ih_f, w_hh_f, b_ih_f, b_hh_f,
            p['wv_att'], p['bv_att'], p['wq_att'], p['bq_att'],
            p['h_mat'], p['h_bias'],
            wvb_f, bvb_f, p['wqb'], p['bqb'],
            p['wp'], p['bp'])

    in_specs = [
        pl.BlockSpec((BT, S, E), lambda i: (i, 0, 0)),     # w_emb, tiled over batch
        pl.BlockSpec((BT, V), lambda i: (i, 0)),           # v, tiled over batch
        _full_spec((E, 3 * H)), _full_spec((H, 3 * H)),
        _full_spec((1, 3 * H)), _full_spec((1, 3 * H)),
        _full_spec((V, HK)), _full_spec((1, HK)),
        _full_spec((H, HK)), _full_spec((1, HK)),
        _full_spec((G, HK)), _full_spec((G, 1)),
        _full_spec((V, GH)), _full_spec((1, GH)),
        _full_spec((G, H, H)), _full_spec((G, 1, H)),
        _full_spec((G, H, H)), _full_spec((G, 1, H)),
    ]

    return pl.pallas_call(
        ban_kernel,
        out_shape=jax.ShapeDtypeStruct((B, H), jnp.float32),
        grid=(B // BT,),
        in_specs=in_specs,
        out_specs=pl.BlockSpec((BT, H), lambda i: (i, 0)),
        scratch_shapes=[pltpu.VMEM((BT, S, H), jnp.float32)],
        compiler_params=pltpu.CompilerParams(
            dimension_semantics=("parallel",)),
    )(*args)


def ban_forward_ref(v, q_tokens, p):
    """Pure-JAX reference (identical math, unfused weights) for correctness check."""
    x = jnp.take(p['emb_table'], q_tokens, axis=0)
    x2 = x.reshape(B * S, E)
    xr = (x2 @ p['w_ih'][0] + p['b_ih'][0]).reshape(B, S, H)
    xz = (x2 @ p['w_ih'][1] + p['b_ih'][1]).reshape(B, S, H)
    xn = (x2 @ p['w_ih'][2] + p['b_ih'][2]).reshape(B, S, H)
    h = jnp.zeros((B, H), jnp.float32)
    hs = []
    for t in range(S):
        r = jax.nn.sigmoid(xr[:, t] + h @ p['w_hh'][0] + p['b_hh'][0])
        z = jax.nn.sigmoid(xz[:, t] + h @ p['w_hh'][1] + p['b_hh'][1])
        n = jnp.tanh(xn[:, t] + r * (h @ p['w_hh'][2] + p['b_hh'][2]))
        h = (1.0 - z) * n + z * h
        hs.append(h[:, None, :])
    q_emb0 = jnp.concatenate(hs, axis=1)
    v_att = jax.nn.relu(v @ p['wv_att'] + p['bv_att'])
    q_att = jax.nn.relu(q_emb0.reshape(B * S, H) @ p['wq_att'] + p['bq_att']).reshape(B, S, HK)
    hv = v_att[:, None, :] * p['h_mat'][None]
    logits = jnp.einsum('bgk,bsk->bgs', hv, q_att) + p['h_bias'][None]
    v_zero = (jnp.sum(jnp.abs(v), axis=-1, keepdims=True) == 0.0)
    logits = jnp.where(v_zero[:, :, None], -jnp.inf, logits)
    att = jax.nn.softmax(logits, axis=-1)
    q_emb = q_emb0
    for g in range(G):
        vb = jax.nn.relu(v @ p['wvb'][g] + p['bvb'][g])
        qb = jax.nn.relu(q_emb.reshape(B * S, H) @ p['wqb'][g] + p['bqb'][g]).reshape(B, S, H)
        b_emb = vb * jnp.sum(att[:, g, :, None] * qb, axis=1)
        proj = b_emb @ p['wp'][g] + p['bp'][g]
        q_emb = q_emb + proj[:, None, :]
    return jnp.sum(q_emb, axis=1)


if __name__ == "__main__":
    key = jax.random.PRNGKey(0)
    k_v, k_q, k_p = jax.random.split(key, 3)
    v = jax.random.normal(k_v, (B, V), jnp.float32)
    q_tokens = jax.random.randint(k_q, (B, S), 0, VOCAB + 1, dtype=jnp.int32)
    params = init_params(k_p)

    out = ban_forward(v, q_tokens, params)
    out = jax.block_until_ready(out)

    ref = jax.block_until_ready(ban_forward_ref(v, q_tokens, params))
    assert out.shape == (B, H)
    assert jnp.allclose(out, ref, atol=1e-4, rtol=1e-4), "kernel/reference mismatch"

    print("KERNEL_OK")
</pallas_src>

<mosaic_0001>
module attributes {stable_mosaic.version = 11 : i64} {
  func.func @ban_kernel(%arg0: i32, %arg1: memref<8x8x32xf32, #tpu.memory_space<vmem>>, %arg2: memref<8x64xf32, #tpu.memory_space<vmem>>, %arg3: memref<32x96xf32, #tpu.memory_space<vmem>>, %arg4: memref<32x96xf32, #tpu.memory_space<vmem>>, %arg5: memref<1x96xf32, #tpu.memory_space<vmem>>, %arg6: memref<1x96xf32, #tpu.memory_space<vmem>>, %arg7: memref<64x96xf32, #tpu.memory_space<vmem>>, %arg8: memref<1x96xf32, #tpu.memory_space<vmem>>, %arg9: memref<32x96xf32, #tpu.memory_space<vmem>>, %arg10: memref<1x96xf32, #tpu.memory_space<vmem>>, %arg11: memref<2x96xf32, #tpu.memory_space<vmem>>, %arg12: memref<2x1xf32, #tpu.memory_space<vmem>>, %arg13: memref<64x64xf32, #tpu.memory_space<vmem>>, %arg14: memref<1x64xf32, #tpu.memory_space<vmem>>, %arg15: memref<2x32x32xf32, #tpu.memory_space<vmem>>, %arg16: memref<2x1x32xf32, #tpu.memory_space<vmem>>, %arg17: memref<2x32x32xf32, #tpu.memory_space<vmem>>, %arg18: memref<2x1x32xf32, #tpu.memory_space<vmem>>, %arg19: memref<8x32xf32, #tpu.memory_space<vmem>>, %arg20: memref<8x8x32xf32, #tpu.memory_space<vmem>>) attributes {dimension_semantics = [#tpu.dimension_semantics<parallel>], iteration_bounds = array<i64: 2>, scalar_prefetch = 0 : i64, scratch_operands = 1 : i64, tpu.core_type = #tpu.core_type<tc>, window_params = [{transform_indices = @transform_0, window_bounds = array<i64: 8, 8, 32>}, {transform_indices = @transform_1, window_bounds = array<i64: 8, 64>}, {pipeline_mode = #tpu.pipeline_mode<synchronous>, transform_indices = @transform_2, window_bounds = array<i64: 32, 96>}, {pipeline_mode = #tpu.pipeline_mode<synchronous>, transform_indices = @transform_3, window_bounds = array<i64: 32, 96>}, {pipeline_mode = #tpu.pipeline_mode<synchronous>, transform_indices = @transform_4, window_bounds = array<i64: 1, 96>}, {pipeline_mode = #tpu.pipeline_mode<synchronous>, transform_indices = @transform_5, window_bounds = array<i64: 1, 96>}, {pipeline_mode = #tpu.pipeline_mode<synchronous>, transform_indices = @transform_6, window_bounds = array<i64: 64, 96>}, {pipeline_mode = #tpu.pipeline_mode<synchronous>, transform_indices = @transform_7, window_bounds = array<i64: 1, 96>}, {pipeline_mode = #tpu.pipeline_mode<synchronous>, transform_indices = @transform_8, window_bounds = array<i64: 32, 96>}, {pipeline_mode = #tpu.pipeline_mode<synchronous>, transform_indices = @transform_9, window_bounds = array<i64: 1, 96>}, {pipeline_mode = #tpu.pipeline_mode<synchronous>, transform_indices = @transform_10, window_bounds = array<i64: 2, 96>}, {pipeline_mode = #tpu.pipeline_mode<synchronous>, transform_indices = @transform_11, window_bounds = array<i64: 2, 1>}, {pipeline_mode = #tpu.pipeline_mode<synchronous>, transform_indices = @transform_12, window_bounds = array<i64: 64, 64>}, {pipeline_mode = #tpu.pipeline_mode<synchronous>, transform_indices = @transform_13, window_bounds = array<i64: 1, 64>}, {pipeline_mode = #tpu.pipeline_mode<synchronous>, transform_indices = @transform_14, window_bounds = array<i64: 2, 32, 32>}, {pipeline_mode = #tpu.pipeline_mode<synchronous>, transform_indices = @transform_15, window_bounds = array<i64: 2, 1, 32>}, {pipeline_mode = #tpu.pipeline_mode<synchronous>, transform_indices = @transform_16, window_bounds = array<i64: 2, 32, 32>}, {pipeline_mode = #tpu.pipeline_mode<synchronous>, transform_indices = @transform_17, window_bounds = array<i64: 2, 1, 32>}, {transform_indices = @transform_18, window_bounds = array<i64: 8, 32>}]} {
    %c0 = arith.constant 0 : index
    %c0_0 = arith.constant 0 : index
    %c0_1 = arith.constant 0 : index
    %0 = vector.load %arg1[%c0, %c0_0, %c0_1] : memref<8x8x32xf32, #tpu.memory_space<vmem>>, vector<8x8x32xf32>
    %c0_2 = arith.constant 0 : index
    %c0_3 = arith.constant 0 : index
    %1 = vector.load %arg2[%c0_2, %c0_3] : memref<8x64xf32, #tpu.memory_space<vmem>>, vector<8x64xf32>
    %c0_4 = arith.constant 0 : index
    %c0_5 = arith.constant 0 : index
    %2 = vector.load %arg3[%c0_4, %c0_5] : memref<32x96xf32, #tpu.memory_space<vmem>>, vector<32x96xf32>
    %c0_6 = arith.constant 0 : index
    %c0_7 = arith.constant 0 : index
    %3 = vector.load %arg4[%c0_6, %c0_7] : memref<32x96xf32, #tpu.memory_space<vmem>>, vector<32x96xf32>
    %c0_8 = arith.constant 0 : index
    %c0_9 = arith.constant 0 : index
    %4 = vector.load %arg5[%c0_8, %c0_9] : memref<1x96xf32, #tpu.memory_space<vmem>>, vector<1x96xf32>
    %c0_10 = arith.constant 0 : index
    %c0_11 = arith.constant 0 : index
    %5 = vector.load %arg6[%c0_10, %c0_11] : memref<1x96xf32, #tpu.memory_space<vmem>>, vector<1x96xf32>
    %6 = vector.shape_cast %0 : vector<8x8x32xf32> to vector<64x32xf32>
    %cst = arith.constant dense<0.000000e+00> : vector<64x96xf32>
    %7 = tpu.matmul %6, %2, %cst {dimension_numbers = #tpu.dot_dimension_numbers<[1], [0], [0], [1], [0, 0, 1, 1], [], []>} : vector<64x32xf32>, vector<32x96xf32>, vector<64x96xf32> -> vector<64x96xf32>
    %8 = vector.broadcast %4 : vector<1x96xf32> to vector<64x96xf32>
    %9 = arith.addf %7, %8 : vector<64x96xf32>
    %10 = vector.shape_cast %9 : vector<64x96xf32> to vector<8x8x96xf32>
    %cst_12 = arith.constant 0.000000e+00 : f32
    %11 = vector.broadcast %cst_12 : f32 to vector<8x32xf32>
    %cst_13 = arith.constant dense<0.000000e+00> : vector<8x96xf32>
    %12 = tpu.matmul %11, %3, %cst_13 {dimension_numbers = #tpu.dot_dimension_numbers<[1], [0], [0], [1], [0, 0, 1, 1], [], []>} : vector<8x32xf32>, vector<32x96xf32>, vector<8x96xf32> -> vector<8x96xf32>
    %13 = vector.broadcast %5 : vector<1x96xf32> to vector<8x96xf32>
    %14 = arith.addf %12, %13 : vector<8x96xf32>
    %15 = vector.extract_strided_slice %10 {offsets = [0, 0, 0], sizes = [8, 1, 96], strides = [1, 1, 1]} : vector<8x8x96xf32> to vector<8x1x96xf32>
    %16 = vector.shape_cast %15 : vector<8x1x96xf32> to vector<8x96xf32>
    %17 = vector.extract_strided_slice %16 {offsets = [0, 0], sizes = [8, 32], strides = [1, 1]} : vector<8x96xf32> to vector<8x32xf32>
    %18 = vector.extract_strided_slice %14 {offsets = [0, 0], sizes = [8, 32], strides = [1, 1]} : vector<8x96xf32> to vector<8x32xf32>
    %19 = arith.addf %17, %18 : vector<8x32xf32>
    %20 = arith.negf %19 : vector<8x32xf32>
    %21 = math.exp %20 : vector<8x32xf32>
    %cst_14 = arith.constant 1.000000e+00 : f32
    %22 = vector.broadcast %cst_14 : f32 to vector<8x32xf32>
    %23 = arith.addf %22, %21 : vector<8x32xf32>
    %24 = arith.divf %22, %23 : vector<8x32xf32>
    %25 = vector.extract_strided_slice %16 {offsets = [0, 32], sizes = [8, 32], strides = [1, 1]} : vector<8x96xf32> to vector<8x32xf32>
    %26 = vector.extract_strided_slice %14 {offsets = [0, 32], sizes = [8, 32], strides = [1, 1]} : vector<8x96xf32> to vector<8x32xf32>
    %27 = arith.addf %25, %26 : vector<8x32xf32>
    %28 = arith.negf %27 : vector<8x32xf32>
    %29 = math.exp %28 : vector<8x32xf32>
    %cst_15 = arith.constant 1.000000e+00 : f32
    %30 = vector.broadcast %cst_15 : f32 to vector<8x32xf32>
    %31 = arith.addf %30, %29 : vector<8x32xf32>
    %32 = arith.divf %30, %31 : vector<8x32xf32>
    %33 = vector.extract_strided_slice %16 {offsets = [0, 64], sizes = [8, 32], strides = [1, 1]} : vector<8x96xf32> to vector<8x32xf32>
    %34 = vector.extract_strided_slice %14 {offsets = [0, 64], sizes = [8, 32], strides = [1, 1]} : vector<8x96xf32> to vector<8x32xf32>
    %35 = arith.mulf %24, %34 : vector<8x32xf32>
    %36 = arith.addf %33, %35 : vector<8x32xf32>
    %37 = math.tanh %36 : vector<8x32xf32>
    %cst_16 = arith.constant 1.000000e+00 : f32
    %38 = vector.broadcast %cst_16 : f32 to vector<8x32xf32>
    %39 = arith.subf %38, %32 : vector<8x32xf32>
    %40 = arith.mulf %39, %37 : vector<8x32xf32>
    %41 = arith.mulf %32, %11 : vector<8x32xf32>
    %42 = arith.addf %40, %41 : vector<8x32xf32>
    %c0_17 = arith.constant 0 : index
    %c0_18 = arith.constant 0 : index
    %c0_19 = arith.constant 0 : index
    %43 = vector.load %arg20[%c0_17, %c0_18, %c0_19] : memref<8x8x32xf32, #tpu.memory_space<vmem>>, vector<8x1x32xf32>
    %44 = vector.shape_cast %43 : vector<8x1x32xf32> to vector<8x32xf32>
    %45 = vector.shape_cast %42 : vector<8x32xf32> to vector<8x1x32xf32>
    tpu.vector_store %arg20[%c0_17, %c0_18, %c0_19], %45 {strides = array<i32>} : memref<8x8x32xf32, #tpu.memory_space<vmem>>, vector<8x1x32xf32>,
    %cst_20 = arith.constant dense<0.000000e+00> : vector<8x96xf32>
    %46 = tpu.matmul %42, %3, %cst_20 {dimension_numbers = #tpu.dot_dimension_numbers<[1], [0], [0], [1], [0, 0, 1, 1], [], []>} : vector<8x32xf32>, vector<32x96xf32>, vector<8x96xf32> -> vector<8x96xf32>
    %47 = vector.broadcast %5 : vector<1x96xf32> to vector<8x96xf32>
    %48 = arith.addf %46, %47 : vector<8x96xf32>
    %49 = vector.extract_strided_slice %10 {offsets = [0, 1, 0], sizes = [8, 1, 96], strides = [1, 1, 1]} : vector<8x8x96xf32> to vector<8x1x96xf32>
    %50 = vector.shape_cast %49 : vector<8x1x96xf32> to vector<8x96xf32>
    %51 = vector.extract_strided_slice %50 {offsets = [0, 0], sizes = [8, 32], strides = [1, 1]} : vector<8x96xf32> to vector<8x32xf32>
    %52 = vector.extract_strided_slice %48 {offsets = [0, 0], sizes = [8, 32], strides = [1, 1]} : vector<8x96xf32> to vector<8x32xf32>
    %53 = arith.addf %51, %52 : vector<8x32xf32>
    %54 = arith.negf %53 : vector<8x32xf32>
    %55 = math.exp %54 : vector<8x32xf32>
    %cst_21 = arith.constant 1.000000e+00 : f32
    %56 = vector.broadcast %cst_21 : f32 to vector<8x32xf32>
    %57 = arith.addf %56, %55 : vector<8x32xf32>
    %58 = arith.divf %56, %57 : vector<8x32xf32>
    %59 = vector.extract_strided_slice %50 {offsets = [0, 32], sizes = [8, 32], strides = [1, 1]} : vector<8x96xf32> to vector<8x32xf32>
    %60 = vector.extract_strided_slice %48 {offsets = [0, 32], sizes = [8, 32], strides = [1, 1]} : vector<8x96xf32> to vector<8x32xf32>
    %61 = arith.addf %59, %60 : vector<8x32xf32>
    %62 = arith.negf %61 : vector<8x32xf32>
    %63 = math.exp %62 : vector<8x32xf32>
    %cst_22 = arith.constant 1.000000e+00 : f32
    %64 = vector.broadcast %cst_22 : f32 to vector<8x32xf32>
    %65 = arith.addf %64, %63 : vector<8x32xf32>
    %66 = arith.divf %64, %65 : vector<8x32xf32>
    %67 = vector.extract_strided_slice %50 {offsets = [0, 64], sizes = [8, 32], strides = [1, 1]} : vector<8x96xf32> to vector<8x32xf32>
    %68 = vector.extract_strided_slice %48 {offsets = [0, 64], sizes = [8, 32], strides = [1, 1]} : vector<8x96xf32> to vector<8x32xf32>
    %69 = arith.mulf %58, %68 : vector<8x32xf32>
    %70 = arith.addf %67, %69 : vector<8x32xf32>
    %71 = math.tanh %70 : vector<8x32xf32>
    %cst_23 = arith.constant 1.000000e+00 : f32
    %72 = vector.broadcast %cst_23 : f32 to vector<8x32xf32>
    %73 = arith.subf %72, %66 : vector<8x32xf32>
    %74 = arith.mulf %73, %71 : vector<8x32xf32>
    %75 = arith.mulf %66, %42 : vector<8x32xf32>
    %76 = arith.addf %74, %75 : vector<8x32xf32>
    %c0_24 = arith.constant 0 : index
    %c1 = arith.constant 1 : index
    %c0_25 = arith.constant 0 : index
    %77 = vector.load %arg20[%c0_24, %c1, %c0_25] : memref<8x8x32xf32, #tpu.memory_space<vmem>>, vector<8x1x32xf32>
    %78 = vector.shape_cast %77 : vector<8x1x32xf32> to vector<8x32xf32>
    %79 = vector.shape_cast %76 : vector<8x32xf32> to vector<8x1x32xf32>
    tpu.vector_store %arg20[%c0_24, %c1, %c0_25], %79 {strides = array<i32>} : memref<8x8x32xf32, #tpu.memory_space<vmem>>, vector<8x1x32xf32>,
    %cst_26 = arith.constant dense<0.000000e+00> : vector<8x96xf32>
    %80 = tpu.matmul %76, %3, %cst_26 {dimension_numbers = #tpu.dot_dimension_numbers<[1], [0], [0], [1], [0, 0, 1, 1], [], []>} : vector<8x32xf32>, vector<32x96xf32>, vector<8x96xf32> -> vector<8x96xf32>
    %81 = vector.broadcast %5 : vector<1x96xf32> to vector<8x96xf32>
    %82 = arith.addf %80, %81 : vector<8x96xf32>
    %83 = vector.extract_strided_slice %10 {offsets = [0, 2, 0], sizes = [8, 1, 96], strides = [1, 1, 1]} : vector<8x8x96xf32> to vector<8x1x96xf32>
    %84 = vector.shape_cast %83 : vector<8x1x96xf32> to vector<8x96xf32>
    %85 = vector.extract_strided_slice %84 {offsets = [0, 0], sizes = [8, 32], strides = [1, 1]} : vector<8x96xf32> to vector<8x32xf32>
    %86 = vector.extract_strided_slice %82 {offsets = [0, 0], sizes = [8, 32], strides = [1, 1]} : vector<8x96xf32> to vector<8x32xf32>
    %87 = arith.addf %85, %86 : vector<8x32xf32>
    %88 = arith.negf %87 : vector<8x32xf32>
    %89 = math.exp %88 : vector<8x32xf32>
    %cst_27 = arith.constant 1.000000e+00 : f32
    %90 = vector.broadcast %cst_27 : f32 to vector<8x32xf32>
    %91 = arith.addf %90, %89 : vector<8x32xf32>
    %92 = arith.divf %90, %91 : vector<8x32xf32>
    %93 = vector.extract_strided_slice %84 {offsets = [0, 32], sizes = [8, 32], strides = [1, 1]} : vector<8x96xf32> to vector<8x32xf32>
    %94 = vector.extract_strided_slice %82 {offsets = [0, 32], sizes = [8, 32], strides = [1, 1]} : vector<8x96xf32> to vector<8x32xf32>
    %95 = arith.addf %93, %94 : vector<8x32xf32>
    %96 = arith.negf %95 : vector<8x32xf32>
    %97 = math.exp %96 : vector<8x32xf32>
    %cst_28 = arith.constant 1.000000e+00 : f32
    %98 = vector.broadcast %cst_28 : f32 to vector<8x32xf32>
    %99 = arith.addf %98, %97 : vector<8x32xf32>
    %100 = arith.divf %98, %99 : vector<8x32xf32>
    %101 = vector.extract_strided_slice %84 {offsets = [0, 64], sizes = [8, 32], strides = [1, 1]} : vector<8x96xf32> to vector<8x32xf32>
    %102 = vector.extract_strided_slice %82 {offsets = [0, 64], sizes = [8, 32], strides = [1, 1]} : vector<8x96xf32> to vector<8x32xf32>
    %103 = arith.mulf %92, %102 : vector<8x32xf32>
    %104 = arith.addf %101, %103 : vector<8x32xf32>
    %105 = math.tanh %104 : vector<8x32xf32>
    %cst_29 = arith.constant 1.000000e+00 : f32
    %106 = vector.broadcast %cst_29 : f32 to vector<8x32xf32>
    %107 = arith.subf %106, %100 : vector<8x32xf32>
    %108 = arith.mulf %107, %105 : vector<8x32xf32>
    %109 = arith.mulf %100, %76 : vector<8x32xf32>
    %110 = arith.addf %108, %109 : vector<8x32xf32>
    %c0_30 = arith.constant 0 : index
    %c2 = arith.constant 2 : index
    %c0_31 = arith.constant 0 : index
    %111 = vector.load %arg20[%c0_30, %c2, %c0_31] : memref<8x8x32xf32, #tpu.memory_space<vmem>>, vector<8x1x32xf32>
    %112 = vector.shape_cast %111 : vector<8x1x32xf32> to vector<8x32xf32>
    %113 = vector.shape_cast %110 : vector<8x32xf32> to vector<8x1x32xf32>
    tpu.vector_store %arg20[%c0_30, %c2, %c0_31], %113 {strides = array<i32>} : memref<8x8x32xf32, #tpu.memory_space<vmem>>, vector<8x1x32xf32>,
    %cst_32 = arith.constant dense<0.000000e+00> : vector<8x96xf32>
    %114 = tpu.matmul %110, %3, %cst_32 {dimension_numbers = #tpu.dot_dimension_numbers<[1], [0], [0], [1], [0, 0, 1, 1], [], []>} : vector<8x32xf32>, vector<32x96xf32>, vector<8x96xf32> -> vector<8x96xf32>
    %115 = vector.broadcast %5 : vector<1x96xf32> to vector<8x96xf32>
    %116 = arith.addf %114, %115 : vector<8x96xf32>
    %117 = vector.extract_strided_slice %10 {offsets = [0, 3, 0], sizes = [8, 1, 96], strides = [1, 1, 1]} : vector<8x8x96xf32> to vector<8x1x96xf32>
    %118 = vector.shape_cast %117 : vector<8x1x96xf32> to vector<8x96xf32>
    %119 = vector.extract_strided_slice %118 {offsets = [0, 0], sizes = [8, 32], strides = [1, 1]} : vector<8x96xf32> to vector<8x32xf32>
    %120 = vector.extract_strided_slice %116 {offsets = [0, 0], sizes = [8, 32], strides = [1, 1]} : vector<8x96xf32> to vector<8x32xf32>
    %121 = arith.addf %119, %120 : vector<8x32xf32>
    %122 = arith.negf %121 : vector<8x32xf32>
    %123 = math.exp %122 : vector<8x32xf32>
    %cst_33 = arith.constant 1.000000e+00 : f32
    %124 = vector.broadcast %cst_33 : f32 to vector<8x32xf32>
    %125 = arith.addf %124, %123 : vector<8x32xf32>
    %126 = arith.divf %124, %125 : vector<8x32xf32>
    %127 = vector.extract_strided_slice %118 {offsets = [0, 32], sizes = [8, 32], strides = [1, 1]} : vector<8x96xf32> to vector<8x32xf32>
    %128 = vector.extract_strided_slice %116 {offsets = [0, 32], sizes = [8, 32], strides = [1, 1]} : vector<8x96xf32> to vector<8x32xf32>
    %129 = arith.addf %127, %128 : vector<8x32xf32>
    %130 = arith.negf %129 : vector<8x32xf32>
    %131 = math.exp %130 : vector<8x32xf32>
    %cst_34 = arith.constant 1.000000e+00 : f32
    %132 = vector.broadcast %cst_34 : f32 to vector<8x32xf32>
    %133 = arith.addf %132, %131 : vector<8x32xf32>
    %134 = arith.divf %132, %133 : vector<8x32xf32>
    %135 = vector.extract_strided_slice %118 {offsets = [0, 64], sizes = [8, 32], strides = [1, 1]} : vector<8x96xf32> to vector<8x32xf32>
    %136 = vector.extract_strided_slice %116 {offsets = [0, 64], sizes = [8, 32], strides = [1, 1]} : vector<8x96xf32> to vector<8x32xf32>
    %137 = arith.mulf %126, %136 : vector<8x32xf32>
    %138 = arith.addf %135, %137 : vector<8x32xf32>
    %139 = math.tanh %138 : vector<8x32xf32>
    %cst_35 = arith.constant 1.000000e+00 : f32
    %140 = vector.broadcast %cst_35 : f32 to vector<8x32xf32>
    %141 = arith.subf %140, %134 : vector<8x32xf32>
    %142 = arith.mulf %141, %139 : vector<8x32xf32>
    %143 = arith.mulf %134, %110 : vector<8x32xf32>
    %144 = arith.addf %142, %143 : vector<8x32xf32>
    %c0_36 = arith.constant 0 : index
    %c3 = arith.constant 3 : index
    %c0_37 = arith.constant 0 : index
    %145 = vector.load %arg20[%c0_36, %c3, %c0_37] : memref<8x8x32xf32, #tpu.memory_space<vmem>>, vector<8x1x32xf32>
    %146 = vector.shape_cast %145 : vector<8x1x32xf32> to vector<8x32xf32>
    %147 = vector.shape_cast %144 : vector<8x32xf32> to vector<8x1x32xf32>
    tpu.vector_store %arg20[%c0_36, %c3, %c0_37], %147 {strides = array<i32>} : memref<8x8x32xf32, #tpu.memory_space<vmem>>, vector<8x1x32xf32>,
    %cst_38 = arith.constant dense<0.000000e+00> : vector<8x96xf32>
    %148 = tpu.matmul %144, %3, %cst_38 {dimension_numbers = #tpu.dot_dimension_numbers<[1], [0], [0], [1], [0, 0, 1, 1], [], []>} : vector<8x32xf32>, vector<32x96xf32>, vector<8x96xf32> -> vector<8x96xf32>
    %149 = vector.broadcast %5 : vector<1x96xf32> to vector<8x96xf32>
    %150 = arith.addf %148, %149 : vector<8x96xf32>
    %151 = vector.extract_strided_slice %10 {offsets = [0, 4, 0], sizes = [8, 1, 96], strides = [1, 1, 1]} : vector<8x8x96xf32> to vector<8x1x96xf32>
    %152 = vector.shape_cast %151 : vector<8x1x96xf32> to vector<8x96xf32>
    %153 = vector.extract_strided_slice %152 {offsets = [0, 0], sizes = [8, 32], strides = [1, 1]} : vector<8x96xf32> to vector<8x32xf32>
    %154 = vector.extract_strided_slice %150 {offsets = [0, 0], sizes = [8, 32], strides = [1, 1]} : vector<8x96xf32> to vector<8x32xf32>
    %155 = arith.addf %153, %154 : vector<8x32xf32>
    %156 = arith.negf %155 : vector<8x32xf32>
    %157 = math.exp %156 : vector<8x32xf32>
    %cst_39 = arith.constant 1.000000e+00 : f32
    %158 = vector.broadcast %cst_39 : f32 to vector<8x32xf32>
    %159 = arith.addf %158, %157 : vector<8x32xf32>
    %160 = arith.divf %158, %159 : vector<8x32xf32>
    %161 = vector.extract_strided_slice %152 {offsets = [0, 32], sizes = [8, 32], strides = [1, 1]} : vector<8x96xf32> to vector<8x32xf32>
    %162 = vector.extract_strided_slice %150 {offsets = [0, 32], sizes = [8, 32], strides = [1, 1]} : vector<8x96xf32> to vector<8x32xf32>
    %163 = arith.addf %161, %162 : vector<8x32xf32>
    %164 = arith.negf %163 : vector<8x32xf32>
    %165 = math.exp %164 : vector<8x32xf32>
    %cst_40 = arith.constant 1.000000e+00 : f32
    %166 = vector.broadcast %cst_40 : f32 to vector<8x32xf32>
    %167 = arith.addf %166, %165 : vector<8x32xf32>
    %168 = arith.divf %166, %167 : vector<8x32xf32>
    %169 = vector.extract_strided_slice %152 {offsets = [0, 64], sizes = [8, 32], strides = [1, 1]} : vector<8x96xf32> to vector<8x32xf32>
    %170 = vector.extract_strided_slice %150 {offsets = [0, 64], sizes = [8, 32], strides = [1, 1]} : vector<8x96xf32> to vector<8x32xf32>
    %171 = arith.mulf %160, %170 : vector<8x32xf32>
    %172 = arith.addf %169, %171 : vector<8x32xf32>
    %173 = math.tanh %172 : vector<8x32xf32>
    %cst_41 = arith.constant 1.000000e+00 : f32
    %174 = vector.broadcast %cst_41 : f32 to vector<8x32xf32>
    %175 = arith.subf %174, %168 : vector<8x32xf32>
    %176 = arith.mulf %175, %173 : vector<8x32xf32>
    %177 = arith.mulf %168, %144 : vector<8x32xf32>
    %178 = arith.addf %176, %177 : vector<8x32xf32>
    %c0_42 = arith.constant 0 : index
    %c4 = arith.constant 4 : index
    %c0_43 = arith.constant 0 : index
    %179 = vector.load %arg20[%c0_42, %c4, %c0_43] : memref<8x8x32xf32, #tpu.memory_space<vmem>>, vector<8x1x32xf32>
    %180 = vector.shape_cast %179 : vector<8x1x32xf32> to vector<8x32xf32>
    %181 = vector.shape_cast %178 : vector<8x32xf32> to vector<8x1x32xf32>
    tpu.vector_store %arg20[%c0_42, %c4, %c0_43], %181 {strides = array<i32>} : memref<8x8x32xf32, #tpu.memory_space<vmem>>, vector<8x1x32xf32>,
    %cst_44 = arith.constant dense<0.000000e+00> : vector<8x96xf32>
    %182 = tpu.matmul %178, %3, %cst_44 {dimension_numbers = #tpu.dot_dimension_numbers<[1], [0], [0], [1], [0, 0, 1, 1], [], []>} : vector<8x32xf32>, vector<32x96xf32>, vector<8x96xf32> -> vector<8x96xf32>
    %183 = vector.broadcast %5 : vector<1x96xf32> to vector<8x96xf32>
    %184 = arith.addf %182, %183 : vector<8x96xf32>
    %185 = vector.extract_strided_slice %10 {offsets = [0, 5, 0], sizes = [8, 1, 96], strides = [1, 1, 1]} : vector<8x8x96xf32> to vector<8x1x96xf32>
    %186 = vector.shape_cast %185 : vector<8x1x96xf32> to vector<8x96xf32>
    %187 = vector.extract_strided_slice %186 {offsets = [0, 0], sizes = [8, 32], strides = [1, 1]} : vector<8x96xf32> to vector<8x32xf32>
    %188 = vector.extract_strided_slice %184 {offsets = [0, 0], sizes = [8, 32], strides = [1, 1]} : vector<8x96xf32> to vector<8x32xf32>
    %189 = arith.addf %187, %188 : vector<8x32xf32>
    %190 = arith.negf %189 : vector<8x32xf32>
    %191 = math.exp %190 : vector<8x32xf32>
    %cst_45 = arith.constant 1.000000e+00 : f32
    %192 = vector.broadcast %cst_45 : f32 to vector<8x32xf32>
    %193 = arith.addf %192, %191 : vector<8x32xf32>
    %194 = arith.divf %192, %193 : vector<8x32xf32>
    %195 = vector.extract_strided_slice %186 {offsets = [0, 32], sizes = [8, 32], strides = [1, 1]} : vector<8x96xf32> to vector<8x32xf32>
    %196 = vector.extract_strided_slice %184 {offsets = [0, 32], sizes = [8, 32], strides = [1, 1]} : vector<8x96xf32> to vector<8x32xf32>
    %197 = arith.addf %195, %196 : vector<8x32xf32>
    %198 = arith.negf %197 : vector<8x32xf32>
    %199 = math.exp %198 : vector<8x32xf32>
    %cst_46 = arith.constant 1.000000e+00 : f32
    %200 = vector.broadcast %cst_46 : f32 to vector<8x32xf32>
    %201 = arith.addf %200, %199 : vector<8x32xf32>
    %202 = arith.divf %200, %201 : vector<8x32xf32>
    %203 = vector.extract_strided_slice %186 {offsets = [0, 64], sizes = [8, 32], strides = [1, 1]} : vector<8x96xf32> to vector<8x32xf32>
    %204 = vector.extract_strided_slice %184 {offsets = [0, 64], sizes = [8, 32], strides = [1, 1]} : vector<8x96xf32> to vector<8x32xf32>
    %205 = arith.mulf %194, %204 : vector<8x32xf32>
    %206 = arith.addf %203, %205 : vector<8x32xf32>
    %207 = math.tanh %206 : vector<8x32xf32>
    %cst_47 = arith.constant 1.000000e+00 : f32
    %208 = vector.broadcast %cst_47 : f32 to vector<8x32xf32>
    %209 = arith.subf %208, %202 : vector<8x32xf32>
    %210 = arith.mulf %209, %207 : vector<8x32xf32>
    %211 = arith.mulf %202, %178 : vector<8x32xf32>
    %212 = arith.addf %210, %211 : vector<8x32xf32>
    %c0_48 = arith.constant 0 : index
    %c5 = arith.constant 5 : index
    %c0_49 = arith.constant 0 : index
    %213 = vector.load %arg20[%c0_48, %c5, %c0_49] : memref<8x8x32xf32, #tpu.memory_space<vmem>>, vector<8x1x32xf32>
    %214 = vector.shape_cast %213 : vector<8x1x32xf32> to vector<8x32xf32>
    %215 = vector.shape_cast %212 : vector<8x32xf32> to vector<8x1x32xf32>
    tpu.vector_store %arg20[%c0_48, %c5, %c0_49], %215 {strides = array<i32>} : memref<8x8x32xf32, #tpu.memory_space<vmem>>, vector<8x1x32xf32>,
    %cst_50 = arith.constant dense<0.000000e+00> : vector<8x96xf32>
    %216 = tpu.matmul %212, %3, %cst_50 {dimension_numbers = #tpu.dot_dimension_numbers<[1], [0], [0], [1], [0, 0, 1, 1], [], []>} : vector<8x32xf32>, vector<32x96xf32>, vector<8x96xf32> -> vector<8x96xf32>
    %217 = vector.broadcast %5 : vector<1x96xf32> to vector<8x96xf32>
    %218 = arith.addf %216, %217 : vector<8x96xf32>
    %219 = vector.extract_strided_slice %10 {offsets = [0, 6, 0], sizes = [8, 1, 96], strides = [1, 1, 1]} : vector<8x8x96xf32> to vector<8x1x96xf32>
    %220 = vector.shape_cast %219 : vector<8x1x96xf32> to vector<8x96xf32>
    %221 = vector.extract_strided_slice %220 {offsets = [0, 0], sizes = [8, 32], strides = [1, 1]} : vector<8x96xf32> to vector<8x32xf32>
    %222 = vector.extract_strided_slice %218 {offsets = [0, 0], sizes = [8, 32], strides = [1, 1]} : vector<8x96xf32> to vector<8x32xf32>
    %223 = arith.addf %221, %222 : vector<8x32xf32>
    %224 = arith.negf %223 : vector<8x32xf32>
    %225 = math.exp %224 : vector<8x32xf32>
    %cst_51 = arith.constant 1.000000e+00 : f32
    %226 = vector.broadcast %cst_51 : f32 to vector<8x32xf32>
    %227 = arith.addf %226, %225 : vector<8x32xf32>
    %228 = arith.divf %226, %227 : vector<8x32xf32>
    %229 = vector.extract_strided_slice %220 {offsets = [0, 32], sizes = [8, 32], strides = [1, 1]} : vector<8x96xf32> to vector<8x32xf32>
    %230 = vector.extract_strided_slice %218 {offsets = [0, 32], sizes = [8, 32], strides = [1, 1]} : vector<8x96xf32> to vector<8x32xf32>
    %231 = arith.addf %229, %230 : vector<8x32xf32>
    %232 = arith.negf %231 : vector<8x32xf32>
    %233 = math.exp %232 : vector<8x32xf32>
    %cst_52 = arith.constant 1.000000e+00 : f32
    %234 = vector.broadcast %cst_52 : f32 to vector<8x32xf32>
    %235 = arith.addf %234, %233 : vector<8x32xf32>
    %236 = arith.divf %234, %235 : vector<8x32xf32>
    %237 = vector.extract_strided_slice %220 {offsets = [0, 64], sizes = [8, 32], strides = [1, 1]} : vector<8x96xf32> to vector<8x32xf32>
    %238 = vector.extract_strided_slice %218 {offsets = [0, 64], sizes = [8, 32], strides = [1, 1]} : vector<8x96xf32> to vector<8x32xf32>
    %239 = arith.mulf %228, %238 : vector<8x32xf32>
    %240 = arith.addf %237, %239 : vector<8x32xf32>
    %241 = math.tanh %240 : vector<8x32xf32>
    %cst_53 = arith.constant 1.000000e+00 : f32
    %242 = vector.broadcast %cst_53 : f32 to vector<8x32xf32>
    %243 = arith.subf %242, %236 : vector<8x32xf32>
    %244 = arith.mulf %243, %241 : vector<8x32xf32>
    %245 = arith.mulf %236, %212 : vector<8x32xf32>
    %246 = arith.addf %244, %245 : vector<8x32xf32>
    %c0_54 = arith.constant 0 : index
    %c6 = arith.constant 6 : index
    %c0_55 = arith.constant 0 : index
    %247 = vector.load %arg20[%c0_54, %c6, %c0_55] : memref<8x8x32xf32, #tpu.memory_space<vmem>>, vector<8x1x32xf32>
    %248 = vector.shape_cast %247 : vector<8x1x32xf32> to vector<8x32xf32>
    %249 = vector.shape_cast %246 : vector<8x32xf32> to vector<8x1x32xf32>
    tpu.vector_store %arg20[%c0_54, %c6, %c0_55], %249 {strides = array<i32>} : memref<8x8x32xf32, #tpu.memory_space<vmem>>, vector<8x1x32xf32>,
    %cst_56 = arith.constant dense<0.000000e+00> : vector<8x96xf32>
    %250 = tpu.matmul %246, %3, %cst_56 {dimension_numbers = #tpu.dot_dimension_numbers<[1], [0], [0], [1], [0, 0, 1, 1], [], []>} : vector<8x32xf32>, vector<32x96xf32>, vector<8x96xf32> -> vector<8x96xf32>
    %251 = vector.broadcast %5 : vector<1x96xf32> to vector<8x96xf32>
    %252 = arith.addf %250, %251 : vector<8x96xf32>
    %253 = vector.extract_strided_slice %10 {offsets = [0, 7, 0], sizes = [8, 1, 96], strides = [1, 1, 1]} : vector<8x8x96xf32> to vector<8x1x96xf32>
    %254 = vector.shape_cast %253 : vector<8x1x96xf32> to vector<8x96xf32>
    %255 = vector.extract_strided_slice %254 {offsets = [0, 0], sizes = [8, 32], strides = [1, 1]} : vector<8x96xf32> to vector<8x32xf32>
    %256 = vector.extract_strided_slice %252 {offsets = [0, 0], sizes = [8, 32], strides = [1, 1]} : vector<8x96xf32> to vector<8x32xf32>
    %257 = arith.addf %255, %256 : vector<8x32xf32>
    %258 = arith.negf %257 : vector<8x32xf32>
    %259 = math.exp %258 : vector<8x32xf32>
    %cst_57 = arith.constant 1.000000e+00 : f32
    %260 = vector.broadcast %cst_57 : f32 to vector<8x32xf32>
    %261 = arith.addf %260, %259 : vector<8x32xf32>
    %262 = arith.divf %260, %261 : vector<8x32xf32>
    %263 = vector.extract_strided_slice %254 {offsets = [0, 32], sizes = [8, 32], strides = [1, 1]} : vector<8x96xf32> to vector<8x32xf32>
    %264 = vector.extract_strided_slice %252 {offsets = [0, 32], sizes = [8, 32], strides = [1, 1]} : vector<8x96xf32> to vector<8x32xf32>
    %265 = arith.addf %263, %264 : vector<8x32xf32>
    %266 = arith.negf %265 : vector<8x32xf32>
    %267 = math.exp %266 : vector<8x32xf32>
    %cst_58 = arith.constant 1.000000e+00 : f32
    %268 = vector.broadcast %cst_58 : f32 to vector<8x32xf32>
    %269 = arith.addf %268, %267 : vector<8x32xf32>
    %270 = arith.divf %268, %269 : vector<8x32xf32>
    %271 = vector.extract_strided_slice %254 {offsets = [0, 64], sizes = [8, 32], strides = [1, 1]} : vector<8x96xf32> to vector<8x32xf32>
    %272 = vector.extract_strided_slice %252 {offsets = [0, 64], sizes = [8, 32], strides = [1, 1]} : vector<8x96xf32> to vector<8x32xf32>
    %273 = arith.mulf %262, %272 : vector<8x32xf32>
    %274 = arith.addf %271, %273 : vector<8x32xf32>
    %275 = math.tanh %274 : vector<8x32xf32>
    %cst_59 = arith.constant 1.000000e+00 : f32
    %276 = vector.broadcast %cst_59 : f32 to vector<8x32xf32>
    %277 = arith.subf %276, %270 : vector<8x32xf32>
    %278 = arith.mulf %277, %275 : vector<8x32xf32>
    %279 = arith.mulf %270, %246 : vector<8x32xf32>
    %280 = arith.addf %278, %279 : vector<8x32xf32>
    %c0_60 = arith.constant 0 : index
    %c7 = arith.constant 7 : index
    %c0_61 = arith.constant 0 : index
    %281 = vector.load %arg20[%c0_60, %c7, %c0_61] : memref<8x8x32xf32, #tpu.memory_space<vmem>>, vector<8x1x32xf32>
    %282 = vector.shape_cast %281 : vector<8x1x32xf32> to vector<8x32xf32>
    %283 = vector.shape_cast %280 : vector<8x32xf32> to vector<8x1x32xf32>
    tpu.vector_store %arg20[%c0_60, %c7, %c0_61], %283 {strides = array<i32>} : memref<8x8x32xf32, #tpu.memory_space<vmem>>, vector<8x1x32xf32>,
    %c0_62 = arith.constant 0 : index
    %c0_63 = arith.constant 0 : index
    %c0_64 = arith.constant 0 : index
    %284 = vector.load %arg20[%c0_62, %c0_63, %c0_64] : memref<8x8x32xf32, #tpu.memory_space<vmem>>, vector<8x8x32xf32>
    %c0_65 = arith.constant 0 : index
    %c0_66 = arith.constant 0 : index
    %285 = vector.load %arg7[%c0_65, %c0_66] : memref<64x96xf32, #tpu.memory_space<vmem>>, vector<64x96xf32>
    %cst_67 = arith.constant dense<0.000000e+00> : vector<8x96xf32>
    %286 = tpu.matmul %1, %285, %cst_67 {dimension_numbers = #tpu.dot_dimension_numbers<[1], [0], [0], [1], [0, 0, 1, 1], [], []>} : vector<8x64xf32>, vector<64x96xf32>, vector<8x96xf32> -> vector<8x96xf32>
    %c0_68 = arith.constant 0 : index
    %c0_69 = arith.constant 0 : index
    %287 = vector.load %arg8[%c0_68, %c0_69] : memref<1x96xf32, #tpu.memory_space<vmem>>, vector<1x96xf32>
    %288 = vector.broadcast %287 : vector<1x96xf32> to vector<8x96xf32>
    %289 = arith.addf %286, %288 : vector<8x96xf32>
    %cst_70 = arith.constant 0.000000e+00 : f32
    %290 = vector.broadcast %cst_70 : f32 to vector<8x96xf32>
    %291 = arith.maximumf %289, %290 : vector<8x96xf32>
    %292 = vector.shape_cast %284 : vector<8x8x32xf32> to vector<64x32xf32>
    %c0_71 = arith.constant 0 : index
    %c0_72 = arith.constant 0 : index
    %293 = vector.load %arg9[%c0_71, %c0_72] : memref<32x96xf32, #tpu.memory_space<vmem>>, vector<32x96xf32>
    %cst_73 = arith.constant dense<0.000000e+00> : vector<64x96xf32>
    %294 = tpu.matmul %292, %293, %cst_73 {dimension_numbers = #tpu.dot_dimension_numbers<[1], [0], [0], [1], [0, 0, 1, 1], [], []>} : vector<64x32xf32>, vector<32x96xf32>, vector<64x96xf32> -> vector<64x96xf32>
    %c0_74 = arith.constant 0 : index
    %c0_75 = arith.constant 0 : index
    %295 = vector.load %arg10[%c0_74, %c0_75] : memref<1x96xf32, #tpu.memory_space<vmem>>, vector<1x96xf32>
    %296 = vector.broadcast %295 : vector<1x96xf32> to vector<64x96xf32>
    %297 = arith.addf %294, %296 : vector<64x96xf32>
    %cst_76 = arith.constant 0.000000e+00 : f32
    %298 = vector.broadcast %cst_76 : f32 to vector<64x96xf32>
    %299 = arith.maximumf %297, %298 : vector<64x96xf32>
    %300 = vector.shape_cast %299 : vector<64x96xf32> to vector<8x8x96xf32>
    %c0_77 = arith.constant 0 : index
    %c0_78 = arith.constant 0 : index
    %301 = vector.load %arg11[%c0_77, %c0_78] : memref<2x96xf32, #tpu.memory_space<vmem>>, vector<2x96xf32>
    %c0_79 = arith.constant 0 : index
    %c0_80 = arith.constant 0 : index
    %302 = vector.load %arg12[%c0_79, %c0_80] : memref<2x1xf32, #tpu.memory_space<vmem>>, vector<2x1xf32>
    %303 = vector.shape_cast %291 : vector<8x96xf32> to vector<8x1x96xf32>
    %304 = vector.shape_cast %301 : vector<2x96xf32> to vector<1x2x96xf32>
    %305 = vector.broadcast %303 : vector<8x1x96xf32> to vector<8x2x96xf32>
    %306 = vector.broadcast %304 : vector<1x2x96xf32> to vector<8x2x96xf32>
    %307 = arith.mulf %305, %306 : vector<8x2x96xf32>
    %cst_81 = arith.constant dense<0.000000e+00> : vector<8x2x8xf32>
    %308 = tpu.matmul %307, %300, %cst_81 {dimension_numbers = #tpu.dot_dimension_numbers<[2], [2], [1], [1], [0, 0, 0, 1, 1, 1], [0], [0]>} : vector<8x2x96xf32>, vector<8x8x96xf32>, vector<8x2x8xf32> -> vector<8x2x8xf32>
    %309 = vector.shape_cast %302 : vector<2x1xf32> to vector<1x2x1xf32>
    %310 = vector.broadcast %309 : vector<1x2x1xf32> to vector<8x2x8xf32>
    %311 = arith.addf %308, %310 : vector<8x2x8xf32>
    %312 = math.absf %1 : vector<8x64xf32>
    %cst_82 = arith.constant dense<0.000000e+00> : vector<8xf32>
    %313 = vector.multi_reduction <add>, %312, %cst_82 [1] : vector<8x64xf32> to vector<8xf32>
    %314 = vector.shape_cast %313 : vector<8xf32> to vector<8x1xf32>
    %cst_83 = arith.constant 0.000000e+00 : f32
    %315 = vector.broadcast %cst_83 : f32 to vector<8x1xf32>
    %316 = arith.cmpf oeq, %314, %315 : vector<8x1xf32>
    %317 = vector.shape_cast %316 : vector<8x1xi1> to vector<8x1x1xi1>
    %cst_84 = arith.constant 0xFF800000 : f32
    %318 = vector.shape_cast %317 : vector<8x1x1xi1> to vector<8x1x1xi1>
    %319 = vector.broadcast %318 : vector<8x1x1xi1> to vector<8x2x8xi1>
    %320 = vector.broadcast %cst_84 : f32 to vector<8x2x8xf32>
    %321 = arith.select %319, %320, %311 : vector<8x2x8xi1>, vector<8x2x8xf32>
    %cst_85 = arith.constant dense<0xFF800000> : vector<8x2xf32>
    %322 = vector.multi_reduction <maximumf>, %321, %cst_85 [2] : vector<8x2x8xf32> to vector<8x2xf32>
    %cst_86 = arith.constant 0xFF800000 : f32
    %323 = vector.broadcast %cst_86 : f32 to vector<8x2xf32>
    %324 = arith.maximumf %323, %322 : vector<8x2xf32>
    %325 = vector.shape_cast %324 : vector<8x2xf32> to vector<8x2x1xf32>
    %326 = vector.broadcast %325 : vector<8x2x1xf32> to vector<8x2x8xf32>
    %327 = arith.subf %321, %326 : vector<8x2x8xf32>
    %328 = math.exp %327 : vector<8x2x8xf32>
    %cst_87 = arith.constant dense<0.000000e+00> : vector<8x2xf32>
    %329 = vector.multi_reduction <add>, %328, %cst_87 [2] : vector<8x2x8xf32> to vector<8x2xf32>
    %330 = vector.shape_cast %329 : vector<8x2xf32> to vector<8x2x1xf32>
    %331 = vector.broadcast %330 : vector<8x2x1xf32> to vector<8x2x8xf32>
    %332 = arith.divf %328, %331 : vector<8x2x8xf32>
    %c0_88 = arith.constant 0 : index
    %c0_89 = arith.constant 0 : index
    %333 = vector.load %arg13[%c0_88, %c0_89] : memref<64x64xf32, #tpu.memory_space<vmem>>, vector<64x64xf32>
    %cst_90 = arith.constant dense<0.000000e+00> : vector<8x64xf32>
    %334 = tpu.matmul %1, %333, %cst_90 {dimension_numbers = #tpu.dot_dimension_numbers<[1], [0], [0], [1], [0, 0, 1, 1], [], []>} : vector<8x64xf32>, vector<64x64xf32>, vector<8x64xf32> -> vector<8x64xf32>
    %c0_91 = arith.constant 0 : index
    %c0_92 = arith.constant 0 : index
    %335 = vector.load %arg14[%c0_91, %c0_92] : memref<1x64xf32, #tpu.memory_space<vmem>>, vector<1x64xf32>
    %336 = vector.broadcast %335 : vector<1x64xf32> to vector<8x64xf32>
    %337 = arith.addf %334, %336 : vector<8x64xf32>
    %cst_93 = arith.constant 0.000000e+00 : f32
    %338 = vector.broadcast %cst_93 : f32 to vector<8x64xf32>
    %339 = arith.maximumf %337, %338 : vector<8x64xf32>
    %340 = vector.shape_cast %284 : vector<8x8x32xf32> to vector<64x32xf32>
    %c0_94 = arith.constant 0 : index
    %c0_95 = arith.constant 0 : index
    %c0_96 = arith.constant 0 : index
    %341 = vector.load %arg15[%c0_94, %c0_95, %c0_96] : memref<2x32x32xf32, #tpu.memory_space<vmem>>, vector<1x32x32xf32>
    %342 = vector.shape_cast %341 : vector<1x32x32xf32> to vector<32x32xf32>
    %cst_97 = arith.constant dense<0.000000e+00> : vector<64x32xf32>
    %343 = tpu.matmul %340, %342, %cst_97 {dimension_numbers = #tpu.dot_dimension_numbers<[1], [0], [0], [1], [0, 0, 1, 1], [], []>} : vector<64x32xf32>, vector<32x32xf32>, vector<64x32xf32> -> vector<64x32xf32>
    %c0_98 = arith.constant 0 : index
    %c0_99 = arith.constant 0 : index
    %c0_100 = arith.constant 0 : index
    %344 = vector.load %arg16[%c0_98, %c0_99, %c0_100] : memref<2x1x32xf32, #tpu.memory_space<vmem>>, vector<1x1x32xf32>
    %345 = vector.shape_cast %344 : vector<1x1x32xf32> to vector<1x32xf32>
    %346 = vector.broadcast %345 : vector<1x32xf32> to vector<64x32xf32>
    %347 = arith.addf %343, %346 : vector<64x32xf32>
    %cst_101 = arith.constant 0.000000e+00 : f32
    %348 = vector.broadcast %cst_101 : f32 to vector<64x32xf32>
    %349 = arith.maximumf %347, %348 : vector<64x32xf32>
    %350 = vector.shape_cast %349 : vector<64x32xf32> to vector<8x8x32xf32>
    %351 = vector.extract_strided_slice %332 {offsets = [0, 0, 0], sizes = [8, 1, 8], strides = [1, 1, 1]} : vector<8x2x8xf32> to vector<8x1x8xf32>
    %cst_102 = arith.constant dense<0.000000e+00> : vector<8x1x32xf32>
    %352 = tpu.matmul %351, %350, %cst_102 {dimension_numbers = #tpu.dot_dimension_numbers<[2], [1], [1], [2], [0, 0, 0, 1, 1, 2], [0], [0]>} : vector<8x1x8xf32>, vector<8x8x32xf32>, vector<8x1x32xf32> -> vector<8x1x32xf32>
    %353 = vector.shape_cast %352 : vector<8x1x32xf32> to vector<8x32xf32>
    %354 = vector.extract_strided_slice %339 {offsets = [0, 0], sizes = [8, 32], strides = [1, 1]} : vector<8x64xf32> to vector<8x32xf32>
    %355 = arith.mulf %354, %353 : vector<8x32xf32>
    %c0_103 = arith.constant 0 : index
    %c0_104 = arith.constant 0 : index
    %c0_105 = arith.constant 0 : index
    %356 = vector.load %arg17[%c0_103, %c0_104, %c0_105] : memref<2x32x32xf32, #tpu.memory_space<vmem>>, vector<1x32x32xf32>
    %357 = vector.shape_cast %356 : vector<1x32x32xf32> to vector<32x32xf32>
    %cst_106 = arith.constant dense<0.000000e+00> : vector<8x32xf32>
    %358 = tpu.matmul %355, %357, %cst_106 {dimension_numbers = #tpu.dot_dimension_numbers<[1], [0], [0], [1], [0, 0, 1, 1], [], []>} : vector<8x32xf32>, vector<32x32xf32>, vector<8x32xf32> -> vector<8x32xf32>
    %c0_107 = arith.constant 0 : index
    %c0_108 = arith.constant 0 : index
    %c0_109 = arith.constant 0 : index
    %359 = vector.load %arg18[%c0_107, %c0_108, %c0_109] : memref<2x1x32xf32, #tpu.memory_space<vmem>>, vector<1x1x32xf32>
    %360 = vector.shape_cast %359 : vector<1x1x32xf32> to vector<1x32xf32>
    %361 = vector.broadcast %360 : vector<1x32xf32> to vector<8x32xf32>
    %362 = arith.addf %358, %361 : vector<8x32xf32>
    %363 = vector.shape_cast %362 : vector<8x32xf32> to vector<8x1x32xf32>
    %364 = vector.broadcast %363 : vector<8x1x32xf32> to vector<8x8x32xf32>
    %365 = arith.addf %284, %364 : vector<8x8x32xf32>
    %366 = vector.shape_cast %365 : vector<8x8x32xf32> to vector<64x32xf32>
    %c1_110 = arith.constant 1 : index
    %c0_111 = arith.constant 0 : index
    %c0_112 = arith.constant 0 : index
    %367 = vector.load %arg15[%c1_110, %c0_111, %c0_112] : memref<2x32x32xf32, #tpu.memory_space<vmem>>, vector<1x32x32xf32>
    %368 = vector.shape_cast %367 : vector<1x32x32xf32> to vector<32x32xf32>
    %cst_113 = arith.constant dense<0.000000e+00> : vector<64x32xf32>
    %369 = tpu.matmul %366, %368, %cst_113 {dimension_numbers = #tpu.dot_dimension_numbers<[1], [0], [0], [1], [0, 0, 1, 1], [], []>} : vector<64x32xf32>, vector<32x32xf32>, vector<64x32xf32> -> vector<64x32xf32>
    %c1_114 = arith.constant 1 : index
    %c0_115 = arith.constant 0 : index
    %c0_116 = arith.constant 0 : index
    %370 = vector.load %arg16[%c1_114, %c0_115, %c0_116] : memref<2x1x32xf32, #tpu.memory_space<vmem>>, vector<1x1x32xf32>
    %371 = vector.shape_cast %370 : vector<1x1x32xf32> to vector<1x32xf32>
    %372 = vector.broadcast %371 : vector<1x32xf32> to vector<64x32xf32>
    %373 = arith.addf %369, %372 : vector<64x32xf32>
    %cst_117 = arith.constant 0.000000e+00 : f32
    %374 = vector.broadcast %cst_117 : f32 to vector<64x32xf32>
    %375 = arith.maximumf %373, %374 : vector<64x32xf32>
    %376 = vector.shape_cast %375 : vector<64x32xf32> to vector<8x8x32xf32>
    %377 = vector.extract_strided_slice %332 {offsets = [0, 1, 0], sizes = [8, 1, 8], strides = [1, 1, 1]} : vector<8x2x8xf32> to vector<8x1x8xf32>
    %cst_118 = arith.constant dense<0.000000e+00> : vector<8x1x32xf32>
    %378 = tpu.matmul %377, %376, %cst_118 {dimension_numbers = #tpu.dot_dimension_numbers<[2], [1], [1], [2], [0, 0, 0, 1, 1, 2], [0], [0]>} : vector<8x1x8xf32>, vector<8x8x32xf32>, vector<8x1x32xf32> -> vector<8x1x32xf32>
    %379 = vector.shape_cast %378 : vector<8x1x32xf32> to vector<8x32xf32>
    %380 = vector.extract_strided_slice %339 {offsets = [0, 32], sizes = [8, 32], strides = [1, 1]} : vector<8x64xf32> to vector<8x32xf32>
    %381 = arith.mulf %380, %379 : vector<8x32xf32>
    %c1_119 = arith.constant 1 : index
    %c0_120 = arith.constant 0 : index
    %c0_121 = arith.constant 0 : index
    %382 = vector.load %arg17[%c1_119, %c0_120, %c0_121] : memref<2x32x32xf32, #tpu.memory_space<vmem>>, vector<1x32x32xf32>
    %383 = vector.shape_cast %382 : vector<1x32x32xf32> to vector<32x32xf32>
    %cst_122 = arith.constant dense<0.000000e+00> : vector<8x32xf32>
    %384 = tpu.matmul %381, %383, %cst_122 {dimension_numbers = #tpu.dot_dimension_numbers<[1], [0], [0], [1], [0, 0, 1, 1], [], []>} : vector<8x32xf32>, vector<32x32xf32>, vector<8x32xf32> -> vector<8x32xf32>
    %c1_123 = arith.constant 1 : index
    %c0_124 = arith.constant 0 : index
    %c0_125 = arith.constant 0 : index
    %385 = vector.load %arg18[%c1_123, %c0_124, %c0_125] : memref<2x1x32xf32, #tpu.memory_space<vmem>>, vector<1x1x32xf32>
    %386 = vector.shape_cast %385 : vector<1x1x32xf32> to vector<1x32xf32>
    %387 = vector.broadcast %386 : vector<1x32xf32> to vector<8x32xf32>
    %388 = arith.addf %384, %387 : vector<8x32xf32>
    %389 = vector.shape_cast %388 : vector<8x32xf32> to vector<8x1x32xf32>
    %390 = vector.broadcast %389 : vector<8x1x32xf32> to vector<8x8x32xf32>
    %391 = arith.addf %365, %390 : vector<8x8x32xf32>
    %cst_126 = arith.constant dense<0.000000e+00> : vector<8x32xf32>
    %392 = vector.multi_reduction <add>, %391, %cst_126 [1] : vector<8x8x32xf32> to vector<8x32xf32>
    %c0_127 = arith.constant 0 : index
    %c0_128 = arith.constant 0 : index
    %393 = vector.load %arg19[%c0_127, %c0_128] : memref<8x32xf32, #tpu.memory_space<vmem>>, vector<8x32xf32>
    tpu.vector_store %arg19[%c0_127, %c0_128], %392 {strides = array<i32>} : memref<8x32xf32, #tpu.memory_space<vmem>>, vector<8x32xf32>,
    return
  }
  func.func @transform_0(%arg0: i32) -> (i32, i32, i32) {
    %c0_i32 = arith.constant 0 : i32
    %c0_i32_0 = arith.constant 0 : i32
    %c0_i32_1 = arith.constant 0 : i32
    return %arg0, %c0_i32, %c0_i32_0 : i32, i32, i32
  }
  func.func @transform_1(%arg0: i32) -> (i32, i32) {
    %c0_i32 = arith.constant 0 : i32
    %c0_i32_0 = arith.constant 0 : i32
    return %arg0, %c0_i32 : i32, i32
  }
  func.func @transform_2(%arg0: i32) -> (i32, i32) {
    %c0_i32 = arith.constant 0 : i32
    %c0_i32_0 = arith.constant 0 : i32
    %c0_i32_1 = arith.constant 0 : i32
    return %c0_i32, %c0_i32_0 : i32, i32
  }
  func.func @transform_3(%arg0: i32) -> (i32, i32) {
    %c0_i32 = arith.constant 0 : i32
    %c0_i32_0 = arith.constant 0 : i32
    %c0_i32_1 = arith.constant 0 : i32
    return %c0_i32, %c0_i32_0 : i32, i32
  }
  func.func @transform_4(%arg0: i32) -> (i32, i32) {
    %c0_i32 = arith.constant 0 : i32
    %c0_i32_0 = arith.constant 0 : i32
    %c0_i32_1 = arith.constant 0 : i32
    return %c0_i32, %c0_i32_0 : i32, i32
  }
  func.func @transform_5(%arg0: i32) -> (i32, i32) {
    %c0_i32 = arith.constant 0 : i32
    %c0_i32_0 = arith.constant 0 : i32
    %c0_i32_1 = arith.constant 0 : i32
    return %c0_i32, %c0_i32_0 : i32, i32
  }
  func.func @transform_6(%arg0: i32) -> (i32, i32) {
    %c0_i32 = arith.constant 0 : i32
    %c0_i32_0 = arith.constant 0 : i32
    %c0_i32_1 = arith.constant 0 : i32
    return %c0_i32, %c0_i32_0 : i32, i32
  }
  func.func @transform_7(%arg0: i32) -> (i32, i32) {
    %c0_i32 = arith.constant 0 : i32
    %c0_i32_0 = arith.constant 0 : i32
    %c0_i32_1 = arith.constant 0 : i32
    return %c0_i32, %c0_i32_0 : i32, i32
  }
  func.func @transform_8(%arg0: i32) -> (i32, i32) {
    %c0_i32 = arith.constant 0 : i32
    %c0_i32_0 = arith.constant 0 : i32
    %c0_i32_1 = arith.constant 0 : i32
    return %c0_i32, %c0_i32_0 : i32, i32
  }
  func.func @transform_9(%arg0: i32) -> (i32, i32) {
    %c0_i32 = arith.constant 0 : i32
    %c0_i32_0 = arith.constant 0 : i32
    %c0_i32_1 = arith.constant 0 : i32
    return %c0_i32, %c0_i32_0 : i32, i32
  }
  func.func @transform_10(%arg0: i32) -> (i32, i32) {
    %c0_i32 = arith.constant 0 : i32
    %c0_i32_0 = arith.constant 0 : i32
    %c0_i32_1 = arith.constant 0 : i32
    return %c0_i32, %c0_i32_0 : i32, i32
  }
  func.func @transform_11(%arg0: i32) -> (i32, i32) {
    %c0_i32 = arith.constant 0 : i32
    %c0_i32_0 = arith.constant 0 : i32
    %c0_i32_1 = arith.constant 0 : i32
    return %c0_i32, %c0_i32_0 : i32, i32
  }
  func.func @transform_12(%arg0: i32) -> (i32, i32) {
    %c0_i32 = arith.constant 0 : i32
    %c0_i32_0 = arith.constant 0 : i32
    %c0_i32_1 = arith.constant 0 : i32
    return %c0_i32, %c0_i32_0 : i32, i32
  }
  func.func @transform_13(%arg0: i32) -> (i32, i32) {
    %c0_i32 = arith.constant 0 : i32
    %c0_i32_0 = arith.constant 0 : i32
    %c0_i32_1 = arith.constant 0 : i32
    return %c0_i32, %c0_i32_0 : i32, i32
  }
  func.func @transform_14(%arg0: i32) -> (i32, i32, i32) {
    %c0_i32 = arith.constant 0 : i32
    %c0_i32_0 = arith.constant 0 : i32
    %c0_i32_1 = arith.constant 0 : i32
    %c0_i32_2 = arith.constant 0 : i32
    return %c0_i32, %c0_i32_0, %c0_i32_1 : i32, i32, i32
  }
  func.func @transform_15(%arg0: i32) -> (i32, i32, i32) {
    %c0_i32 = arith.constant 0 : i32
    %c0_i32_0 = arith.constant 0 : i32
    %c0_i32_1 = arith.constant 0 : i32
    %c0_i32_2 = arith.constant 0 : i32
    return %c0_i32, %c0_i32_0, %c0_i32_1 : i32, i32, i32
  }
  func.func @transform_16(%arg0: i32) -> (i32, i32, i32) {
    %c0_i32 = arith.constant 0 : i32
    %c0_i32_0 = arith.constant 0 : i32
    %c0_i32_1 = arith.constant 0 : i32
    %c0_i32_2 = arith.constant 0 : i32
    return %c0_i32, %c0_i32_0, %c0_i32_1 : i32, i32, i32
  }
  func.func @transform_17(%arg0: i32) -> (i32, i32, i32) {
    %c0_i32 = arith.constant 0 : i32
    %c0_i32_0 = arith.constant 0 : i32
    %c0_i32_1 = arith.constant 0 : i32
    %c0_i32_2 = arith.constant 0 : i32
    return %c0_i32, %c0_i32_0, %c0_i32_1 : i32, i32, i32
  }
  func.func @transform_18(%arg0: i32) -> (i32, i32) {
    %c0_i32 = arith.constant 0 : i32
    %c0_i32_0 = arith.constant 0 : i32
    return %arg0, %c0_i32 : i32, i32
  }
}

</mosaic_0001>

<llo_original>
// kernel: tpu_custom_call.1
$region0: #{tpu_custom_call.1}
  #allocation0 [shape = 'u32[]', space=smem, size = 0x4, offset = 0x4, fixed_abs, tag = 'smem constant byte address 0x4 - core index']
  #allocation1 [shape = 'u32[72,128]{1,0:T(1,128)}', space=vmem, size = 0x9000, scoped, tag = 'internal scratch']
  #allocation2 [shape = 'f32[8,8,32]{2,1,0:T(8,128)}', space=vmem, size = 0x8000, scoped, tag = 'scratch operand']
  %s0 = inlined_call_operand.hbm [shape: f32[16,8,32], index: 0, kind: input, shape index: {}]
  %s1 = inlined_call_operand.hbm [shape: f32[16,64], index: 1, kind: input, shape index: {}]
  %s2 = inlined_call_operand.hbm [shape: f32[32,96], index: 2, kind: input, shape index: {}]
  %s3 = inlined_call_operand.hbm [shape: f32[32,96], index: 3, kind: input, shape index: {}]
  %s4 = inlined_call_operand.vmem [shape: f32[1,96], index: 4, kind: input, shape index: {}]
  %s5 = inlined_call_operand.hbm [shape: f32[1,96], index: 5, kind: input, shape index: {}]
  %s6 = inlined_call_operand.hbm [shape: f32[64,96], index: 6, kind: input, shape index: {}]
  %s7 = inlined_call_operand.vmem [shape: f32[1,96], index: 7, kind: input, shape index: {}]
  %s8 = inlined_call_operand.hbm [shape: f32[32,96], index: 8, kind: input, shape index: {}]
  %s9 = inlined_call_operand.vmem [shape: f32[1,96], index: 9, kind: input, shape index: {}]
  %s10 = inlined_call_operand.vmem [shape: f32[2,96], index: 10, kind: input, shape index: {}]
  %s11 = inlined_call_operand.vmem [shape: f32[2,1], index: 11, kind: input, shape index: {}]
  %s12 = inlined_call_operand.hbm [shape: f32[64,64], index: 12, kind: input, shape index: {}]
  %s13 = inlined_call_operand.vmem [shape: f32[1,64], index: 13, kind: input, shape index: {}]
  %s14 = inlined_call_operand.hbm [shape: f32[2,32,32], index: 14, kind: input, shape index: {}]
  %s15 = inlined_call_operand.vmem [shape: f32[2,1,32], index: 15, kind: input, shape index: {}]
  %s16 = inlined_call_operand.hbm [shape: f32[2,32,32], index: 16, kind: input, shape index: {}]
  %s17 = inlined_call_operand.vmem [shape: f32[2,1,32], index: 17, kind: input, shape index: {}]
  %s18 = inlined_call_operand.hbm [shape: f32[16,32], index: 18, kind: output, shape index: {}]
  %s19 = sld [smem:[#allocation0]]
  $region145: #{tpu_custom_call.1} parent=0
    _
  %s21 = ssub.s32 1, %s19
  %s22 = scalar_select 0, %s21, %s19
  $region1: #{tpu_custom_call.1} parent=0
    #allocation3 [shape = 'u8[65536]{0}', space=vmem, size = 0x10000, scoped, tag = 'input window, operand 0']
    #allocation4 [shape = 's32[2]{0}', space=sflag, size = 0x8, scoped, tag = 'scoped memory for tpu_custom_call.1']
    #allocation5 [shape = 's32[2]{0}', space=sflag, size = 0x8, scoped, tag = 'scoped memory for tpu_custom_call.1']
    #allocation6 [shape = 'u8[8192]{0}', space=vmem, size = 0x2000, scoped, tag = 'input window, operand 1']
    #allocation7 [shape = 's32[2]{0}', space=sflag, size = 0x8, scoped, tag = 'scoped memory for tpu_custom_call.1']
    #allocation8 [shape = 'u8[16384]{0}', space=vmem, size = 0x4000, scoped, tag = 'input window, operand 2, single buffered']
    #allocation9 [shape = 'u8[16384]{0}', space=vmem, size = 0x4000, scoped, tag = 'input window, operand 3, single buffered']
    #allocation10 [shape = 's32[1]{0}', space=sflag, size = 0x4, scoped, tag = 'scoped memory for tpu_custom_call.1']
    #allocation11 [shape = 'u8[512]{0}', space=vmem, size = 0x400, scoped, tag = 'input window, operand 5, single buffered']
    #allocation12 [shape = 'u8[32768]{0}', space=vmem, size = 0x8000, scoped, tag = 'input window, operand 6, single buffered']
    #allocation13 [shape = 's32[1]{0}', space=sflag, size = 0x4, scoped, tag = 'scoped memory for tpu_custom_call.1']
    #allocation14 [shape = 'u8[16384]{0}', space=vmem, size = 0x4000, scoped, tag = 'input window, operand 8, single buffered']
    #allocation15 [shape = 'u8[32768]{0}', space=vmem, size = 0x8000, scoped, tag = 'input window, operand 12, single buffered']
    #allocation16 [shape = 's32[1]{0}', space=sflag, size = 0x4, scoped, tag = 'scoped memory for tpu_custom_call.1']
    #allocation17 [shape = 'u8[32768]{0}', space=vmem, size = 0x8000, scoped, tag = 'input window, operand 14, single buffered']
    #allocation18 [shape = 'u8[32768]{0}', space=vmem, size = 0x8000, scoped, tag = 'input window, operand 16, single buffered']
    #allocation19 [shape = 's32[1]{0}', space=sflag, size = 0x4, scoped, tag = 'scoped memory for tpu_custom_call.1']
    #allocation20 [shape = 'u8[8192]{0}', space=vmem, size = 0x2000, scoped, tag = 'output window, operand 0']
    %23 = vsyncpa [#allocation4], 0
    %s24 = scalar_lea.sflag [#allocation4], 1
    %25 = vsyncpa %s24, 0
    %26 = vsyncpa [#allocation7], 0
    %s27 = scalar_lea.sflag [#allocation7], 1
    %28 = vsyncpa %s27, 0
    %29 = vsyncpa [#allocation10], 0
    %30 = vsyncpa [#allocation13], 0
    %31 = vsyncpa [#allocation16], 0
    %32 = vsyncpa [#allocation19], 0
    %33 = vsyncpa [#allocation5], 0
    %s34 = scalar_lea.sflag [#allocation5], 1
    %35 = vsyncpa %s34, 0
    loop: start=0, step=1, limit=4
    $region2: #{tpu_custom_call.1} parent=1 // loop_pre_header
      _
    $region3: #{tpu_custom_call.1} parent=1 // loop_header
      %s37 = sphi 0, %s41
      %p38 = scmp.ge.s32.totalorder %s37, 4
      %s47 = sphi 0, %s49
      %s50 = sphi 0, %s47
      %s51 = sphi 0, %s50
      %s67 = sphi 0, %s51
      %s73 = sphi 0, %s75
      %s76 = sphi 0, %s73
      %s77 = sphi 0, %s76
      %s93 = sphi 0, %s77
      %s97 = sphi 0, %s97
      %s99 = sphi 0, %s97
      %s100 = sphi 0, %s99
      %s114 = sphi 0, %s100
      %s118 = sphi 0, %s118
      %s120 = sphi 0, %s118
      %s121 = sphi 0, %s120
      %s135 = sphi 0, %s121
      %s139 = sphi 0, %s139
      %s141 = sphi 0, %s139
      %s142 = sphi 0, %s141
      %s156 = sphi 0, %s142
      %s160 = sphi 0, %s160
      %s162 = sphi 0, %s160
      %s163 = sphi 0, %s162
      %s177 = sphi 0, %s163
      %s181 = sphi 0, %s181
      %s183 = sphi 0, %s181
      %s184 = sphi 0, %s183
      %s198 = sphi 0, %s184
      %s202 = sphi 0, %s202
      %s204 = sphi 0, %s202
      %s205 = sphi 0, %s204
      %s219 = sphi 0, %s205
      %s223 = sphi 0, %s223
      %s225 = sphi 0, %s223
      %s226 = sphi 0, %s225
      %s240 = sphi 0, %s226
      %s244 = sphi 0, %s244
      %s246 = sphi 0, %s244
      %s247 = sphi 0, %s246
      %s261 = sphi 0, %s247
      %s265 = sphi 0, %s265
      %s267 = sphi 0, %s265
      %s268 = sphi 0, %s267
      %s282 = sphi 0, %s268
      %s286 = sphi 0, %s286
      %s288 = sphi 0, %s286
      %s289 = sphi 0, %s288
      %s303 = sphi 0, %s289
      %s307 = sphi 0, %s307
      %s309 = sphi 0, %s307
      %s310 = sphi 0, %s309
      %s324 = sphi 0, %s310
      %s328 = sphi 0, %s328
      %s330 = sphi 0, %s328
      %s331 = sphi 0, %s330
      %s345 = sphi 0, %s331
      %s349 = sphi 0, %s349
      %s351 = sphi 0, %s349
      %s352 = sphi 0, %s351
      %s366 = sphi 0, %s352
      %s370 = sphi 0, %s370
      %s372 = sphi 0, %s370
      %s373 = sphi 0, %s372
      %s387 = sphi 0, %s373
      %s391 = sphi 0, %s391
      %s393 = sphi 0, %s391
      %s394 = sphi 0, %s393
      %s408 = sphi 0, %s394
      %s412 = sphi 0, %s412
      %s414 = sphi 0, %s412
      %s415 = sphi 0, %s414
      %s429 = sphi 0, %s415
      %s435 = sphi 0, %s437
      %s438 = sphi 0, %s435
      %s439 = sphi 0, %s438
      %s455 = sphi 0, %s439
    $region4: #{tpu_custom_call.1} parent=1 // loop_header_branch
      %40 = sbr.rel (%p38) target = $region8
    $region5: #{tpu_custom_call.1} parent=1 // loop_body
      %s42 = ssub.s32 %s37, 1
      %s43 = ssub.s32 %s37, 2
      %s44 = sadd.s32 %s37, 1
      %s45 = ssub.s32 %s37, %s44
      %p46 = scmp.eq.s32.totalorder %s45, 0
      %s48 = sadd.s32 %s47, 1
      %s49 = scalar_select %p46, %s47, %s48
      %p52 = pneg %p46
      %p53 = scmp.eq.s32.totalorder %s37, 1
      %p54 = por %p52, %p53
      %p55 = scmp.ne.s32.totalorder %s47, %s50
      %p56 = scmp.eq.s32.totalorder %s37, 0
      %p57 = por %p55, %p56
      %p58 = scmp.ne.s32.totalorder %s47, %s50
      %p59 = scmp.eq.s32.totalorder %s42, 1
      %p60 = por %p58, %p59
      %p61 = scmp.ne.s32.totalorder %s50, %s51
      %p62 = scmp.eq.s32.totalorder %s42, 0
      %p63 = por %p61, %p62
      %p64 = scmp.ne.s32.totalorder %s50, %s51
      %p65 = scmp.eq.s32.totalorder %s43, 1
      %p66 = por %p64, %p65
      %p68 = scmp.ne.s32.totalorder %s51, %s67
      %p69 = scmp.eq.s32.totalorder %s43, 0
      %p70 = por %p68, %p69
      %s71 = ssub.s32 %s37, %s44
      %p72 = scmp.eq.s32.totalorder %s71, 0
      %s74 = sadd.s32 %s73, 1
      %s75 = scalar_select %p72, %s73, %s74
      %p78 = pneg %p72
      %p79 = scmp.eq.s32.totalorder %s37, 1
      %p80 = por %p78, %p79
      %p81 = scmp.ne.s32.totalorder %s73, %s76
      %p82 = scmp.eq.s32.totalorder %s37, 0
      %p83 = por %p81, %p82
      %p84 = scmp.ne.s32.totalorder %s73, %s76
      %p85 = scmp.eq.s32.totalorder %s42, 1
      %p86 = por %p84, %p85
      %p87 = scmp.ne.s32.totalorder %s76, %s77
      %p88 = scmp.eq.s32.totalorder %s42, 0
      %p89 = por %p87, %p88
      %p90 = scmp.ne.s32.totalorder %s76, %s77
      %p91 = scmp.eq.s32.totalorder %s43, 1
      %p92 = por %p90, %p91
      %p94 = scmp.ne.s32.totalorder %s77, %s93
      %p95 = scmp.eq.s32.totalorder %s43, 0
      %p96 = por %p94, %p95
      %s98 = sadd.s32 %s97, 1
      %p101 = scmp.eq.s32.totalorder %s37, 1
      %p102 = scmp.ne.s32.totalorder %s97, %s99
      %p103 = scmp.eq.s32.totalorder %s37, 0
      %p104 = por %p102, %p103
      %p105 = scmp.ne.s32.totalorder %s97, %s99
      %p106 = scmp.eq.s32.totalorder %s42, 1
      %p107 = por %p105, %p106
      %p108 = scmp.ne.s32.totalorder %s99, %s100
      %p109 = scmp.eq.s32.totalorder %s42, 0
      %p110 = por %p108, %p109
      %p111 = scmp.ne.s32.totalorder %s99, %s100
      %p112 = scmp.eq.s32.totalorder %s43, 1
      %p113 = por %p111, %p112
      %p115 = scmp.ne.s32.totalorder %s100, %s114
      %p116 = scmp.eq.s32.totalorder %s43, 0
      %p117 = por %p115, %p116
      %s119 = sadd.s32 %s118, 1
      %p122 = scmp.eq.s32.totalorder %s37, 1
      %p123 = scmp.ne.s32.totalorder %s118, %s120
      %p124 = scmp.eq.s32.totalorder %s37, 0
      %p125 = por %p123, %p124
      %p126 = scmp.ne.s32.totalorder %s118, %s120
      %p127 = scmp.eq.s32.totalorder %s42, 1
      %p128 = por %p126, %p127
      %p129 = scmp.ne.s32.totalorder %s120, %s121
      %p130 = scmp.eq.s32.totalorder %s42, 0
      %p131 = por %p129, %p130
      %p132 = scmp.ne.s32.totalorder %s120, %s121
      %p133 = scmp.eq.s32.totalorder %s43, 1
      %p134 = por %p132, %p133
      %p136 = scmp.ne.s32.totalorder %s121, %s135
      %p137 = scmp.eq.s32.totalorder %s43, 0
      %p138 = por %p136, %p137
      %s140 = sadd.s32 %s139, 1
      %p143 = scmp.eq.s32.totalorder %s37, 1
      %p144 = scmp.ne.s32.totalorder %s139, %s141
      %p145 = scmp.eq.s32.totalorder %s37, 0
      %p146 = por %p144, %p145
      %p147 = scmp.ne.s32.totalorder %s139, %s141
      %p148 = scmp.eq.s32.totalorder %s42, 1
      %p149 = por %p147, %p148
      %p150 = scmp.ne.s32.totalorder %s141, %s142
      %p151 = scmp.eq.s32.totalorder %s42, 0
      %p152 = por %p150, %p151
      %p153 = scmp.ne.s32.totalorder %s141, %s142
      %p154 = scmp.eq.s32.totalorder %s43, 1
      %p155 = por %p153, %p154
      %p157 = scmp.ne.s32.totalorder %s142, %s156
      %p158 = scmp.eq.s32.totalorder %s43, 0
      %p159 = por %p157, %p158
      %s161 = sadd.s32 %s160, 1
      %p164 = scmp.eq.s32.totalorder %s37, 1
      %p165 = scmp.ne.s32.totalorder %s160, %s162
      %p166 = scmp.eq.s32.totalorder %s37, 0
      %p167 = por %p165, %p166
      %p168 = scmp.ne.s32.totalorder %s160, %s162
      %p169 = scmp.eq.s32.totalorder %s42, 1
      %p170 = por %p168, %p169
      %p171 = scmp.ne.s32.totalorder %s162, %s163
      %p172 = scmp.eq.s32.totalorder %s42, 0
      %p173 = por %p171, %p172
      %p174 = scmp.ne.s32.totalorder %s162, %s163
      %p175 = scmp.eq.s32.totalorder %s43, 1
      %p176 = por %p174, %p175
      %p178 = scmp.ne.s32.totalorder %s163, %s177
      %p179 = scmp.eq.s32.totalorder %s43, 0
      %p180 = por %p178, %p179
      %s182 = sadd.s32 %s181, 1
      %p185 = scmp.eq.s32.totalorder %s37, 1
      %p186 = scmp.ne.s32.totalorder %s181, %s183
      %p187 = scmp.eq.s32.totalorder %s37, 0
      %p188 = por %p186, %p187
      %p189 = scmp.ne.s32.totalorder %s181, %s183
      %p190 = scmp.eq.s32.totalorder %s42, 1
      %p191 = por %p189, %p190
      %p192 = scmp.ne.s32.totalorder %s183, %s184
      %p193 = scmp.eq.s32.totalorder %s42, 0
      %p194 = por %p192, %p193
      %p195 = scmp.ne.s32.totalorder %s183, %s184
      %p196 = scmp.eq.s32.totalorder %s43, 1
      %p197 = por %p195, %p196
      %p199 = scmp.ne.s32.totalorder %s184, %s198
      %p200 = scmp.eq.s32.totalorder %s43, 0
      %p201 = por %p199, %p200
      %s203 = sadd.s32 %s202, 1
      %p206 = scmp.eq.s32.totalorder %s37, 1
      %p207 = scmp.ne.s32.totalorder %s202, %s204
      %p208 = scmp.eq.s32.totalorder %s37, 0
      %p209 = por %p207, %p208
      %p210 = scmp.ne.s32.totalorder %s202, %s204
      %p211 = scmp.eq.s32.totalorder %s42, 1
      %p212 = por %p210, %p211
      %p213 = scmp.ne.s32.totalorder %s204, %s205
      %p214 = scmp.eq.s32.totalorder %s42, 0
      %p215 = por %p213, %p214
      %p216 = scmp.ne.s32.totalorder %s204, %s205
      %p217 = scmp.eq.s32.totalorder %s43, 1
      %p218 = por %p216, %p217
      %p220 = scmp.ne.s32.totalorder %s205, %s219
      %p221 = scmp.eq.s32.totalorder %s43, 0
      %p222 = por %p220, %p221
      %s224 = sadd.s32 %s223, 1
      %p227 = scmp.eq.s32.totalorder %s37, 1
      %p228 = scmp.ne.s32.totalorder %s223, %s225
      %p229 = scmp.eq.s32.totalorder %s37, 0
      %p230 = por %p228, %p229
      %p231 = scmp.ne.s32.totalorder %s223, %s225
      %p232 = scmp.eq.s32.totalorder %s42, 1
      %p233 = por %p231, %p232
      %p234 = scmp.ne.s32.totalorder %s225, %s226
      %p235 = scmp.eq.s32.totalorder %s42, 0
      %p236 = por %p234, %p235
      %p237 = scmp.ne.s32.totalorder %s225, %s226
      %p238 = scmp.eq.s32.totalorder %s43, 1
      %p239 = por %p237, %p238
      %p241 = scmp.ne.s32.totalorder %s226, %s240
      %p242 = scmp.eq.s32.totalorder %s43, 0
      %p243 = por %p241, %p242
      %s245 = sadd.s32 %s244, 1
      %p248 = scmp.eq.s32.totalorder %s37, 1
      %p249 = scmp.ne.s32.totalorder %s244, %s246
      %p250 = scmp.eq.s32.totalorder %s37, 0
      %p251 = por %p249, %p250
      %p252 = scmp.ne.s32.totalorder %s244, %s246
      %p253 = scmp.eq.s32.totalorder %s42, 1
      %p254 = por %p252, %p253
      %p255 = scmp.ne.s32.totalorder %s246, %s247
      %p256 = scmp.eq.s32.totalorder %s42, 0
      %p257 = por %p255, %p256
      %p258 = scmp.ne.s32.totalorder %s246, %s247
      %p259 = scmp.eq.s32.totalorder %s43, 1
      %p260 = por %p258, %p259
      %p262 = scmp.ne.s32.totalorder %s247, %s261
      %p263 = scmp.eq.s32.totalorder %s43, 0
      %p264 = por %p262, %p263
      %s266 = sadd.s32 %s265, 1
      %p269 = scmp.eq.s32.totalorder %s37, 1
      %p270 = scmp.ne.s32.totalorder %s265, %s267
      %p271 = scmp.eq.s32.totalorder %s37, 0
      %p272 = por %p270, %p271
      %p273 = scmp.ne.s32.totalorder %s265, %s267
      %p274 = scmp.eq.s32.totalorder %s42, 1
      %p275 = por %p273, %p274
      %p276 = scmp.ne.s32.totalorder %s267, %s268
      %p277 = scmp.eq.s32.totalorder %s42, 0
      %p278 = por %p276, %p277
      %p279 = scmp.ne.s32.totalorder %s267, %s268
      %p280 = scmp.eq.s32.totalorder %s43, 1
      %p281 = por %p279, %p280
      %p283 = scmp.ne.s32.totalorder %s268, %s282
      %p284 = scmp.eq.s32.totalorder %s43, 0
      %p285 = por %p283, %p284
      %s287 = sadd.s32 %s286, 1
      %p290 = scmp.eq.s32.totalorder %s37, 1
      %p291 = scmp.ne.s32.totalorder %s286, %s288
      %p292 = scmp.eq.s32.totalorder %s37, 0
      %p293 = por %p291, %p292
      %p294 = scmp.ne.s32.totalorder %s286, %s288
      %p295 = scmp.eq.s32.totalorder %s42, 1
      %p296 = por %p294, %p295
      %p297 = scmp.ne.s32.totalorder %s288, %s289
      %p298 = scmp.eq.s32.totalorder %s42, 0
      %p299 = por %p297, %p298
      %p300 = scmp.ne.s32.totalorder %s288, %s289
      %p301 = scmp.eq.s32.totalorder %s43, 1
      %p302 = por %p300, %p301
      %p304 = scmp.ne.s32.totalorder %s289, %s303
      %p305 = scmp.eq.s32.totalorder %s43, 0
      %p306 = por %p304, %p305
      %s308 = sadd.s32 %s307, 1
      %p311 = scmp.eq.s32.totalorder %s37, 1
      %p312 = scmp.ne.s32.totalorder %s307, %s309
      %p313 = scmp.eq.s32.totalorder %s37, 0
      %p314 = por %p312, %p313
      %p315 = scmp.ne.s32.totalorder %s307, %s309
      %p316 = scmp.eq.s32.totalorder %s42, 1
      %p317 = por %p315, %p316
      %p318 = scmp.ne.s32.totalorder %s309, %s310
      %p319 = scmp.eq.s32.totalorder %s42, 0
      %p320 = por %p318, %p319
      %p321 = scmp.ne.s32.totalorder %s309, %s310
      %p322 = scmp.eq.s32.totalorder %s43, 1
      %p323 = por %p321, %p322
      %p325 = scmp.ne.s32.totalorder %s310, %s324
      %p326 = scmp.eq.s32.totalorder %s43, 0
      %p327 = por %p325, %p326
      %s329 = sadd.s32 %s328, 1
      %p332 = scmp.eq.s32.totalorder %s37, 1
      %p333 = scmp.ne.s32.totalorder %s328, %s330
      %p334 = scmp.eq.s32.totalorder %s37, 0
      %p335 = por %p333, %p334
      %p336 = scmp.ne.s32.totalorder %s328, %s330
      %p337 = scmp.eq.s32.totalorder %s42, 1
      %p338 = por %p336, %p337
      %p339 = scmp.ne.s32.totalorder %s330, %s331
      %p340 = scmp.eq.s32.totalorder %s42, 0
      %p341 = por %p339, %p340
      %p342 = scmp.ne.s32.totalorder %s330, %s331
      %p343 = scmp.eq.s32.totalorder %s43, 1
      %p344 = por %p342, %p343
      %p346 = scmp.ne.s32.totalorder %s331, %s345
      %p347 = scmp.eq.s32.totalorder %s43, 0
      %p348 = por %p346, %p347
      %s350 = sadd.s32 %s349, 1
      %p353 = scmp.eq.s32.totalorder %s37, 1
      %p354 = scmp.ne.s32.totalorder %s349, %s351
      %p355 = scmp.eq.s32.totalorder %s37, 0
      %p356 = por %p354, %p355
      %p357 = scmp.ne.s32.totalorder %s349, %s351
      %p358 = scmp.eq.s32.totalorder %s42, 1
      %p359 = por %p357, %p358
      %p360 = scmp.ne.s32.totalorder %s351, %s352
      %p361 = scmp.eq.s32.totalorder %s42, 0
      %p362 = por %p360, %p361
      %p363 = scmp.ne.s32.totalorder %s351, %s352
      %p364 = scmp.eq.s32.totalorder %s43, 1
      %p365 = por %p363, %p364
      %p367 = scmp.ne.s32.totalorder %s352, %s366
      %p368 = scmp.eq.s32.totalorder %s43, 0
      %p369 = por %p367, %p368
      %s371 = sadd.s32 %s370, 1
      %p374 = scmp.eq.s32.totalorder %s37, 1
      %p375 = scmp.ne.s32.totalorder %s370, %s372
      %p376 = scmp.eq.s32.totalorder %s37, 0
      %p377 = por %p375, %p376
      %p378 = scmp.ne.s32.totalorder %s370, %s372
      %p379 = scmp.eq.s32.totalorder %s42, 1
      %p380 = por %p378, %p379
      %p381 = scmp.ne.s32.totalorder %s372, %s373
      %p382 = scmp.eq.s32.totalorder %s42, 0
      %p383 = por %p381, %p382
      %p384 = scmp.ne.s32.totalorder %s372, %s373
      %p385 = scmp.eq.s32.totalorder %s43, 1
      %p386 = por %p384, %p385
      %p388 = scmp.ne.s32.totalorder %s373, %s387
      %p389 = scmp.eq.s32.totalorder %s43, 0
      %p390 = por %p388, %p389
      %s392 = sadd.s32 %s391, 1
      %p395 = scmp.eq.s32.totalorder %s37, 1
      %p396 = scmp.ne.s32.totalorder %s391, %s393
      %p397 = scmp.eq.s32.totalorder %s37, 0
      %p398 = por %p396, %p397
      %p399 = scmp.ne.s32.totalorder %s391, %s393
      %p400 = scmp.eq.s32.totalorder %s42, 1
      %p401 = por %p399, %p400
      %p402 = scmp.ne.s32.totalorder %s393, %s394
      %p403 = scmp.eq.s32.totalorder %s42, 0
      %p404 = por %p402, %p403
      %p405 = scmp.ne.s32.totalorder %s393, %s394
      %p406 = scmp.eq.s32.totalorder %s43, 1
      %p407 = por %p405, %p406
      %p409 = scmp.ne.s32.totalorder %s394, %s408
      %p410 = scmp.eq.s32.totalorder %s43, 0
      %p411 = por %p409, %p410
      %s413 = sadd.s32 %s412, 1
      %p416 = scmp.eq.s32.totalorder %s37, 1
      %p417 = scmp.ne.s32.totalorder %s412, %s414
      %p418 = scmp.eq.s32.totalorder %s37, 0
      %p419 = por %p417, %p418
      %p420 = scmp.ne.s32.totalorder %s412, %s414
      %p421 = scmp.eq.s32.totalorder %s42, 1
      %p422 = por %p420, %p421
      %p423 = scmp.ne.s32.totalorder %s414, %s415
      %p424 = scmp.eq.s32.totalorder %s42, 0
      %p425 = por %p423, %p424
      %p426 = scmp.ne.s32.totalorder %s414, %s415
      %p427 = scmp.eq.s32.totalorder %s43, 1
      %p428 = por %p426, %p427
      %p430 = scmp.ne.s32.totalorder %s415, %s429
      %p431 = scmp.eq.s32.totalorder %s43, 0
      %p432 = por %p430, %p431
      %s433 = ssub.s32 %s37, %s44
      %p434 = scmp.eq.s32.totalorder %s433, 0
      %s436 = sadd.s32 %s435, 1
      %s437 = scalar_select %p434, %s435, %s436
      %p440 = pneg %p434
      %p441 = scmp.eq.s32.totalorder %s37, 1
      %p442 = por %p440, %p441
      %p443 = scmp.ne.s32.totalorder %s435, %s438
      %p444 = scmp.eq.s32.totalorder %s37, 0
      %p445 = por %p443, %p444
      %p446 = scmp.ne.s32.totalorder %s435, %s438
      %p447 = scmp.eq.s32.totalorder %s42, 1
      %p448 = por %p446, %p447
      %p449 = scmp.ne.s32.totalorder %s438, %s439
      %p450 = scmp.eq.s32.totalorder %s42, 0
      %p451 = por %p449, %p450
      %p452 = scmp.ne.s32.totalorder %s438, %s439
      %p453 = scmp.eq.s32.totalorder %s43, 1
      %p454 = por %p452, %p453
      %p456 = scmp.ne.s32.totalorder %s439, %s455
      %p457 = scmp.eq.s32.totalorder %s43, 0
      %p458 = por %p456, %p457
      %p459 = scmp.le.s32.totalorder 1, %s37
      %p460 = scmp.lt.s32.totalorder %s37, 3
      %p461 = pnand %p459, %p460
      %p462 = pneg %p461
      // Predicated region
      $region9: #{tpu_custom_call.1} parent=5 // pred_check
        _
      $region10: #{tpu_custom_call.1} parent=5 // pred_check_branch
        %464 = sbr.rel (%p461) target = $region12
      $region11: #{tpu_custom_call.1} parent=5 // pred_region
        %s465 = ssub.s32 %s37, 1
        // Predicated region
        $region13: #{tpu_custom_call.1} parent=11 // pred_check
          %p466 = pneg %p110
        $region14: #{tpu_custom_call.1} parent=11 // pred_check_branch
          %468 = sbr.rel (%p466) target = $region16
        $region15: #{tpu_custom_call.1} parent=11 // pred_region
          %470 = vsyncadd [#allocation7], 0
          %s471 = sshll.u32 %s2, 4
          %s472 = int_to_ptr.hbm [resolvable:$true] %s471
          %s473 = sshll.u32 [#allocation8], 4
          %s474 = int_to_ptr.vmem [resolvable:$true] %s473
          %479 = dma.hbm_to_vmem [thread:$0]  %s472, 512, %s474, [#allocation7], 128, 128, 8
        $region16: #{tpu_custom_call.1} parent=11 // pred_fallthru
          _
        // Predicated region
        $region17: #{tpu_custom_call.1} parent=11 // pred_check
          %p480 = pneg %p131
        $region18: #{tpu_custom_call.1} parent=11 // pred_check_branch
          %482 = sbr.rel (%p480) target = $region20
        $region19: #{tpu_custom_call.1} parent=11 // pred_region
          %484 = vsyncadd [#allocation10], 0
          %s485 = sshll.u32 %s3, 4
          %s486 = int_to_ptr.hbm [resolvable:$true] %s485
          %s487 = sshll.u32 [#allocation9], 4
          %s488 = int_to_ptr.vmem [resolvable:$true] %s487
          %493 = dma.hbm_to_vmem [thread:$0]  %s486, 512, %s488, [#allocation10], 128, 128, 8
        $region20: #{tpu_custom_call.1} parent=11 // pred_fallthru
          _
        // Predicated region
        $region21: #{tpu_custom_call.1} parent=11 // pred_check
          %p494 = pneg %p152
        $region22: #{tpu_custom_call.1} parent=11 // pred_check_branch
          %496 = sbr.rel (%p494) target = $region24
        $region23: #{tpu_custom_call.1} parent=11 // pred_region
          _
        $region24: #{tpu_custom_call.1} parent=11 // pred_fallthru
          _
        // Predicated region
        $region25: #{tpu_custom_call.1} parent=11 // pred_check
          %p497 = pneg %p173
        $region26: #{tpu_custom_call.1} parent=11 // pred_check_branch
          %499 = sbr.rel (%p497) target = $region28
        $region27: #{tpu_custom_call.1} parent=11 // pred_region
          %501 = vsyncadd [#allocation10], 0
          %s503 = sshll.u32 %s5, 4
          %s504 = int_to_ptr.hbm [resolvable:$true] %s503
          %s505 = sshll.u32 [#allocation11], 4
          %s506 = int_to_ptr.vmem [resolvable:$true] %s505
          %508 = dma.hbm_to_vmem [thread:$0]  %s504, 16, %s506, [#allocation10]
        $region28: #{tpu_custom_call.1} parent=11 // pred_fallthru
          _
        // Predicated region
        $region29: #{tpu_custom_call.1} parent=11 // pred_check
          %p509 = pneg %p194
        $region30: #{tpu_custom_call.1} parent=11 // pred_check_branch
          %511 = sbr.rel (%p509) target = $region32
        $region31: #{tpu_custom_call.1} parent=11 // pred_region
          %513 = vsyncadd [#allocation13], 0
          %s514 = sshll.u32 %s6, 4
          %s515 = int_to_ptr.hbm [resolvable:$true] %s514
          %s516 = sshll.u32 [#allocation12], 4
          %s517 = int_to_ptr.vmem [resolvable:$true] %s516
          %522 = dma.hbm_to_vmem [thread:$0]  %s515, 1024, %s517, [#allocation13], 128, 128, 8
        $region32: #{tpu_custom_call.1} parent=11 // pred_fallthru
          _
        // Predicated region
        $region33: #{tpu_custom_call.1} parent=11 // pred_check
          %p523 = pneg %p215
        $region34: #{tpu_custom_call.1} parent=11 // pred_check_branch
          %525 = sbr.rel (%p523) target = $region36
        $region35: #{tpu_custom_call.1} parent=11 // pred_region
          _
        $region36: #{tpu_custom_call.1} parent=11 // pred_fallthru
          _
        // Predicated region
        $region37: #{tpu_custom_call.1} parent=11 // pred_check
          %p526 = pneg %p236
        $region38: #{tpu_custom_call.1} parent=11 // pred_check_branch
          %528 = sbr.rel (%p526) target = $region40
        $region39: #{tpu_custom_call.1} parent=11 // pred_region
          %530 = vsyncadd [#allocation13], 0
          %s531 = sshll.u32 %s8, 4
          %s532 = int_to_ptr.hbm [resolvable:$true] %s531
          %s533 = sshll.u32 [#allocation14], 4
          %s534 = int_to_ptr.vmem [resolvable:$true] %s533
          %539 = dma.hbm_to_vmem [thread:$0]  %s532, 512, %s534, [#allocation13], 128, 128, 8
        $region40: #{tpu_custom_call.1} parent=11 // pred_fallthru
          _
        // Predicated region
        $region41: #{tpu_custom_call.1} parent=11 // pred_check
          %p540 = pneg %p257
        $region42: #{tpu_custom_call.1} parent=11 // pred_check_branch
          %542 = sbr.rel (%p540) target = $region44
        $region43: #{tpu_custom_call.1} parent=11 // pred_region
          _
        $region44: #{tpu_custom_call.1} parent=11 // pred_fallthru
          _
        // Predicated region
        $region45: #{tpu_custom_call.1} parent=11 // pred_check
          %p543 = pneg %p278
        $region46: #{tpu_custom_call.1} parent=11 // pred_check_branch
          %545 = sbr.rel (%p543) target = $region48
        $region47: #{tpu_custom_call.1} parent=11 // pred_region
          _
        $region48: #{tpu_custom_call.1} parent=11 // pred_fallthru
          _
        // Predicated region
        $region49: #{tpu_custom_call.1} parent=11 // pred_check
          %p546 = pneg %p299
        $region50: #{tpu_custom_call.1} parent=11 // pred_check_branch
          %548 = sbr.rel (%p546) target = $region52
        $region51: #{tpu_custom_call.1} parent=11 // pred_region
          _
        $region52: #{tpu_custom_call.1} parent=11 // pred_fallthru
          _
        // Predicated region
        $region53: #{tpu_custom_call.1} parent=11 // pred_check
          %p549 = pneg %p320
        $region54: #{tpu_custom_call.1} parent=11 // pred_check_branch
          %551 = sbr.rel (%p549) target = $region56
        $region55: #{tpu_custom_call.1} parent=11 // pred_region
          %553 = vsyncadd [#allocation16], 0
          %s554 = sshll.u32 %s12, 4
          %s555 = int_to_ptr.hbm [resolvable:$true] %s554
          %s556 = sshll.u32 [#allocation15], 4
          %s557 = int_to_ptr.vmem [resolvable:$true] %s556
          %562 = dma.hbm_to_vmem [thread:$0]  %s555, 1024, %s557, [#allocation16], 128, 128, 8
        $region56: #{tpu_custom_call.1} parent=11 // pred_fallthru
          _
        // Predicated region
        $region57: #{tpu_custom_call.1} parent=11 // pred_check
          %p563 = pneg %p341
        $region58: #{tpu_custom_call.1} parent=11 // pred_check_branch
          %565 = sbr.rel (%p563) target = $region60
        $region59: #{tpu_custom_call.1} parent=11 // pred_region
          _
        $region60: #{tpu_custom_call.1} parent=11 // pred_fallthru
          _
        // Predicated region
        $region61: #{tpu_custom_call.1} parent=11 // pred_check
          %p566 = pneg %p362
        $region62: #{tpu_custom_call.1} parent=11 // pred_check_branch
          %568 = sbr.rel (%p566) target = $region64
        $region63: #{tpu_custom_call.1} parent=11 // pred_region
          %570 = vsyncadd [#allocation16], 0
          %s571 = sshll.u32 %s14, 4
          %s572 = int_to_ptr.hbm [resolvable:$true] %s571
          %s573 = sshll.u32 [#allocation17], 4
          %s574 = int_to_ptr.vmem [resolvable:$true] %s573
          %579 = dma.hbm_to_vmem [thread:$0]  %s572, 1024, %s574, [#allocation16], 128, 128, 8
        $region64: #{tpu_custom_call.1} parent=11 // pred_fallthru
          _
        // Predicated region
        $region65: #{tpu_custom_call.1} parent=11 // pred_check
          %p580 = pneg %p383
        $region66: #{tpu_custom_call.1} parent=11 // pred_check_branch
          %582 = sbr.rel (%p580) target = $region68
        $region67: #{tpu_custom_call.1} parent=11 // pred_region
          _
        $region68: #{tpu_custom_call.1} parent=11 // pred_fallthru
          _
        // Predicated region
        $region69: #{tpu_custom_call.1} parent=11 // pred_check
          %p583 = pneg %p404
        $region70: #{tpu_custom_call.1} parent=11 // pred_check_branch
          %585 = sbr.rel (%p583) target = $region72
        $region71: #{tpu_custom_call.1} parent=11 // pred_region
          %587 = vsyncadd [#allocation19], 0
          %s588 = sshll.u32 %s16, 4
          %s589 = int_to_ptr.hbm [resolvable:$true] %s588
          %s590 = sshll.u32 [#allocation18], 4
          %s591 = int_to_ptr.vmem [resolvable:$true] %s590
          %596 = dma.hbm_to_vmem [thread:$0]  %s589, 1024, %s591, [#allocation19], 128, 128, 8
        $region72: #{tpu_custom_call.1} parent=11 // pred_fallthru
          _
        // Predicated region
        $region73: #{tpu_custom_call.1} parent=11 // pred_check
          %p597 = pneg %p425
        $region74: #{tpu_custom_call.1} parent=11 // pred_check_branch
          %599 = sbr.rel (%p597) target = $region76
        $region75: #{tpu_custom_call.1} parent=11 // pred_region
          _
        $region76: #{tpu_custom_call.1} parent=11 // pred_fallthru
          _
      $region12: #{tpu_custom_call.1} parent=5 // pred_fallthru
        _
      %p600 = scmp.lt.s32.totalorder %s37, 2
      // Predicated region
      $region77: #{tpu_custom_call.1} parent=5 // pred_check
        %p601 = pneg %p600
      $region78: #{tpu_custom_call.1} parent=5 // pred_check_branch
        %603 = sbr.rel (%p601) target = $region80
      $region79: #{tpu_custom_call.1} parent=5 // pred_region
        // Predicated region
        $region81: #{tpu_custom_call.1} parent=79 // pred_check
          %p604 = pneg %p57
        $region82: #{tpu_custom_call.1} parent=79 // pred_check_branch
          %606 = sbr.rel (%p604) target = $region84
        $region83: #{tpu_custom_call.1} parent=79 // pred_region
          %s607 = sand.u32 %s47, 1
          %s608 = scalar_lea.sflag [#allocation4], %s607
          %s609 = sand.u32 %s47, 1
          %s610 = smul.addr %s609, 64
          %s611 = scalar_lea.vmem [#allocation3], %s610
          %s612 = smul.u32 8, %s37
          %614 = vsyncadd %s608, 0
          %s615 = smul.addr %s612, 8
          %s616 = scalar_lea.hbm %s0, %s615
          %s617 = sshll.u32 %s616, 4
          %s618 = int_to_ptr.hbm [resolvable:$true] %s617
          %s619 = sshll.u32 %s611, 4
          %s620 = int_to_ptr.vmem [resolvable:$true] %s619
          %625 = dma.hbm_to_vmem [thread:$0]  %s618, 1024, %s620, %s608, 128, 128, 8
        $region84: #{tpu_custom_call.1} parent=79 // pred_fallthru
          _
        // Predicated region
        $region85: #{tpu_custom_call.1} parent=79 // pred_check
          %p626 = pneg %p83
        $region86: #{tpu_custom_call.1} parent=79 // pred_check_branch
          %628 = sbr.rel (%p626) target = $region88
        $region87: #{tpu_custom_call.1} parent=79 // pred_region
          %s629 = sand.u32 %s37, 1
          %s630 = scalar_lea.sflag [#allocation7], %s629
          %s631 = sand.u32 %s73, 1
          %s632 = smul.addr %s631, 8
          %s633 = scalar_lea.vmem [#allocation6], %s632
          %635 = vsyncadd %s630, 0
          %s636 = smul.addr %s37, 8
          %s637 = scalar_lea.hbm %s1, %s636
          %s639 = sshll.u32 %s637, 4
          %s640 = int_to_ptr.hbm [resolvable:$true] %s639
          %s641 = sshll.u32 %s633, 4
          %s642 = int_to_ptr.vmem [resolvable:$true] %s641
          %644 = dma.hbm_to_vmem [thread:$0]  %s640, 128, %s642, %s630
        $region88: #{tpu_custom_call.1} parent=79 // pred_fallthru
          _
      $region80: #{tpu_custom_call.1} parent=5 // pred_fallthru
        _
      %p645 = scmp.le.s32.totalorder 1, %s37
      %p646 = scmp.lt.s32.totalorder %s37, 3
      %p647 = pnand %p645, %p646
      %p648 = pneg %p647
      // Predicated region
      $region89: #{tpu_custom_call.1} parent=5 // pred_check
        _
      $region90: #{tpu_custom_call.1} parent=5 // pred_check_branch
        %650 = sbr.rel (%p647) target = $region92
      $region91: #{tpu_custom_call.1} parent=5 // pred_region
        %s651 = ssub.s32 %s37, 1
        %s652 = sand.u32 %s50, 1
        %s653 = scalar_lea.sflag [#allocation4], %s652
        %s654 = sand.u32 %s50, 1
        %s655 = smul.addr %s654, 64
        %s656 = scalar_lea.vmem [#allocation3], %s655
        // Predicated region
        $region93: #{tpu_custom_call.1} parent=91 // pred_check
          %p657 = pneg %p63
        $region94: #{tpu_custom_call.1} parent=91 // pred_check_branch
          %659 = sbr.rel (%p657) target = $region96
        $region95: #{tpu_custom_call.1} parent=91 // pred_region
          %661 = dma.done %s653, 1024
        $region96: #{tpu_custom_call.1} parent=91 // pred_fallthru
          _
        %s662 = sand.u32 %s42, 1
        %s663 = scalar_lea.sflag [#allocation7], %s662
        %s664 = sand.u32 %s76, 1
        %s665 = smul.addr %s664, 8
        %s666 = scalar_lea.vmem [#allocation6], %s665
        // Predicated region
        $region97: #{tpu_custom_call.1} parent=91 // pred_check
          %p667 = pneg %p89
        $region98: #{tpu_custom_call.1} parent=91 // pred_check_branch
          %669 = sbr.rel (%p667) target = $region100
        $region99: #{tpu_custom_call.1} parent=91 // pred_region
          %671 = dma.done %s663, 128
        $region100: #{tpu_custom_call.1} parent=91 // pred_fallthru
          _
        // Predicated region
        $region101: #{tpu_custom_call.1} parent=91 // pred_check
          %p672 = pneg %p110
        $region102: #{tpu_custom_call.1} parent=91 // pred_check_branch
          %674 = sbr.rel (%p672) target = $region104
        $region103: #{tpu_custom_call.1} parent=91 // pred_region
          %676 = dma.done [#allocation7], 512
        $region104: #{tpu_custom_call.1} parent=91 // pred_fallthru
          _
        // Predicated region
        $region105: #{tpu_custom_call.1} parent=91 // pred_check
          %p677 = pneg %p131
        $region106: #{tpu_custom_call.1} parent=91 // pred_check_branch
          %679 = sbr.rel (%p677) target = $region108
        $region107: #{tpu_custom_call.1} parent=91 // pred_region
          %681 = dma.done [#allocation10], 512
        $region108: #{tpu_custom_call.1} parent=91 // pred_fallthru
          _
        // Predicated region
        $region109: #{tpu_custom_call.1} parent=91 // pred_check
          %p682 = pneg %p173
        $region110: #{tpu_custom_call.1} parent=91 // pred_check_branch
          %684 = sbr.rel (%p682) target = $region112
        $region111: #{tpu_custom_call.1} parent=91 // pred_region
          %686 = dma.done [#allocation10], 16
        $region112: #{tpu_custom_call.1} parent=91 // pred_fallthru
          _
        // Predicated region
        $region113: #{tpu_custom_call.1} parent=91 // pred_check
          %p687 = pneg %p194
        $region114: #{tpu_custom_call.1} parent=91 // pred_check_branch
          %689 = sbr.rel (%p687) target = $region116
        $region115: #{tpu_custom_call.1} parent=91 // pred_region
          %691 = dma.done [#allocation13], 1024
        $region116: #{tpu_custom_call.1} parent=91 // pred_fallthru
          _
        // Predicated region
        $region117: #{tpu_custom_call.1} parent=91 // pred_check
          %p692 = pneg %p236
        $region118: #{tpu_custom_call.1} parent=91 // pred_check_branch
          %694 = sbr.rel (%p692) target = $region120
        $region119: #{tpu_custom_call.1} parent=91 // pred_region
          %696 = dma.done [#allocation13], 512
        $region120: #{tpu_custom_call.1} parent=91 // pred_fallthru
          _
        // Predicated region
        $region121: #{tpu_custom_call.1} parent=91 // pred_check
          %p697 = pneg %p320
        $region122: #{tpu_custom_call.1} parent=91 // pred_check_branch
          %699 = sbr.rel (%p697) target = $region124
        $region123: #{tpu_custom_call.1} parent=91 // pred_region
          %701 = dma.done [#allocation16], 1024
        $region124: #{tpu_custom_call.1} parent=91 // pred_fallthru
          _
        // Predicated region
        $region125: #{tpu_custom_call.1} parent=91 // pred_check
          %p702 = pneg %p362
        $region126: #{tpu_custom_call.1} parent=91 // pred_check_branch
          %704 = sbr.rel (%p702) target = $region128
        $region127: #{tpu_custom_call.1} parent=91 // pred_region
          %706 = dma.done [#allocation16], 1024
        $region128: #{tpu_custom_call.1} parent=91 // pred_fallthru
          _
        // Predicated region
        $region129: #{tpu_custom_call.1} parent=91 // pred_check
          %p707 = pneg %p404
        $region130: #{tpu_custom_call.1} parent=91 // pred_check_branch
          %709 = sbr.rel (%p707) target = $region132
        $region131: #{tpu_custom_call.1} parent=91 // pred_region
          %711 = dma.done [#allocation19], 1024
        $region132: #{tpu_custom_call.1} parent=91 // pred_fallthru
          _
        %s712 = sand.u32 %s50, 1
        %s713 = scalar_lea.sflag [#allocation4], %s712
        %s714 = sand.u32 %s50, 1
        %s715 = smul.addr %s714, 64
        %s716 = scalar_lea.vmem [#allocation3], %s715
        %p717 = pneg %p63
        %p718 = pneg %p60
        %s719 = sand.u32 %s42, 1
        %s720 = scalar_lea.sflag [#allocation7], %s719
        %s721 = sand.u32 %s76, 1
        %s722 = smul.addr %s721, 8
        %s723 = scalar_lea.vmem [#allocation6], %s722
        %p724 = pneg %p89
        %p725 = pneg %p86
        %p726 = pneg %p110
        %p727 = pneg %p107
        %p728 = pneg %p131
        %p729 = pneg %p128
        %p730 = pneg %p152
        %p731 = pneg %p149
        %p732 = pneg %p173
        %p733 = pneg %p170
        %p734 = pneg %p194
        %p735 = pneg %p191
        %p736 = pneg %p215
        %p737 = pneg %p212
        %p738 = pneg %p236
        %p739 = pneg %p233
        %p740 = pneg %p257
        %p741 = pneg %p254
        %p742 = pneg %p278
        %p743 = pneg %p275
        %p744 = pneg %p299
        %p745 = pneg %p296
        %p746 = pneg %p320
        %p747 = pneg %p317
        %p748 = pneg %p341
        %p749 = pneg %p338
        %p750 = pneg %p362
        %p751 = pneg %p359
        %p752 = pneg %p383
        %p753 = pneg %p380
        %p754 = pneg %p404
        %p755 = pneg %p401
        %p756 = pneg %p425
        %p757 = pneg %p422
        %p758 = pneg %p451
        %p759 = pneg %p448
        %s760 = sand.u32 %s438, 1
        %s761 = scalar_lea.sflag [#allocation5], %s760
        %s762 = sand.u32 %s438, 1
        %s763 = smul.addr %s762, 8
        %s764 = scalar_lea.vmem [#allocation20], %s763
        %s765 = smul.u32 8, %s42
        %v766 = vld [vmem:[%s656] sm:$0xff]
        %v767 = vld [vmem:[%s656 + $0x8] sm:$0xff]
        %v768 = vld [vmem:[%s656 + $0x10] sm:$0xff]
        %v769 = vld [vmem:[%s656 + $0x18] sm:$0xff]
        %v770 = vld [vmem:[%s656 + $0x20] sm:$0xff]
        %v771 = vld [vmem:[%s656 + $0x28] sm:$0xff]
        %v772 = vld [vmem:[%s656 + $0x30] sm:$0xff]
        %v773 = vld [vmem:[%s656 + $0x38] sm:$0xff]
        %v774 = vld [vmem:[%s666] sm:$0xff]
        %v775 = vld [vmem:[#allocation8] sm:$0xff]
        %v776 = vld [vmem:[#allocation8 + $0x8] sm:$0xff]
        %v777 = vld [vmem:[#allocation8 + $0x10] sm:$0xff]
        %v778 = vld [vmem:[#allocation8 + $0x18] sm:$0xff]
        %v779 = vld [vmem:[#allocation9] sm:$0xff]
        %v780 = vld [vmem:[#allocation9 + $0x8] sm:$0xff]
        %v781 = vld [vmem:[#allocation9 + $0x10] sm:$0xff]
        %v782 = vld [vmem:[#allocation9 + $0x18] sm:$0xff]
        %v783 = vld [vmem:[%s4] sm:$0x1]
        %v784 = vld [vmem:[#allocation11] sm:$0x1]
        %v786 = vperm.slane %v783, 0
        %vm788 = vcmask 261120
        %v790 = vsel %vm788, %v766, 0
        %v793 = vsel %vm788, %v767, 0
        %v796 = vsel %vm788, %v768, 0
        %v799 = vsel %vm788, %v769, 0
        %v802 = vsel %vm788, %v770, 0
        %v805 = vsel %vm788, %v771, 0
        %v808 = vsel %vm788, %v772, 0
        %v811 = vsel %vm788, %v773, 0
        %813 = vmatpush.msra.mxu0 0.0
        %814 = vmatpush.msra.mxu0 0.0
        %815 = vmatpush.msra.mxu0 0.0
        %816 = vmatpush.msra.mxu0 0.0
        %817 = vmatpush.msra.mxu0 0.0
        %818 = vmatpush.msra.mxu0 0.0
        %819 = vmatpush.msra.mxu0 0.0
        %820 = vmatpush.msra.mxu0 0.0
        %821 = vmatpush.msra.mxu0 0.0
        %822 = vmatpush.msra.mxu0 0.0
        %823 = vmatpush.msra.mxu0 0.0
        %824 = vmatpush.msra.mxu0 0.0
        %825 = vmatpush.msra.mxu0 %v778
        %826 = vmatpush.msra.mxu0 %v777
        %827 = vmatpush.msra.mxu0 %v776
        %828 = vmatpush.msra.mxu0 %v775
        %829 = vmatmul.f32.gmra.mxu0 %v790
        %v830 = vpop.f32.mrf.mxu0
        %v831 = vadd.f32 %v786, %v830
        %832 = vmatmul.f32.gmra.mxu0 %v793
        %v833 = vpop.f32.mrf.mxu0
        %v834 = vadd.f32 %v786, %v833
        %835 = vmatmul.f32.gmra.mxu0 %v796
        %v836 = vpop.f32.mrf.mxu0
        %v837 = vadd.f32 %v786, %v836
        %838 = vmatmul.f32.gmra.mxu0 %v799
        %v839 = vpop.f32.mrf.mxu0
        %v840 = vadd.f32 %v786, %v839
        %841 = vmatmul.f32.gmra.mxu0 %v802
        %v842 = vpop.f32.mrf.mxu0
        %v843 = vadd.f32 %v786, %v842
        %844 = vmatmul.f32.gmra.mxu0 %v805
        %v845 = vpop.f32.mrf.mxu0
        %v846 = vadd.f32 %v786, %v845
        %847 = vmatmul.f32.gmra.mxu0 %v808
        %v848 = vpop.f32.mrf.mxu0
        %v849 = vadd.f32 %v786, %v848
        %850 = vmatmul.f32.gmra.mxu0 %v811
        %v851 = vpop.f32.mrf.mxu0
        %v852 = vadd.f32 %v786, %v851
        %853 = vdwg.mxu0
        %v855 = vperm.slane %v784, 0
        %v858 = vsel %vm788, 0.0, 0
        %860 = vmatpush.msra.mxu0 0.0
        %861 = vmatpush.msra.mxu0 0.0
        %862 = vmatpush.msra.mxu0 0.0
        %863 = vmatpush.msra.mxu0 0.0
        %864 = vmatpush.msra.mxu0 0.0
        %865 = vmatpush.msra.mxu0 0.0
        %866 = vmatpush.msra.mxu0 0.0
        %867 = vmatpush.msra.mxu0 0.0
        %868 = vmatpush.msra.mxu0 0.0
        %869 = vmatpush.msra.mxu0 0.0
        %870 = vmatpush.msra.mxu0 0.0
        %871 = vmatpush.msra.mxu0 0.0
        %872 = vmatpush.msra.mxu0 %v782
        %873 = vmatpush.msra.mxu0 %v781
        %874 = vmatpush.msra.mxu0 %v780
        %875 = vmatpush.msra.mxu0 %v779
        %876 = vmatmul.f32.gmra.mxu0 %v858
        %v877 = vpop.f32.mrf.mxu0
        %v878 = vadd.f32 %v855, %v877
        %879 = vdwg.mxu0
        %v881 = vrot.slane %v878, 1
        %v882 = vrot.slane %v878, 2
        %v883 = vrot.slane %v878, 3
        %v884 = vrot.slane %v878, 4
        %v885 = vrot.slane %v878, 5
        %v886 = vrot.slane %v878, 6
        %v887 = vrot.slane %v878, 7
        %v896 = vadd.f32 %v831, %v878
        %v897 = vadd.f32 %v834, %v881
        %v898 = vadd.f32 %v837, %v882
        %v899 = vadd.f32 %v840, %v883
        %v900 = vadd.f32 %v843, %v884
        %v901 = vadd.f32 %v846, %v885
        %v902 = vadd.f32 %v849, %v886
        %v903 = vadd.f32 %v852, %v887
        %v904 = vxor.u32 %v896, 2147483648
        %v905 = vxor.u32 %v897, 2147483648
        %v906 = vxor.u32 %v898, 2147483648
        %v907 = vxor.u32 %v899, 2147483648
        %v908 = vxor.u32 %v900, 2147483648
        %v909 = vxor.u32 %v901, 2147483648
        %v910 = vxor.u32 %v902, 2147483648
        %v911 = vxor.u32 %v903, 2147483648
        %v912 = vmul.f32 %v904, 1.442695
        %v913 = vpow.pop %v912
        %v914 = vmul.f32 %v905, 1.442695
        %v915 = vpow.pop %v914
        %v916 = vmul.f32 %v906, 1.442695
        %v917 = vpow.pop %v916
        %v918 = vmul.f32 %v907, 1.442695
        %v919 = vpow.pop %v918
        %v920 = vmul.f32 %v908, 1.442695
        %v921 = vpow.pop %v920
        %v922 = vmul.f32 %v909, 1.442695
        %v923 = vpow.pop %v922
        %v924 = vmul.f32 %v910, 1.442695
        %v925 = vpow.pop %v924
        %v926 = vmul.f32 %v911, 1.442695
        %v927 = vpow.pop %v926
        %v928 = vadd.f32 %v913, 1.0
        %v929 = vadd.f32 %v915, 1.0
        %v930 = vadd.f32 %v917, 1.0
        %v931 = vadd.f32 %v919, 1.0
        %v932 = vadd.f32 %v921, 1.0
        %v933 = vadd.f32 %v923, 1.0
        %v934 = vadd.f32 %v925, 1.0
        %v935 = vadd.f32 %v927, 1.0
        %v936 = vrcp.pop %v928
        %v937 = vmul.f32 %v928, %v936
        %v938 = vsub.f32 1.0, %v937
        %v939 = vmul.f32 %v936, %v938
        %v940 = vadd.f32 %v936, %v939
        %vm941 = vweird.f32 %v928
        %vm942 = vweird.f32 %v936
        %vm943 = vmor %vm941, %vm942
        %v944 = vsel %vm943, %v936, %v940
        %v945 = vand.u32 2147483647, %v928
        %vm946 = vcmp.eq.f32.partialorder %v945, 8.507059e+37
        %v947 = vand.u32 %v928, 2147483648
        %v948 = vor.u32 1.1754944e-38, %v947
        %v949 = vsel %vm946, %v948, %v944
        %v950 = vmul.f32 1.0, %v949
        %v951 = vrcp.pop %v929
        %v952 = vmul.f32 %v929, %v951
        %v953 = vsub.f32 1.0, %v952
        %v954 = vmul.f32 %v951, %v953
        %v955 = vadd.f32 %v951, %v954
        %vm956 = vweird.f32 %v929
        %vm957 = vweird.f32 %v951
        %vm958 = vmor %vm956, %vm957
        %v959 = vsel %vm958, %v951, %v955
        %v960 = vand.u32 2147483647, %v929
        %vm961 = vcmp.eq.f32.partialorder %v960, 8.507059e+37
        %v962 = vand.u32 %v929, 2147483648
        %v963 = vor.u32 1.1754944e-38, %v962
        %v964 = vsel %vm961, %v963, %v959
        %v965 = vmul.f32 1.0, %v964
        %v966 = vrcp.pop %v930
        %v967 = vmul.f32 %v930, %v966
        %v968 = vsub.f32 1.0, %v967
        %v969 = vmul.f32 %v966, %v968
        %v970 = vadd.f32 %v966, %v969
        %vm971 = vweird.f32 %v930
        %vm972 = vweird.f32 %v966
        %vm973 = vmor %vm971, %vm972
        %v974 = vsel %vm973, %v966, %v970
        %v975 = vand.u32 2147483647, %v930
        %vm976 = vcmp.eq.f32.partialorder %v975, 8.507059e+37
        %v977 = vand.u32 %v930, 2147483648
        %v978 = vor.u32 1.1754944e-38, %v977
        %v979 = vsel %vm976, %v978, %v974
        %v980 = vmul.f32 1.0, %v979
        %v981 = vrcp.pop %v931
        %v982 = vmul.f32 %v931, %v981
        %v983 = vsub.f32 1.0, %v982
        %v984 = vmul.f32 %v981, %v983
        %v985 = vadd.f32 %v981, %v984
        %vm986 = vweird.f32 %v931
        %vm987 = vweird.f32 %v981
        %vm988 = vmor %vm986, %vm987
        %v989 = vsel %vm988, %v981, %v985
        %v990 = vand.u32 2147483647, %v931
        %vm991 = vcmp.eq.f32.partialorder %v990, 8.507059e+37
        %v992 = vand.u32 %v931, 2147483648
        %v993 = vor.u32 1.1754944e-38, %v992
        %v994 = vsel %vm991, %v993, %v989
        %v995 = vmul.f32 1.0, %v994
        %v996 = vrcp.pop %v932
        %v997 = vmul.f32 %v932, %v996
        %v998 = vsub.f32 1.0, %v997
        %v999 = vmul.f32 %v996, %v998
        %v1000 = vadd.f32 %v996, %v999
        %vm1001 = vweird.f32 %v932
        %vm1002 = vweird.f32 %v996
        %vm1003 = vmor %vm1001, %vm1002
        %v1004 = vsel %vm1003, %v996, %v1000
        %v1005 = vand.u32 2147483647, %v932
        %vm1006 = vcmp.eq.f32.partialorder %v1005, 8.507059e+37
        %v1007 = vand.u32 %v932, 2147483648
        %v1008 = vor.u32 1.1754944e-38, %v1007
        %v1009 = vsel %vm1006, %v1008, %v1004
        %v1010 = vmul.f32 1.0, %v1009
        %v1011 = vrcp.pop %v933
        %v1012 = vmul.f32 %v933, %v1011
        %v1013 = vsub.f32 1.0, %v1012
        %v1014 = vmul.f32 %v1011, %v1013
        %v1015 = vadd.f32 %v1011, %v1014
        %vm1016 = vweird.f32 %v933
        %vm1017 = vweird.f32 %v1011
        %vm1018 = vmor %vm1016, %vm1017
        %v1019 = vsel %vm1018, %v1011, %v1015
        %v1020 = vand.u32 2147483647, %v933
        %vm1021 = vcmp.eq.f32.partialorder %v1020, 8.507059e+37
        %v1022 = vand.u32 %v933, 2147483648
        %v1023 = vor.u32 1.1754944e-38, %v1022
        %v1024 = vsel %vm1021, %v1023, %v1019
        %v1025 = vmul.f32 1.0, %v1024
        %v1026 = vrcp.pop %v934
        %v1027 = vmul.f32 %v934, %v1026
        %v1028 = vsub.f32 1.0, %v1027
        %v1029 = vmul.f32 %v1026, %v1028
        %v1030 = vadd.f32 %v1026, %v1029
        %vm1031 = vweird.f32 %v934
        %vm1032 = vweird.f32 %v1026
        %vm1033 = vmor %vm1031, %vm1032
        %v1034 = vsel %vm1033, %v1026, %v1030
        %v1035 = vand.u32 2147483647, %v934
        %vm1036 = vcmp.eq.f32.partialorder %v1035, 8.507059e+37
        %v1037 = vand.u32 %v934, 2147483648
        %v1038 = vor.u32 1.1754944e-38, %v1037
        %v1039 = vsel %vm1036, %v1038, %v1034
        %v1040 = vmul.f32 1.0, %v1039
        %v1041 = vrcp.pop %v935
        %v1042 = vmul.f32 %v935, %v1041
        %v1043 = vsub.f32 1.0, %v1042
        %v1044 = vmul.f32 %v1041, %v1043
        %v1045 = vadd.f32 %v1041, %v1044
        %vm1046 = vweird.f32 %v935
        %vm1047 = vweird.f32 %v1041
        %vm1048 = vmor %vm1046, %vm1047
        %v1049 = vsel %vm1048, %v1041, %v1045
        %v1050 = vand.u32 2147483647, %v935
        %vm1051 = vcmp.eq.f32.partialorder %v1050, 8.507059e+37
        %v1052 = vand.u32 %v935, 2147483648
        %v1053 = vor.u32 1.1754944e-38, %v1052
        %v1054 = vsel %vm1051, %v1053, %v1049
        %v1055 = vmul.f32 1.0, %v1054
        %1056 = vrot.lane.b32.xlu0 %v878, 64
        %v1057 = vpop.permute.xlu0 %1056
        %1058 = vrot.lane.b32.xlu0 %v881, 64
        %v1059 = vpop.permute.xlu0 %1058
        %1060 = vrot.lane.b32.xlu0 %v882, 64
        %v1061 = vpop.permute.xlu0 %1060
        %1062 = vrot.lane.b32.xlu0 %v883, 64
        %v1063 = vpop.permute.xlu0 %1062
        %1064 = vrot.lane.b32.xlu0 %v884, 64
        %v1065 = vpop.permute.xlu0 %1064
        %1066 = vrot.lane.b32.xlu0 %v885, 64
        %v1067 = vpop.permute.xlu0 %1066
        %1068 = vrot.lane.b32.xlu0 %v886, 64
        %v1069 = vpop.permute.xlu0 %1068
        %1070 = vrot.lane.b32.xlu0 %v887, 64
        %v1071 = vpop.permute.xlu0 %1070
        %v1080 = vmul.f32 %v950, %v1057
        %v1081 = vmul.f32 %v965, %v1059
        %v1082 = vmul.f32 %v980, %v1061
        %v1083 = vmul.f32 %v995, %v1063
        %v1084 = vmul.f32 %v1010, %v1065
        %v1085 = vmul.f32 %v1025, %v1067
        %v1086 = vmul.f32 %v1040, %v1069
        %v1087 = vmul.f32 %v1055, %v1071
        %1096 = vrot.lane.b32.xlu0 %v1080, 64
        %v1097 = vpop.permute.xlu0 %1096
        %1098 = vrot.lane.b32.xlu0 %v1081, 64
        %v1099 = vpop.permute.xlu0 %1098
        %1100 = vrot.lane.b32.xlu0 %v1082, 64
        %v1101 = vpop.permute.xlu0 %1100
        %1102 = vrot.lane.b32.xlu0 %v1083, 64
        %v1103 = vpop.permute.xlu0 %1102
        %1104 = vrot.lane.b32.xlu0 %v1084, 64
        %v1105 = vpop.permute.xlu0 %1104
        %1106 = vrot.lane.b32.xlu0 %v1085, 64
        %v1107 = vpop.permute.xlu0 %1106
        %1108 = vrot.lane.b32.xlu0 %v1086, 64
        %v1109 = vpop.permute.xlu0 %1108
        %1110 = vrot.lane.b32.xlu0 %v1087, 64
        %v1111 = vpop.permute.xlu0 %1110
        %v1120 = vadd.f32 %v831, %v1097
        %v1121 = vadd.f32 %v834, %v1099
        %v1122 = vadd.f32 %v837, %v1101
        %v1123 = vadd.f32 %v840, %v1103
        %v1124 = vadd.f32 %v843, %v1105
        %v1125 = vadd.f32 %v846, %v1107
        %v1126 = vadd.f32 %v849, %v1109
        %v1127 = vadd.f32 %v852, %v1111
        %v1128 = vtanh.pop %v1120
        %v1129 = vtanh.pop %v1121
        %v1130 = vtanh.pop %v1122
        %v1131 = vtanh.pop %v1123
        %v1132 = vtanh.pop %v1124
        %v1133 = vtanh.pop %v1125
        %v1134 = vtanh.pop %v1126
        %v1135 = vtanh.pop %v1127
        %v1136 = vsub.f32 1.0, %v950
        %v1137 = vsub.f32 1.0, %v965
        %v1138 = vsub.f32 1.0, %v980
        %v1139 = vsub.f32 1.0, %v995
        %v1140 = vsub.f32 1.0, %v1010
        %v1141 = vsub.f32 1.0, %v1025
        %v1142 = vsub.f32 1.0, %v1040
        %v1143 = vsub.f32 1.0, %v1055
        %1152 = vrot.lane.b32.xlu0 %v1128, 96
        %v1153 = vpop.permute.xlu0 %1152
        %1154 = vrot.lane.b32.xlu0 %v1129, 96
        %v1155 = vpop.permute.xlu0 %1154
        %1156 = vrot.lane.b32.xlu0 %v1130, 96
        %v1157 = vpop.permute.xlu0 %1156
        %1158 = vrot.lane.b32.xlu0 %v1131, 96
        %v1159 = vpop.permute.xlu0 %1158
        %1160 = vrot.lane.b32.xlu0 %v1132, 96
        %v1161 = vpop.permute.xlu0 %1160
        %1162 = vrot.lane.b32.xlu0 %v1133, 96
        %v1163 = vpop.permute.xlu0 %1162
        %1164 = vrot.lane.b32.xlu0 %v1134, 96
        %v1165 = vpop.permute.xlu0 %1164
        %1166 = vrot.lane.b32.xlu0 %v1135, 96
        %v1167 = vpop.permute.xlu0 %1166
        %v1176 = vmul.f32 %v1136, %v1153
        %v1177 = vmul.f32 %v1137, %v1155
        %v1178 = vmul.f32 %v1138, %v1157
        %v1179 = vmul.f32 %v1139, %v1159
        %v1180 = vmul.f32 %v1140, %v1161
        %v1181 = vmul.f32 %v1141, %v1163
        %v1182 = vmul.f32 %v1142, %v1165
        %v1183 = vmul.f32 %v1143, %v1167
        %v1184 = vmul.f32 %v950, 0.0
        %v1185 = vmul.f32 %v965, 0.0
        %v1186 = vmul.f32 %v980, 0.0
        %v1187 = vmul.f32 %v995, 0.0
        %v1188 = vmul.f32 %v1010, 0.0
        %v1189 = vmul.f32 %v1025, 0.0
        %v1190 = vmul.f32 %v1040, 0.0
        %v1191 = vmul.f32 %v1055, 0.0
        %v1192 = vadd.f32 %v1176, %v1184
        %v1193 = vadd.f32 %v1177, %v1185
        %v1194 = vadd.f32 %v1178, %v1186
        %v1195 = vadd.f32 %v1179, %v1187
        %v1196 = vadd.f32 %v1180, %v1188
        %v1197 = vadd.f32 %v1181, %v1189
        %v1198 = vadd.f32 %v1182, %v1190
        %v1199 = vadd.f32 %v1183, %v1191
        %1208 = vrot.lane.b32.xlu0 %v1192, 96
        %v1209 = vpop.permute.xlu0 %1208
        %1210 = vrot.lane.b32.xlu0 %v1193, 96
        %v1211 = vpop.permute.xlu0 %1210
        %1212 = vrot.lane.b32.xlu0 %v1194, 96
        %v1213 = vpop.permute.xlu0 %1212
        %1214 = vrot.lane.b32.xlu0 %v1195, 96
        %v1215 = vpop.permute.xlu0 %1214
        %1216 = vrot.lane.b32.xlu0 %v1196, 96
        %v1217 = vpop.permute.xlu0 %1216
        %1218 = vrot.lane.b32.xlu0 %v1197, 96
        %v1219 = vpop.permute.xlu0 %1218
        %1220 = vrot.lane.b32.xlu0 %v1198, 96
        %v1221 = vpop.permute.xlu0 %1220
        %1222 = vrot.lane.b32.xlu0 %v1199, 96
        %v1223 = vpop.permute.xlu0 %1222
        %vm1232 = vcmask 253952
        %1233 = vst.msk [vmem:[#allocation2] sm:$0x1] %vm1232, %v1209
        %1234 = vst.msk [vmem:[#allocation2 + $0x8] sm:$0x1] %vm1232, %v1211
        %1235 = vst.msk [vmem:[#allocation2 + $0x10] sm:$0x1] %vm1232, %v1213
        %1236 = vst.msk [vmem:[#allocation2 + $0x18] sm:$0x1] %vm1232, %v1215
        %1237 = vst.msk [vmem:[#allocation2 + $0x20] sm:$0x1] %vm1232, %v1217
        %1238 = vst.msk [vmem:[#allocation2 + $0x28] sm:$0x1] %vm1232, %v1219
        %1239 = vst.msk [vmem:[#allocation2 + $0x30] sm:$0x1] %vm1232, %v1221
        %1240 = vst.msk [vmem:[#allocation2 + $0x38] sm:$0x1] %vm1232, %v1223
        %v1241 = vrot.slane %v1193, 7
        %vm1242 = vcmask 1041409
        %v1243 = vsel %vm1242, %v1241, %v1192
        %v1244 = vrot.slane %v1194, 6
        %vm1245 = vcmask 1042434
        %v1246 = vsel %vm1245, %v1244, %v1243
        %v1247 = vrot.slane %v1195, 5
        %vm1248 = vcmask 1043459
        %v1249 = vsel %vm1248, %v1247, %v1246
        %v1250 = vrot.slane %v1196, 4
        %vm1251 = vcmask 1044484
        %v1252 = vsel %vm1251, %v1250, %v1249
        %v1253 = vrot.slane %v1197, 3
        %vm1254 = vcmask 1045509
        %v1255 = vsel %vm1254, %v1253, %v1252
        %v1256 = vrot.slane %v1198, 2
        %vm1257 = vcmask 1046534
        %v1258 = vsel %vm1257, %v1256, %v1255
        %v1259 = vrot.slane %v1199, 1
        %vm1260 = vcmask 1047559
        %v1261 = vsel %vm1260, %v1259, %v1258
        %1262 = vrot.lane.b32.xlu0 %v1261, 96
        %v1263 = vpop.permute.xlu0 %1262
        %v1264 = vsel %vm788, %v1263, 0
        %1266 = vmatpush.msra.mxu0 0.0
        %1267 = vmatpush.msra.mxu0 0.0
        %1268 = vmatpush.msra.mxu0 0.0
        %1269 = vmatpush.msra.mxu0 0.0
        %1270 = vmatpush.msra.mxu0 0.0
        %1271 = vmatpush.msra.mxu0 0.0
        %1272 = vmatpush.msra.mxu0 0.0
        %1273 = vmatpush.msra.mxu0 0.0
        %1274 = vmatpush.msra.mxu0 0.0
        %1275 = vmatpush.msra.mxu0 0.0
        %1276 = vmatpush.msra.mxu0 0.0
        %1277 = vmatpush.msra.mxu0 0.0
        %1278 = vmatpush.msra.mxu0 %v782
        %1279 = vmatpush.msra.mxu0 %v781
        %1280 = vmatpush.msra.mxu0 %v780
        %1281 = vmatpush.msra.mxu0 %v779
        %1282 = vmatmul.f32.gmra.mxu0 %v1264
        %v1283 = vpop.f32.mrf.mxu0
        %v1284 = vadd.f32 %v855, %v1283
        %1285 = vdwg.mxu0
        %v1287 = vrot.slane %v1284, 7
        %v1288 = vrot.slane %v1284, 1
        %v1289 = vrot.slane %v1284, 2
        %v1290 = vrot.slane %v1284, 3
        %v1291 = vrot.slane %v1284, 4
        %v1292 = vrot.slane %v1284, 5
        %v1293 = vrot.slane %v1284, 6
        %v1302 = vadd.f32 %v831, %v1287
        %v1303 = vadd.f32 %v834, %v1284
        %v1304 = vadd.f32 %v837, %v1288
        %v1305 = vadd.f32 %v840, %v1289
        %v1306 = vadd.f32 %v843, %v1290
        %v1307 = vadd.f32 %v846, %v1291
        %v1308 = vadd.f32 %v849, %v1292
        %v1309 = vadd.f32 %v852, %v1293
        %v1310 = vxor.u32 %v1302, 2147483648
        %v1311 = vxor.u32 %v1303, 2147483648
        %v1312 = vxor.u32 %v1304, 2147483648
        %v1313 = vxor.u32 %v1305, 2147483648
        %v1314 = vxor.u32 %v1306, 2147483648
        %v1315 = vxor.u32 %v1307, 2147483648
        %v1316 = vxor.u32 %v1308, 2147483648
        %v1317 = vxor.u32 %v1309, 2147483648
        %v1318 = vmul.f32 %v1310, 1.442695
        %v1319 = vpow.pop %v1318
        %v1320 = vmul.f32 %v1311, 1.442695
        %v1321 = vpow.pop %v1320
        %v1322 = vmul.f32 %v1312, 1.442695
        %v1323 = vpow.pop %v1322
        %v1324 = vmul.f32 %v1313, 1.442695
        %v1325 = vpow.pop %v1324
        %v1326 = vmul.f32 %v1314, 1.442695
        %v1327 = vpow.pop %v1326
        %v1328 = vmul.f32 %v1315, 1.442695
        %v1329 = vpow.pop %v1328
        %v1330 = vmul.f32 %v1316, 1.442695
        %v1331 = vpow.pop %v1330
        %v1332 = vmul.f32 %v1317, 1.442695
        %v1333 = vpow.pop %v1332
        %v1334 = vadd.f32 %v1319, 1.0
        %v1335 = vadd.f32 %v1321, 1.0
        %v1336 = vadd.f32 %v1323, 1.0
        %v1337 = vadd.f32 %v1325, 1.0
        %v1338 = vadd.f32 %v1327, 1.0
        %v1339 = vadd.f32 %v1329, 1.0
        %v1340 = vadd.f32 %v1331, 1.0
        %v1341 = vadd.f32 %v1333, 1.0
        %v1342 = vrcp.pop %v1334
        %v1343 = vmul.f32 %v1334, %v1342
        %v1344 = vsub.f32 1.0, %v1343
        %v1345 = vmul.f32 %v1342, %v1344
        %v1346 = vadd.f32 %v1342, %v1345
        %vm1347 = vweird.f32 %v1334
        %vm1348 = vweird.f32 %v1342
        %vm1349 = vmor %vm1347, %vm1348
        %v1350 = vsel %vm1349, %v1342, %v1346
        %v1351 = vand.u32 2147483647, %v1334
        %vm1352 = vcmp.eq.f32.partialorder %v1351, 8.507059e+37
        %v1353 = vand.u32 %v1334, 2147483648
        %v1354 = vor.u32 1.1754944e-38, %v1353
        %v1355 = vsel %vm1352, %v1354, %v1350
        %v1356 = vmul.f32 1.0, %v1355
        %v1357 = vrcp.pop %v1335
        %v1358 = vmul.f32 %v1335, %v1357
        %v1359 = vsub.f32 1.0, %v1358
        %v1360 = vmul.f32 %v1357, %v1359
        %v1361 = vadd.f32 %v1357, %v1360
        %vm1362 = vweird.f32 %v1335
        %vm1363 = vweird.f32 %v1357
        %vm1364 = vmor %vm1362, %vm1363
        %v1365 = vsel %vm1364, %v1357, %v1361
        %v1366 = vand.u32 2147483647, %v1335
        %vm1367 = vcmp.eq.f32.partialorder %v1366, 8.507059e+37
        %v1368 = vand.u32 %v1335, 2147483648
        %v1369 = vor.u32 1.1754944e-38, %v1368
        %v1370 = vsel %vm1367, %v1369, %v1365
        %v1371 = vmul.f32 1.0, %v1370
        %v1372 = vrcp.pop %v1336
        %v1373 = vmul.f32 %v1336, %v1372
        %v1374 = vsub.f32 1.0, %v1373
        %v1375 = vmul.f32 %v1372, %v1374
        %v1376 = vadd.f32 %v1372, %v1375
        %vm1377 = vweird.f32 %v1336
        %vm1378 = vweird.f32 %v1372
        %vm1379 = vmor %vm1377, %vm1378
        %v1380 = vsel %vm1379, %v1372, %v1376
        %v1381 = vand.u32 2147483647, %v1336
        %vm1382 = vcmp.eq.f32.partialorder %v1381, 8.507059e+37
        %v1383 = vand.u32 %v1336, 2147483648
        %v1384 = vor.u32 1.1754944e-38, %v1383
        %v1385 = vsel %vm1382, %v1384, %v1380
        %v1386 = vmul.f32 1.0, %v1385
        %v1387 = vrcp.pop %v1337
        %v1388 = vmul.f32 %v1337, %v1387
        %v1389 = vsub.f32 1.0, %v1388
        %v1390 = vmul.f32 %v1387, %v1389
        %v1391 = vadd.f32 %v1387, %v1390
        %vm1392 = vweird.f32 %v1337
        %vm1393 = vweird.f32 %v1387
        %vm1394 = vmor %vm1392, %vm1393
        %v1395 = vsel %vm1394, %v1387, %v1391
        %v1396 = vand.u32 2147483647, %v1337
        %vm1397 = vcmp.eq.f32.partialorder %v1396, 8.507059e+37
        %v1398 = vand.u32 %v1337, 2147483648
        %v1399 = vor.u32 1.1754944e-38, %v1398
        %v1400 = vsel %vm1397, %v1399, %v1395
        %v1401 = vmul.f32 1.0, %v1400
        %v1402 = vrcp.pop %v1338
        %v1403 = vmul.f32 %v1338, %v1402
        %v1404 = vsub.f32 1.0, %v1403
        %v1405 = vmul.f32 %v1402, %v1404
        %v1406 = vadd.f32 %v1402, %v1405
        %vm1407 = vweird.f32 %v1338
        %vm1408 = vweird.f32 %v1402
        %vm1409 = vmor %vm1407, %vm1408
        %v1410 = vsel %vm1409, %v1402, %v1406
        %v1411 = vand.u32 2147483647, %v1338
        %vm1412 = vcmp.eq.f32.partialorder %v1411, 8.507059e+37
        %v1413 = vand.u32 %v1338, 2147483648
        %v1414 = vor.u32 1.1754944e-38, %v1413
        %v1415 = vsel %vm1412, %v1414, %v1410
        %v1416 = vmul.f32 1.0, %v1415
        %v1417 = vrcp.pop %v1339
        %v1418 = vmul.f32 %v1339, %v1417
        %v1419 = vsub.f32 1.0, %v1418
        %v1420 = vmul.f32 %v1417, %v1419
        %v1421 = vadd.f32 %v1417, %v1420
        %vm1422 = vweird.f32 %v1339
        %vm1423 = vweird.f32 %v1417
        %vm1424 = vmor %vm1422, %vm1423
        %v1425 = vsel %vm1424, %v1417, %v1421
        %v1426 = vand.u32 2147483647, %v1339
        %vm1427 = vcmp.eq.f32.partialorder %v1426, 8.507059e+37
        %v1428 = vand.u32 %v1339, 2147483648
        %v1429 = vor.u32 1.1754944e-38, %v1428
        %v1430 = vsel %vm1427, %v1429, %v1425
        %v1431 = vmul.f32 1.0, %v1430
        %v1432 = vrcp.pop %v1340
        %v1433 = vmul.f32 %v1340, %v1432
        %v1434 = vsub.f32 1.0, %v1433
        %v1435 = vmul.f32 %v1432, %v1434
        %v1436 = vadd.f32 %v1432, %v1435
        %vm1437 = vweird.f32 %v1340
        %vm1438 = vweird.f32 %v1432
        %vm1439 = vmor %vm1437, %vm1438
        %v1440 = vsel %vm1439, %v1432, %v1436
        %v1441 = vand.u32 2147483647, %v1340
        %vm1442 = vcmp.eq.f32.partialorder %v1441, 8.507059e+37
        %v1443 = vand.u32 %v1340, 2147483648
        %v1444 = vor.u32 1.1754944e-38, %v1443
        %v1445 = vsel %vm1442, %v1444, %v1440
        %v1446 = vmul.f32 1.0, %v1445
        %v1447 = vrcp.pop %v1341
        %v1448 = vmul.f32 %v1341, %v1447
        %v1449 = vsub.f32 1.0, %v1448
        %v1450 = vmul.f32 %v1447, %v1449
        %v1451 = vadd.f32 %v1447, %v1450
        %vm1452 = vweird.f32 %v1341
        %vm1453 = vweird.f32 %v1447
        %vm1454 = vmor %vm1452, %vm1453
        %v1455 = vsel %vm1454, %v1447, %v1451
        %v1456 = vand.u32 2147483647, %v1341
        %vm1457 = vcmp.eq.f32.partialorder %v1456, 8.507059e+37
        %v1458 = vand.u32 %v1341, 2147483648
        %v1459 = vor.u32 1.1754944e-38, %v1458
        %v1460 = vsel %vm1457, %v1459, %v1455
        %v1461 = vmul.f32 1.0, %v1460
        %1462 = vrot.lane.b32.xlu0 %v1287, 64
        %v1463 = vpop.permute.xlu0 %1462
        %1464 = vrot.lane.b32.xlu0 %v1284, 64
        %v1465 = vpop.permute.xlu0 %1464
        %1466 = vrot.lane.b32.xlu0 %v1288, 64
        %v1467 = vpop.permute.xlu0 %1466
        %1468 = vrot.lane.b32.xlu0 %v1289, 64
        %v1469 = vpop.permute.xlu0 %1468
        %1470 = vrot.lane.b32.xlu0 %v1290, 64
        %v1471 = vpop.permute.xlu0 %1470
        %1472 = vrot.lane.b32.xlu0 %v1291, 64
        %v1473 = vpop.permute.xlu0 %1472
        %1474 = vrot.lane.b32.xlu0 %v1292, 64
        %v1475 = vpop.permute.xlu0 %1474
        %1476 = vrot.lane.b32.xlu0 %v1293, 64
        %v1477 = vpop.permute.xlu0 %1476
        %v1486 = vmul.f32 %v1356, %v1463
        %v1487 = vmul.f32 %v1371, %v1465
        %v1488 = vmul.f32 %v1386, %v1467
        %v1489 = vmul.f32 %v1401, %v1469
        %v1490 = vmul.f32 %v1416, %v1471
        %v1491 = vmul.f32 %v1431, %v1473
        %v1492 = vmul.f32 %v1446, %v1475
        %v1493 = vmul.f32 %v1461, %v1477
        %1502 = vrot.lane.b32.xlu0 %v1486, 64
        %v1503 = vpop.permute.xlu0 %1502
        %1504 = vrot.lane.b32.xlu0 %v1487, 64
        %v1505 = vpop.permute.xlu0 %1504
        %1506 = vrot.lane.b32.xlu0 %v1488, 64
        %v1507 = vpop.permute.xlu0 %1506
        %1508 = vrot.lane.b32.xlu0 %v1489, 64
        %v1509 = vpop.permute.xlu0 %1508
        %1510 = vrot.lane.b32.xlu0 %v1490, 64
        %v1511 = vpop.permute.xlu0 %1510
        %1512 = vrot.lane.b32.xlu0 %v1491, 64
        %v1513 = vpop.permute.xlu0 %1512
        %1514 = vrot.lane.b32.xlu0 %v1492, 64
        %v1515 = vpop.permute.xlu0 %1514
        %1516 = vrot.lane.b32.xlu0 %v1493, 64
        %v1517 = vpop.permute.xlu0 %1516
        %v1526 = vadd.f32 %v831, %v1503
        %v1527 = vadd.f32 %v834, %v1505
        %v1528 = vadd.f32 %v837, %v1507
        %v1529 = vadd.f32 %v840, %v1509
        %v1530 = vadd.f32 %v843, %v1511
        %v1531 = vadd.f32 %v846, %v1513
        %v1532 = vadd.f32 %v849, %v1515
        %v1533 = vadd.f32 %v852, %v1517
        %v1534 = vtanh.pop %v1526
        %v1535 = vtanh.pop %v1527
        %v1536 = vtanh.pop %v1528
        %v1537 = vtanh.pop %v1529
        %v1538 = vtanh.pop %v1530
        %v1539 = vtanh.pop %v1531
        %v1540 = vtanh.pop %v1532
        %v1541 = vtanh.pop %v1533
        %v1542 = vsub.f32 1.0, %v1356
        %v1543 = vsub.f32 1.0, %v1371
        %v1544 = vsub.f32 1.0, %v1386
        %v1545 = vsub.f32 1.0, %v1401
        %v1546 = vsub.f32 1.0, %v1416
        %v1547 = vsub.f32 1.0, %v1431
        %v1548 = vsub.f32 1.0, %v1446
        %v1549 = vsub.f32 1.0, %v1461
        %1558 = vrot.lane.b32.xlu0 %v1534, 96
        %v1559 = vpop.permute.xlu0 %1558
        %1560 = vrot.lane.b32.xlu0 %v1535, 96
        %v1561 = vpop.permute.xlu0 %1560
        %1562 = vrot.lane.b32.xlu0 %v1536, 96
        %v1563 = vpop.permute.xlu0 %1562
        %1564 = vrot.lane.b32.xlu0 %v1537, 96
        %v1565 = vpop.permute.xlu0 %1564
        %1566 = vrot.lane.b32.xlu0 %v1538, 96
        %v1567 = vpop.permute.xlu0 %1566
        %1568 = vrot.lane.b32.xlu0 %v1539, 96
        %v1569 = vpop.permute.xlu0 %1568
        %1570 = vrot.lane.b32.xlu0 %v1540, 96
        %v1571 = vpop.permute.xlu0 %1570
        %1572 = vrot.lane.b32.xlu0 %v1541, 96
        %v1573 = vpop.permute.xlu0 %1572
        %v1582 = vmul.f32 %v1542, %v1559
        %v1583 = vmul.f32 %v1543, %v1561
        %v1584 = vmul.f32 %v1544, %v1563
        %v1585 = vmul.f32 %v1545, %v1565
        %v1586 = vmul.f32 %v1546, %v1567
        %v1587 = vmul.f32 %v1547, %v1569
        %v1588 = vmul.f32 %v1548, %v1571
        %v1589 = vmul.f32 %v1549, %v1573
        %v1590 = vrot.slane %v1192, 7
        %v1591 = vrot.slane %v1194, 7
        %v1592 = vrot.slane %v1195, 7
        %v1593 = vrot.slane %v1196, 7
        %v1594 = vrot.slane %v1197, 7
        %v1595 = vrot.slane %v1198, 7
        %v1596 = vrot.slane %v1199, 7
        %v1605 = vmul.f32 %v1356, %v1590
        %v1606 = vmul.f32 %v1371, %v1241
        %v1607 = vmul.f32 %v1386, %v1591
        %v1608 = vmul.f32 %v1401, %v1592
        %v1609 = vmul.f32 %v1416, %v1593
        %v1610 = vmul.f32 %v1431, %v1594
        %v1611 = vmul.f32 %v1446, %v1595
        %v1612 = vmul.f32 %v1461, %v1596
        %v1613 = vadd.f32 %v1582, %v1605
        %v1614 = vadd.f32 %v1583, %v1606
        %v1615 = vadd.f32 %v1584, %v1607
        %v1616 = vadd.f32 %v1585, %v1608
        %v1617 = vadd.f32 %v1586, %v1609
        %v1618 = vadd.f32 %v1587, %v1610
        %v1619 = vadd.f32 %v1588, %v1611
        %v1620 = vadd.f32 %v1589, %v1612
        %1629 = vrot.lane.b32.xlu0 %v1613, 96
        %v1630 = vpop.permute.xlu0 %1629
        %1631 = vrot.lane.b32.xlu0 %v1614, 96
        %v1632 = vpop.permute.xlu0 %1631
        %1633 = vrot.lane.b32.xlu0 %v1615, 96
        %v1634 = vpop.permute.xlu0 %1633
        %1635 = vrot.lane.b32.xlu0 %v1616, 96
        %v1636 = vpop.permute.xlu0 %1635
        %1637 = vrot.lane.b32.xlu0 %v1617, 96
        %v1638 = vpop.permute.xlu0 %1637
        %1639 = vrot.lane.b32.xlu0 %v1618, 96
        %v1640 = vpop.permute.xlu0 %1639
        %1641 = vrot.lane.b32.xlu0 %v1619, 96
        %v1642 = vpop.permute.xlu0 %1641
        %1643 = vrot.lane.b32.xlu0 %v1620, 96
        %v1644 = vpop.permute.xlu0 %1643
        %vm1653 = vcmask 254977
        %1654 = vst.msk [vmem:[#allocation2] sm:$0x2] %vm1653, %v1630
        %1655 = vst.msk [vmem:[#allocation2 + $0x8] sm:$0x2] %vm1653, %v1632
        %1656 = vst.msk [vmem:[#allocation2 + $0x10] sm:$0x2] %vm1653, %v1634
        %1657 = vst.msk [vmem:[#allocation2 + $0x18] sm:$0x2] %vm1653, %v1636
        %1658 = vst.msk [vmem:[#allocation2 + $0x20] sm:$0x2] %vm1653, %v1638
        %1659 = vst.msk [vmem:[#allocation2 + $0x28] sm:$0x2] %vm1653, %v1640
        %1660 = vst.msk [vmem:[#allocation2 + $0x30] sm:$0x2] %vm1653, %v1642
        %1661 = vst.msk [vmem:[#allocation2 + $0x38] sm:$0x2] %vm1653, %v1644
        %v1662 = vrot.slane %v1613, 1
        %v1663 = vsel %vm1242, %v1614, %v1662
        %v1664 = vrot.slane %v1615, 7
        %v1665 = vsel %vm1245, %v1664, %v1663
        %v1666 = vrot.slane %v1616, 6
        %v1667 = vsel %vm1248, %v1666, %v1665
        %v1668 = vrot.slane %v1617, 5
        %v1669 = vsel %vm1251, %v1668, %v1667
        %v1670 = vrot.slane %v1618, 4
        %v1671 = vsel %vm1254, %v1670, %v1669
        %v1672 = vrot.slane %v1619, 3
        %v1673 = vsel %vm1257, %v1672, %v1671
        %v1674 = vrot.slane %v1620, 2
        %v1675 = vsel %vm1260, %v1674, %v1673
        %1676 = vrot.lane.b32.xlu0 %v1675, 96
        %v1677 = vpop.permute.xlu0 %1676
        %v1678 = vsel %vm788, %v1677, 0
        %1680 = vmatpush.msra.mxu0 0.0
        %1681 = vmatpush.msra.mxu0 0.0
        %1682 = vmatpush.msra.mxu0 0.0
        %1683 = vmatpush.msra.mxu0 0.0
        %1684 = vmatpush.msra.mxu0 0.0
        %1685 = vmatpush.msra.mxu0 0.0
        %1686 = vmatpush.msra.mxu0 0.0
        %1687 = vmatpush.msra.mxu0 0.0
        %1688 = vmatpush.msra.mxu0 0.0
        %1689 = vmatpush.msra.mxu0 0.0
        %1690 = vmatpush.msra.mxu0 0.0
        %1691 = vmatpush.msra.mxu0 0.0
        %1692 = vmatpush.msra.mxu0 %v782
        %1693 = vmatpush.msra.mxu0 %v781
        %1694 = vmatpush.msra.mxu0 %v780
        %1695 = vmatpush.msra.mxu0 %v779
        %1696 = vmatmul.f32.gmra.mxu0 %v1678
        %v1697 = vpop.f32.mrf.mxu0
        %v1698 = vadd.f32 %v855, %v1697
        %1699 = vdwg.mxu0
        %v1701 = vrot.slane %v1698, 6
        %v1702 = vrot.slane %v1698, 7
        %v1703 = vrot.slane %v1698, 1
        %v1704 = vrot.slane %v1698, 2
        %v1705 = vrot.slane %v1698, 3
        %v1706 = vrot.slane %v1698, 4
        %v1707 = vrot.slane %v1698, 5
        %v1716 = vadd.f32 %v831, %v1701
        %v1717 = vadd.f32 %v834, %v1702
        %v1718 = vadd.f32 %v837, %v1698
        %v1719 = vadd.f32 %v840, %v1703
        %v1720 = vadd.f32 %v843, %v1704
        %v1721 = vadd.f32 %v846, %v1705
        %v1722 = vadd.f32 %v849, %v1706
        %v1723 = vadd.f32 %v852, %v1707
        %v1724 = vxor.u32 %v1716, 2147483648
        %v1725 = vxor.u32 %v1717, 2147483648
        %v1726 = vxor.u32 %v1718, 2147483648
        %v1727 = vxor.u32 %v1719, 2147483648
        %v1728 = vxor.u32 %v1720, 2147483648
        %v1729 = vxor.u32 %v1721, 2147483648
        %v1730 = vxor.u32 %v1722, 2147483648
        %v1731 = vxor.u32 %v1723, 2147483648
        %v1732 = vmul.f32 %v1724, 1.442695
        %v1733 = vpow.pop %v1732
        %v1734 = vmul.f32 %v1725, 1.442695
        %v1735 = vpow.pop %v1734
        %v1736 = vmul.f32 %v1726, 1.442695
        %v1737 = vpow.pop %v1736
        %v1738 = vmul.f32 %v1727, 1.442695
        %v1739 = vpow.pop %v1738
        %v1740 = vmul.f32 %v1728, 1.442695
        %v1741 = vpow.pop %v1740
        %v1742 = vmul.f32 %v1729, 1.442695
        %v1743 = vpow.pop %v1742
        %v1744 = vmul.f32 %v1730, 1.442695
        %v1745 = vpow.pop %v1744
        %v1746 = vmul.f32 %v1731, 1.442695
        %v1747 = vpow.pop %v1746
        %v1748 = vadd.f32 %v1733, 1.0
        %v1749 = vadd.f32 %v1735, 1.0
        %v1750 = vadd.f32 %v1737, 1.0
        %v1751 = vadd.f32 %v1739, 1.0
        %v1752 = vadd.f32 %v1741, 1.0
        %v1753 = vadd.f32 %v1743, 1.0
        %v1754 = vadd.f32 %v1745, 1.0
        %v1755 = vadd.f32 %v1747, 1.0
        %v1756 = vrcp.pop %v1748
        %v1757 = vmul.f32 %v1748, %v1756
        %v1758 = vsub.f32 1.0, %v1757
        %v1759 = vmul.f32 %v1756, %v1758
        %v1760 = vadd.f32 %v1756, %v1759
        %vm1761 = vweird.f32 %v1748
        %vm1762 = vweird.f32 %v1756
        %vm1763 = vmor %vm1761, %vm1762
        %v1764 = vsel %vm1763, %v1756, %v1760
        %v1765 = vand.u32 2147483647, %v1748
        %vm1766 = vcmp.eq.f32.partialorder %v1765, 8.507059e+37
        %v1767 = vand.u32 %v1748, 2147483648
        %v1768 = vor.u32 1.1754944e-38, %v1767
        %v1769 = vsel %vm1766, %v1768, %v1764
        %v1770 = vmul.f32 1.0, %v1769
        %v1771 = vrcp.pop %v1749
        %v1772 = vmul.f32 %v1749, %v1771
        %v1773 = vsub.f32 1.0, %v1772
        %v1774 = vmul.f32 %v1771, %v1773
        %v1775 = vadd.f32 %v1771, %v1774
        %vm1776 = vweird.f32 %v1749
        %vm1777 = vweird.f32 %v1771
        %vm1778 = vmor %vm1776, %vm1777
        %v1779 = vsel %vm1778, %v1771, %v1775
        %v1780 = vand.u32 2147483647, %v1749
        %vm1781 = vcmp.eq.f32.partialorder %v1780, 8.507059e+37
        %v1782 = vand.u32 %v1749, 2147483648
        %v1783 = vor.u32 1.1754944e-38, %v1782
        %v1784 = vsel %vm1781, %v1783, %v1779
        %v1785 = vmul.f32 1.0, %v1784
        %v1786 = vrcp.pop %v1750
        %v1787 = vmul.f32 %v1750, %v1786
        %v1788 = vsub.f32 1.0, %v1787
        %v1789 = vmul.f32 %v1786, %v1788
        %v1790 = vadd.f32 %v1786, %v1789
        %vm1791 = vweird.f32 %v1750
        %vm1792 = vweird.f32 %v1786
        %vm1793 = vmor %vm1791, %vm1792
        %v1794 = vsel %vm1793, %v1786, %v1790
        %v1795 = vand.u32 2147483647, %v1750
        %vm1796 = vcmp.eq.f32.partialorder %v1795, 8.507059e+37
        %v1797 = vand.u32 %v1750, 2147483648
        %v1798 = vor.u32 1.1754944e-38, %v1797
        %v1799 = vsel %vm1796, %v1798, %v1794
        %v1800 = vmul.f32 1.0, %v1799
        %v1801 = vrcp.pop %v1751
        %v1802 = vmul.f32 %v1751, %v1801
        %v1803 = vsub.f32 1.0, %v1802
        %v1804 = vmul.f32 %v1801, %v1803
        %v1805 = vadd.f32 %v1801, %v1804
        %vm1806 = vweird.f32 %v1751
        %vm1807 = vweird.f32 %v1801
        %vm1808 = vmor %vm1806, %vm1807
        %v1809 = vsel %vm1808, %v1801, %v1805
        %v1810 = vand.u32 2147483647, %v1751
        %vm1811 = vcmp.eq.f32.partialorder %v1810, 8.507059e+37
        %v1812 = vand.u32 %v1751, 2147483648
        %v1813 = vor.u32 1.1754944e-38, %v1812
        %v1814 = vsel %vm1811, %v1813, %v1809
        %v1815 = vmul.f32 1.0, %v1814
        %v1816 = vrcp.pop %v1752
        %v1817 = vmul.f32 %v1752, %v1816
        %v1818 = vsub.f32 1.0, %v1817
        %v1819 = vmul.f32 %v1816, %v1818
        %v1820 = vadd.f32 %v1816, %v1819
        %vm1821 = vweird.f32 %v1752
        %vm1822 = vweird.f32 %v1816
        %vm1823 = vmor %vm1821, %vm1822
        %v1824 = vsel %vm1823, %v1816, %v1820
        %v1825 = vand.u32 2147483647, %v1752
        %vm1826 = vcmp.eq.f32.partialorder %v1825, 8.507059e+37
        %v1827 = vand.u32 %v1752, 2147483648
        %v1828 = vor.u32 1.1754944e-38, %v1827
        %v1829 = vsel %vm1826, %v1828, %v1824
        %v1830 = vmul.f32 1.0, %v1829
        %v1831 = vrcp.pop %v1753
        %v1832 = vmul.f32 %v1753, %v1831
        %v1833 = vsub.f32 1.0, %v1832
        %v1834 = vmul.f32 %v1831, %v1833
        %v1835 = vadd.f32 %v1831, %v1834
        %vm1836 = vweird.f32 %v1753
        %vm1837 = vweird.f32 %v1831
        %vm1838 = vmor %vm1836, %vm1837
        %v1839 = vsel %vm1838, %v1831, %v1835
        %v1840 = vand.u32 2147483647, %v1753
        %vm1841 = vcmp.eq.f32.partialorder %v1840, 8.507059e+37
        %v1842 = vand.u32 %v1753, 2147483648
        %v1843 = vor.u32 1.1754944e-38, %v1842
        %v1844 = vsel %vm1841, %v1843, %v1839
        %v1845 = vmul.f32 1.0, %v1844
        %v1846 = vrcp.pop %v1754
        %v1847 = vmul.f32 %v1754, %v1846
        %v1848 = vsub.f32 1.0, %v1847
        %v1849 = vmul.f32 %v1846, %v1848
        %v1850 = vadd.f32 %v1846, %v1849
        %vm1851 = vweird.f32 %v1754
        %vm1852 = vweird.f32 %v1846
        %vm1853 = vmor %vm1851, %vm1852
        %v1854 = vsel %vm1853, %v1846, %v1850
        %v1855 = vand.u32 2147483647, %v1754
        %vm1856 = vcmp.eq.f32.partialorder %v1855, 8.507059e+37
        %v1857 = vand.u32 %v1754, 2147483648
        %v1858 = vor.u32 1.1754944e-38, %v1857
        %v1859 = vsel %vm1856, %v1858, %v1854
        %v1860 = vmul.f32 1.0, %v1859
        %v1861 = vrcp.pop %v1755
        %v1862 = vmul.f32 %v1755, %v1861
        %v1863 = vsub.f32 1.0, %v1862
        %v1864 = vmul.f32 %v1861, %v1863
        %v1865 = vadd.f32 %v1861, %v1864
        %vm1866 = vweird.f32 %v1755
        %vm1867 = vweird.f32 %v1861
        %vm1868 = vmor %vm1866, %vm1867
        %v1869 = vsel %vm1868, %v1861, %v1865
        %v1870 = vand.u32 2147483647, %v1755
        %vm1871 = vcmp.eq.f32.partialorder %v1870, 8.507059e+37
        %v1872 = vand.u32 %v1755, 2147483648
        %v1873 = vor.u32 1.1754944e-38, %v1872
        %v1874 = vsel %vm1871, %v1873, %v1869
        %v1875 = vmul.f32 1.0, %v1874
        %1876 = vrot.lane.b32.xlu0 %v1701, 64
        %v1877 = vpop.permute.xlu0 %1876
        %1878 = vrot.lane.b32.xlu0 %v1702, 64
        %v1879 = vpop.permute.xlu0 %1878
        %1880 = vrot.lane.b32.xlu0 %v1698, 64
        %v1881 = vpop.permute.xlu0 %1880
        %1882 = vrot.lane.b32.xlu0 %v1703, 64
        %v1883 = vpop.permute.xlu0 %1882
        %1884 = vrot.lane.b32.xlu0 %v1704, 64
        %v1885 = vpop.permute.xlu0 %1884
        %1886 = vrot.lane.b32.xlu0 %v1705, 64
        %v1887 = vpop.permute.xlu0 %1886
        %1888 = vrot.lane.b32.xlu0 %v1706, 64
        %v1889 = vpop.permute.xlu0 %1888
        %1890 = vrot.lane.b32.xlu0 %v1707, 64
        %v1891 = vpop.permute.xlu0 %1890
        %v1900 = vmul.f32 %v1770, %v1877
        %v1901 = vmul.f32 %v1785, %v1879
        %v1902 = vmul.f32 %v1800, %v1881
        %v1903 = vmul.f32 %v1815, %v1883
        %v1904 = vmul.f32 %v1830, %v1885
        %v1905 = vmul.f32 %v1845, %v1887
        %v1906 = vmul.f32 %v1860, %v1889
        %v1907 = vmul.f32 %v1875, %v1891
        %1916 = vrot.lane.b32.xlu0 %v1900, 64
        %v1917 = vpop.permute.xlu0 %1916
        %1918 = vrot.lane.b32.xlu0 %v1901, 64
        %v1919 = vpop.permute.xlu0 %1918
        %1920 = vrot.lane.b32.xlu0 %v1902, 64
        %v1921 = vpop.permute.xlu0 %1920
        %1922 = vrot.lane.b32.xlu0 %v1903, 64
        %v1923 = vpop.permute.xlu0 %1922
        %1924 = vrot.lane.b32.xlu0 %v1904, 64
        %v1925 = vpop.permute.xlu0 %1924
        %1926 = vrot.lane.b32.xlu0 %v1905, 64
        %v1927 = vpop.permute.xlu0 %1926
        %1928 = vrot.lane.b32.xlu0 %v1906, 64
        %v1929 = vpop.permute.xlu0 %1928
        %1930 = vrot.lane.b32.xlu0 %v1907, 64
        %v1931 = vpop.permute.xlu0 %1930
        %v1940 = vadd.f32 %v831, %v1917
        %v1941 = vadd.f32 %v834, %v1919
        %v1942 = vadd.f32 %v837, %v1921
        %v1943 = vadd.f32 %v840, %v1923
        %v1944 = vadd.f32 %v843, %v1925
        %v1945 = vadd.f32 %v846, %v1927
        %v1946 = vadd.f32 %v849, %v1929
        %v1947 = vadd.f32 %v852, %v1931
        %v1948 = vtanh.pop %v1940
        %v1949 = vtanh.pop %v1941
        %v1950 = vtanh.pop %v1942
        %v1951 = vtanh.pop %v1943
        %v1952 = vtanh.pop %v1944
        %v1953 = vtanh.pop %v1945
        %v1954 = vtanh.pop %v1946
        %v1955 = vtanh.pop %v1947
        %v1956 = vsub.f32 1.0, %v1770
        %v1957 = vsub.f32 1.0, %v1785
        %v1958 = vsub.f32 1.0, %v1800
        %v1959 = vsub.f32 1.0, %v1815
        %v1960 = vsub.f32 1.0, %v1830
        %v1961 = vsub.f32 1.0, %v1845
        %v1962 = vsub.f32 1.0, %v1860
        %v1963 = vsub.f32 1.0, %v1875
        %1972 = vrot.lane.b32.xlu0 %v1948, 96
        %v1973 = vpop.permute.xlu0 %1972
        %1974 = vrot.lane.b32.xlu0 %v1949, 96
        %v1975 = vpop.permute.xlu0 %1974
        %1976 = vrot.lane.b32.xlu0 %v1950, 96
        %v1977 = vpop.permute.xlu0 %1976
        %1978 = vrot.lane.b32.xlu0 %v1951, 96
        %v1979 = vpop.permute.xlu0 %1978
        %1980 = vrot.lane.b32.xlu0 %v1952, 96
        %v1981 = vpop.permute.xlu0 %1980
        %1982 = vrot.lane.b32.xlu0 %v1953, 96
        %v1983 = vpop.permute.xlu0 %1982
        %1984 = vrot.lane.b32.xlu0 %v1954, 96
        %v1985 = vpop.permute.xlu0 %1984
        %1986 = vrot.lane.b32.xlu0 %v1955, 96
        %v1987 = vpop.permute.xlu0 %1986
        %v1996 = vmul.f32 %v1956, %v1973
        %v1997 = vmul.f32 %v1957, %v1975
        %v1998 = vmul.f32 %v1958, %v1977
        %v1999 = vmul.f32 %v1959, %v1979
        %v2000 = vmul.f32 %v1960, %v1981
        %v2001 = vmul.f32 %v1961, %v1983
        %v2002 = vmul.f32 %v1962, %v1985
        %v2003 = vmul.f32 %v1963, %v1987
        %v2004 = vrot.slane %v1613, 7
        %v2005 = vrot.slane %v1614, 7
        %v2006 = vrot.slane %v1616, 7
        %v2007 = vrot.slane %v1617, 7
        %v2008 = vrot.slane %v1618, 7
        %v2009 = vrot.slane %v1619, 7
        %v2010 = vrot.slane %v1620, 7
        %v2019 = vmul.f32 %v1770, %v2004
        %v2020 = vmul.f32 %v1785, %v2005
        %v2021 = vmul.f32 %v1800, %v1664
        %v2022 = vmul.f32 %v1815, %v2006
        %v2023 = vmul.f32 %v1830, %v2007
        %v2024 = vmul.f32 %v1845, %v2008
        %v2025 = vmul.f32 %v1860, %v2009
        %v2026 = vmul.f32 %v1875, %v2010
        %v2027 = vadd.f32 %v1996, %v2019
        %v2028 = vadd.f32 %v1997, %v2020
        %v2029 = vadd.f32 %v1998, %v2021
        %v2030 = vadd.f32 %v1999, %v2022
        %v2031 = vadd.f32 %v2000, %v2023
        %v2032 = vadd.f32 %v2001, %v2024
        %v2033 = vadd.f32 %v2002, %v2025
        %v2034 = vadd.f32 %v2003, %v2026
        %2043 = vrot.lane.b32.xlu0 %v2027, 96
        %v2044 = vpop.permute.xlu0 %2043
        %2045 = vrot.lane.b32.xlu0 %v2028, 96
        %v2046 = vpop.permute.xlu0 %2045
        %2047 = vrot.lane.b32.xlu0 %v2029, 96
        %v2048 = vpop.permute.xlu0 %2047
        %2049 = vrot.lane.b32.xlu0 %v2030, 96
        %v2050 = vpop.permute.xlu0 %2049
        %2051 = vrot.lane.b32.xlu0 %v2031, 96
        %v2052 = vpop.permute.xlu0 %2051
        %2053 = vrot.lane.b32.xlu0 %v2032, 96
        %v2054 = vpop.permute.xlu0 %2053
        %2055 = vrot.lane.b32.xlu0 %v2033, 96
        %v2056 = vpop.permute.xlu0 %2055
        %2057 = vrot.lane.b32.xlu0 %v2034, 96
        %v2058 = vpop.permute.xlu0 %2057
        %vm2067 = vcmask 256002
        %2068 = vst.msk [vmem:[#allocation2] sm:$0x4] %vm2067, %v2044
        %2069 = vst.msk [vmem:[#allocation2 + $0x8] sm:$0x4] %vm2067, %v2046
        %2070 = vst.msk [vmem:[#allocation2 + $0x10] sm:$0x4] %vm2067, %v2048
        %2071 = vst.msk [vmem:[#allocation2 + $0x18] sm:$0x4] %vm2067, %v2050
        %2072 = vst.msk [vmem:[#allocation2 + $0x20] sm:$0x4] %vm2067, %v2052
        %2073 = vst.msk [vmem:[#allocation2 + $0x28] sm:$0x4] %vm2067, %v2054
        %2074 = vst.msk [vmem:[#allocation2 + $0x30] sm:$0x4] %vm2067, %v2056
        %2075 = vst.msk [vmem:[#allocation2 + $0x38] sm:$0x4] %vm2067, %v2058
        %v2076 = vrot.slane %v2027, 2
        %v2077 = vrot.slane %v2028, 1
        %v2078 = vsel %vm1242, %v2077, %v2076
        %v2079 = vsel %vm1245, %v2029, %v2078
        %v2080 = vrot.slane %v2030, 7
        %v2081 = vsel %vm1248, %v2080, %v2079
        %v2082 = vrot.slane %v2031, 6
        %v2083 = vsel %vm1251, %v2082, %v2081
        %v2084 = vrot.slane %v2032, 5
        %v2085 = vsel %vm1254, %v2084, %v2083
        %v2086 = vrot.slane %v2033, 4
        %v2087 = vsel %vm1257, %v2086, %v2085
        %v2088 = vrot.slane %v2034, 3
        %v2089 = vsel %vm1260, %v2088, %v2087
        %2090 = vrot.lane.b32.xlu0 %v2089, 96
        %v2091 = vpop.permute.xlu0 %2090
        %v2092 = vsel %vm788, %v2091, 0
        %2094 = vmatpush.msra.mxu0 0.0
        %2095 = vmatpush.msra.mxu0 0.0
        %2096 = vmatpush.msra.mxu0 0.0
        %2097 = vmatpush.msra.mxu0 0.0
        %2098 = vmatpush.msra.mxu0 0.0
        %2099 = vmatpush.msra.mxu0 0.0
        %2100 = vmatpush.msra.mxu0 0.0
        %2101 = vmatpush.msra.mxu0 0.0
        %2102 = vmatpush.msra.mxu0 0.0
        %2103 = vmatpush.msra.mxu0 0.0
        %2104 = vmatpush.msra.mxu0 0.0
        %2105 = vmatpush.msra.mxu0 0.0
        %2106 = vmatpush.msra.mxu0 %v782
        %2107 = vmatpush.msra.mxu0 %v781
        %2108 = vmatpush.msra.mxu0 %v780
        %2109 = vmatpush.msra.mxu0 %v779
        %2110 = vmatmul.f32.gmra.mxu0 %v2092
        %v2111 = vpop.f32.mrf.mxu0
        %v2112 = vadd.f32 %v855, %v2111
        %2113 = vdwg.mxu0
        %v2115 = vrot.slane %v2112, 5
        %v2116 = vrot.slane %v2112, 6
        %v2117 = vrot.slane %v2112, 7
        %v2118 = vrot.slane %v2112, 1
        %v2119 = vrot.slane %v2112, 2
        %v2120 = vrot.slane %v2112, 3
        %v2121 = vrot.slane %v2112, 4
        %v2130 = vadd.f32 %v831, %v2115
        %v2131 = vadd.f32 %v834, %v2116
        %v2132 = vadd.f32 %v837, %v2117
        %v2133 = vadd.f32 %v840, %v2112
        %v2134 = vadd.f32 %v843, %v2118
        %v2135 = vadd.f32 %v846, %v2119
        %v2136 = vadd.f32 %v849, %v2120
        %v2137 = vadd.f32 %v852, %v2121
        %v2138 = vxor.u32 %v2130, 2147483648
        %v2139 = vxor.u32 %v2131, 2147483648
        %v2140 = vxor.u32 %v2132, 2147483648
        %v2141 = vxor.u32 %v2133, 2147483648
        %v2142 = vxor.u32 %v2134, 2147483648
        %v2143 = vxor.u32 %v2135, 2147483648
        %v2144 = vxor.u32 %v2136, 2147483648
        %v2145 = vxor.u32 %v2137, 2147483648
        %v2146 = vmul.f32 %v2138, 1.442695
        %v2147 = vpow.pop %v2146
        %v2148 = vmul.f32 %v2139, 1.442695
        %v2149 = vpow.pop %v2148
        %v2150 = vmul.f32 %v2140, 1.442695
        %v2151 = vpow.pop %v2150
        %v2152 = vmul.f32 %v2141, 1.442695
        %v2153 = vpow.pop %v2152
        %v2154 = vmul.f32 %v2142, 1.442695
        %v2155 = vpow.pop %v2154
        %v2156 = vmul.f32 %v2143, 1.442695
        %v2157 = vpow.pop %v2156
        %v2158 = vmul.f32 %v2144, 1.442695
        %v2159 = vpow.pop %v2158
        %v2160 = vmul.f32 %v2145, 1.442695
        %v2161 = vpow.pop %v2160
        %v2162 = vadd.f32 %v2147, 1.0
        %v2163 = vadd.f32 %v2149, 1.0
        %v2164 = vadd.f32 %v2151, 1.0
        %v2165 = vadd.f32 %v2153, 1.0
        %v2166 = vadd.f32 %v2155, 1.0
        %v2167 = vadd.f32 %v2157, 1.0
        %v2168 = vadd.f32 %v2159, 1.0
        %v2169 = vadd.f32 %v2161, 1.0
        %v2170 = vrcp.pop %v2162
        %v2171 = vmul.f32 %v2162, %v2170
        %v2172 = vsub.f32 1.0, %v2171
        %v2173 = vmul.f32 %v2170, %v2172
        %v2174 = vadd.f32 %v2170, %v2173
        %vm2175 = vweird.f32 %v2162
        %vm2176 = vweird.f32 %v2170
        %vm2177 = vmor %vm2175, %vm2176
        %v2178 = vsel %vm2177, %v2170, %v2174
        %v2179 = vand.u32 2147483647, %v2162
        %vm2180 = vcmp.eq.f32.partialorder %v2179, 8.507059e+37
        %v2181 = vand.u32 %v2162, 2147483648
        %v2182 = vor.u32 1.1754944e-38, %v2181
        %v2183 = vsel %vm2180, %v2182, %v2178
        %v2184 = vmul.f32 1.0, %v2183
        %v2185 = vrcp.pop %v2163
        %v2186 = vmul.f32 %v2163, %v2185
        %v2187 = vsub.f32 1.0, %v2186
        %v2188 = vmul.f32 %v2185, %v2187
        %v2189 = vadd.f32 %v2185, %v2188
        %vm2190 = vweird.f32 %v2163
        %vm2191 = vweird.f32 %v2185
        %vm2192 = vmor %vm2190, %vm2191
        %v2193 = vsel %vm2192, %v2185, %v2189
        %v2194 = vand.u32 2147483647, %v2163
        %vm2195 = vcmp.eq.f32.partialorder %v2194, 8.507059e+37
        %v2196 = vand.u32 %v2163, 2147483648
        %v2197 = vor.u32 1.1754944e-38, %v2196
        %v2198 = vsel %vm2195, %v2197, %v2193
        %v2199 = vmul.f32 1.0, %v2198
        %v2200 = vrcp.pop %v2164
        %v2201 = vmul.f32 %v2164, %v2200
        %v2202 = vsub.f32 1.0, %v2201
        %v2203 = vmul.f32 %v2200, %v2202
        %v2204 = vadd.f32 %v2200, %v2203
        %vm2205 = vweird.f32 %v2164
        %vm2206 = vweird.f32 %v2200
        %vm2207 = vmor %vm2205, %vm2206
        %v2208 = vsel %vm2207, %v2200, %v2204
        %v2209 = vand.u32 2147483647, %v2164
        %vm2210 = vcmp.eq.f32.partialorder %v2209, 8.507059e+37
        %v2211 = vand.u32 %v2164, 2147483648
        %v2212 = vor.u32 1.1754944e-38, %v2211
        %v2213 = vsel %vm2210, %v2212, %v2208
        %v2214 = vmul.f32 1.0, %v2213
        %v2215 = vrcp.pop %v2165
        %v2216 = vmul.f32 %v2165, %v2215
        %v2217 = vsub.f32 1.0, %v2216
        %v2218 = vmul.f32 %v2215, %v2217
        %v2219 = vadd.f32 %v2215, %v2218
        %vm2220 = vweird.f32 %v2165
        %vm2221 = vweird.f32 %v2215
        %vm2222 = vmor %vm2220, %vm2221
        %v2223 = vsel %vm2222, %v2215, %v2219
        %v2224 = vand.u32 2147483647, %v2165
        %vm2225 = vcmp.eq.f32.partialorder %v2224, 8.507059e+37
        %v2226 = vand.u32 %v2165, 2147483648
        %v2227 = vor.u32 1.1754944e-38, %v2226
        %v2228 = vsel %vm2225, %v2227, %v2223
        %v2229 = vmul.f32 1.0, %v2228
        %v2230 = vrcp.pop %v2166
        %v2231 = vmul.f32 %v2166, %v2230
        %v2232 = vsub.f32 1.0, %v2231
        %v2233 = vmul.f32 %v2230, %v2232
        %v2234 = vadd.f32 %v2230, %v2233
        %vm2235 = vweird.f32 %v2166
        %vm2236 = vweird.f32 %v2230
        %vm2237 = vmor %vm2235, %vm2236
        %v2238 = vsel %vm2237, %v2230, %v2234
        %v2239 = vand.u32 2147483647, %v2166
        %vm2240 = vcmp.eq.f32.partialorder %v2239, 8.507059e+37
        %v2241 = vand.u32 %v2166, 2147483648
        %v2242 = vor.u32 1.1754944e-38, %v2241
        %v2243 = vsel %vm2240, %v2242, %v2238
        %v2244 = vmul.f32 1.0, %v2243
        %v2245 = vrcp.pop %v2167
        %v2246 = vmul.f32 %v2167, %v2245
        %v2247 = vsub.f32 1.0, %v2246
        %v2248 = vmul.f32 %v2245, %v2247
        %v2249 = vadd.f32 %v2245, %v2248
        %vm2250 = vweird.f32 %v2167
        %vm2251 = vweird.f32 %v2245
        %vm2252 = vmor %vm2250, %vm2251
        %v2253 = vsel %vm2252, %v2245, %v2249
        %v2254 = vand.u32 2147483647, %v2167
        %vm2255 = vcmp.eq.f32.partialorder %v2254, 8.507059e+37
        %v2256 = vand.u32 %v2167, 2147483648
        %v2257 = vor.u32 1.1754944e-38, %v2256
        %v2258 = vsel %vm2255, %v2257, %v2253
        %v2259 = vmul.f32 1.0, %v2258
        %v2260 = vrcp.pop %v2168
        %v2261 = vmul.f32 %v2168, %v2260
        %v2262 = vsub.f32 1.0, %v2261
        %v2263 = vmul.f32 %v2260, %v2262
        %v2264 = vadd.f32 %v2260, %v2263
        %vm2265 = vweird.f32 %v2168
        %vm2266 = vweird.f32 %v2260
        %vm2267 = vmor %vm2265, %vm2266
        %v2268 = vsel %vm2267, %v2260, %v2264
        %v2269 = vand.u32 2147483647, %v2168
        %vm2270 = vcmp.eq.f32.partialorder %v2269, 8.507059e+37
        %v2271 = vand.u32 %v2168, 2147483648
        %v2272 = vor.u32 1.1754944e-38, %v2271
        %v2273 = vsel %vm2270, %v2272, %v2268
        %v2274 = vmul.f32 1.0, %v2273
        %v2275 = vrcp.pop %v2169
        %v2276 = vmul.f32 %v2169, %v2275
        %v2277 = vsub.f32 1.0, %v2276
        %v2278 = vmul.f32 %v2275, %v2277
        %v2279 = vadd.f32 %v2275, %v2278
        %vm2280 = vweird.f32 %v2169
        %vm2281 = vweird.f32 %v2275
        %vm2282 = vmor %vm2280, %vm2281
        %v2283 = vsel %vm2282, %v2275, %v2279
        %v2284 = vand.u32 2147483647, %v2169
        %vm2285 = vcmp.eq.f32.partialorder %v2284, 8.507059e+37
        %v2286 = vand.u32 %v2169, 2147483648
        %v2287 = vor.u32 1.1754944e-38, %v2286
        %v2288 = vsel %vm2285, %v2287, %v2283
        %v2289 = vmul.f32 1.0, %v2288
        %2290 = vrot.lane.b32.xlu0 %v2115, 64
        %v2291 = vpop.permute.xlu0 %2290
        %2292 = vrot.lane.b32.xlu0 %v2116, 64
        %v2293 = vpop.permute.xlu0 %2292
        %2294 = vrot.lane.b32.xlu0 %v2117, 64
        %v2295 = vpop.permute.xlu0 %2294
        %2296 = vrot.lane.b32.xlu0 %v2112, 64
        %v2297 = vpop.permute.xlu0 %2296
        %2298 = vrot.lane.b32.xlu0 %v2118, 64
        %v2299 = vpop.permute.xlu0 %2298
        %2300 = vrot.lane.b32.xlu0 %v2119, 64
        %v2301 = vpop.permute.xlu0 %2300
        %2302 = vrot.lane.b32.xlu0 %v2120, 64
        %v2303 = vpop.permute.xlu0 %2302
        %2304 = vrot.lane.b32.xlu0 %v2121, 64
        %v2305 = vpop.permute.xlu0 %2304
        %v2314 = vmul.f32 %v2184, %v2291
        %v2315 = vmul.f32 %v2199, %v2293
        %v2316 = vmul.f32 %v2214, %v2295
        %v2317 = vmul.f32 %v2229, %v2297
        %v2318 = vmul.f32 %v2244, %v2299
        %v2319 = vmul.f32 %v2259, %v2301
        %v2320 = vmul.f32 %v2274, %v2303
        %v2321 = vmul.f32 %v2289, %v2305
        %2330 = vrot.lane.b32.xlu0 %v2314, 64
        %v2331 = vpop.permute.xlu0 %2330
        %2332 = vrot.lane.b32.xlu0 %v2315, 64
        %v2333 = vpop.permute.xlu0 %2332
        %2334 = vrot.lane.b32.xlu0 %v2316, 64
        %v2335 = vpop.permute.xlu0 %2334
        %2336 = vrot.lane.b32.xlu0 %v2317, 64
        %v2337 = vpop.permute.xlu0 %2336
        %2338 = vrot.lane.b32.xlu0 %v2318, 64
        %v2339 = vpop.permute.xlu0 %2338
        %2340 = vrot.lane.b32.xlu0 %v2319, 64
        %v2341 = vpop.permute.xlu0 %2340
        %2342 = vrot.lane.b32.xlu0 %v2320, 64
        %v2343 = vpop.permute.xlu0 %2342
        %2344 = vrot.lane.b32.xlu0 %v2321, 64
        %v2345 = vpop.permute.xlu0 %2344
        %v2354 = vadd.f32 %v831, %v2331
        %v2355 = vadd.f32 %v834, %v2333
        %v2356 = vadd.f32 %v837, %v2335
        %v2357 = vadd.f32 %v840, %v2337
        %v2358 = vadd.f32 %v843, %v2339
        %v2359 = vadd.f32 %v846, %v2341
        %v2360 = vadd.f32 %v849, %v2343
        %v2361 = vadd.f32 %v852, %v2345
        %v2362 = vtanh.pop %v2354
        %v2363 = vtanh.pop %v2355
        %v2364 = vtanh.pop %v2356
        %v2365 = vtanh.pop %v2357
        %v2366 = vtanh.pop %v2358
        %v2367 = vtanh.pop %v2359
        %v2368 = vtanh.pop %v2360
        %v2369 = vtanh.pop %v2361
        %v2370 = vsub.f32 1.0, %v2184
        %v2371 = vsub.f32 1.0, %v2199
        %v2372 = vsub.f32 1.0, %v2214
        %v2373 = vsub.f32 1.0, %v2229
        %v2374 = vsub.f32 1.0, %v2244
        %v2375 = vsub.f32 1.0, %v2259
        %v2376 = vsub.f32 1.0, %v2274
        %v2377 = vsub.f32 1.0, %v2289
        %2386 = vrot.lane.b32.xlu0 %v2362, 96
        %v2387 = vpop.permute.xlu0 %2386
        %2388 = vrot.lane.b32.xlu0 %v2363, 96
        %v2389 = vpop.permute.xlu0 %2388
        %2390 = vrot.lane.b32.xlu0 %v2364, 96
        %v2391 = vpop.permute.xlu0 %2390
        %2392 = vrot.lane.b32.xlu0 %v2365, 96
        %v2393 = vpop.permute.xlu0 %2392
        %2394 = vrot.lane.b32.xlu0 %v2366, 96
        %v2395 = vpop.permute.xlu0 %2394
        %2396 = vrot.lane.b32.xlu0 %v2367, 96
        %v2397 = vpop.permute.xlu0 %2396
        %2398 = vrot.lane.b32.xlu0 %v2368, 96
        %v2399 = vpop.permute.xlu0 %2398
        %2400 = vrot.lane.b32.xlu0 %v2369, 96
        %v2401 = vpop.permute.xlu0 %2400
        %v2410 = vmul.f32 %v2370, %v2387
        %v2411 = vmul.f32 %v2371, %v2389
        %v2412 = vmul.f32 %v2372, %v2391
        %v2413 = vmul.f32 %v2373, %v2393
        %v2414 = vmul.f32 %v2374, %v2395
        %v2415 = vmul.f32 %v2375, %v2397
        %v2416 = vmul.f32 %v2376, %v2399
        %v2417 = vmul.f32 %v2377, %v2401
        %v2418 = vrot.slane %v2027, 7
        %v2419 = vrot.slane %v2028, 7
        %v2420 = vrot.slane %v2029, 7
        %v2421 = vrot.slane %v2031, 7
        %v2422 = vrot.slane %v2032, 7
        %v2423 = vrot.slane %v2033, 7
        %v2424 = vrot.slane %v2034, 7
        %v2433 = vmul.f32 %v2184, %v2418
        %v2434 = vmul.f32 %v2199, %v2419
        %v2435 = vmul.f32 %v2214, %v2420
        %v2436 = vmul.f32 %v2229, %v2080
        %v2437 = vmul.f32 %v2244, %v2421
        %v2438 = vmul.f32 %v2259, %v2422
        %v2439 = vmul.f32 %v2274, %v2423
        %v2440 = vmul.f32 %v2289, %v2424
        %v2441 = vadd.f32 %v2410, %v2433
        %v2442 = vadd.f32 %v2411, %v2434
        %v2443 = vadd.f32 %v2412, %v2435
        %v2444 = vadd.f32 %v2413, %v2436
        %v2445 = vadd.f32 %v2414, %v2437
        %v2446 = vadd.f32 %v2415, %v2438
        %v2447 = vadd.f32 %v2416, %v2439
        %v2448 = vadd.f32 %v2417, %v2440
        %2457 = vrot.lane.b32.xlu0 %v2441, 96
        %v2458 = vpop.permute.xlu0 %2457
        %2459 = vrot.lane.b32.xlu0 %v2442, 96
        %v2460 = vpop.permute.xlu0 %2459
        %2461 = vrot.lane.b32.xlu0 %v2443, 96
        %v2462 = vpop.permute.xlu0 %2461
        %2463 = vrot.lane.b32.xlu0 %v2444, 96
        %v2464 = vpop.permute.xlu0 %2463
        %2465 = vrot.lane.b32.xlu0 %v2445, 96
        %v2466 = vpop.permute.xlu0 %2465
        %2467 = vrot.lane.b32.xlu0 %v2446, 96
        %v2468 = vpop.permute.xlu0 %2467
        %2469 = vrot.lane.b32.xlu0 %v2447, 96
        %v2470 = vpop.permute.xlu0 %2469
        %2471 = vrot.lane.b32.xlu0 %v2448, 96
        %v2472 = vpop.permute.xlu0 %2471
        %vm2481 = vcmask 257027
        %2482 = vst.msk [vmem:[#allocation2] sm:$0x8] %vm2481, %v2458
        %2483 = vst.msk [vmem:[#allocation2 + $0x8] sm:$0x8] %vm2481, %v2460
        %2484 = vst.msk [vmem:[#allocation2 + $0x10] sm:$0x8] %vm2481, %v2462
        %2485 = vst.msk [vmem:[#allocation2 + $0x18] sm:$0x8] %vm2481, %v2464
        %2486 = vst.msk [vmem:[#allocation2 + $0x20] sm:$0x8] %vm2481, %v2466
        %2487 = vst.msk [vmem:[#allocation2 + $0x28] sm:$0x8] %vm2481, %v2468
        %2488 = vst.msk [vmem:[#allocation2 + $0x30] sm:$0x8] %vm2481, %v2470
        %2489 = vst.msk [vmem:[#allocation2 + $0x38] sm:$0x8] %vm2481, %v2472
        %v2490 = vrot.slane %v2441, 3
        %v2491 = vrot.slane %v2442, 2
        %v2492 = vsel %vm1242, %v2491, %v2490
        %v2493 = vrot.slane %v2443, 1
        %v2494 = vsel %vm1245, %v2493, %v2492
        %v2495 = vsel %vm1248, %v2444, %v2494
        %v2496 = vrot.slane %v2445, 7
        %v2497 = vsel %vm1251, %v2496, %v2495
        %v2498 = vrot.slane %v2446, 6
        %v2499 = vsel %vm1254, %v2498, %v2497
        %v2500 = vrot.slane %v2447, 5
        %v2501 = vsel %vm1257, %v2500, %v2499
        %v2502 = vrot.slane %v2448, 4
        %v2503 = vsel %vm1260, %v2502, %v2501
        %2504 = vrot.lane.b32.xlu0 %v2503, 96
        %v2505 = vpop.permute.xlu0 %2504
        %v2506 = vsel %vm788, %v2505, 0
        %2508 = vmatpush.msra.mxu0 0.0
        %2509 = vmatpush.msra.mxu0 0.0
        %2510 = vmatpush.msra.mxu0 0.0
        %2511 = vmatpush.msra.mxu0 0.0
        %2512 = vmatpush.msra.mxu0 0.0
        %2513 = vmatpush.msra.mxu0 0.0
        %2514 = vmatpush.msra.mxu0 0.0
        %2515 = vmatpush.msra.mxu0 0.0
        %2516 = vmatpush.msra.mxu0 0.0
        %2517 = vmatpush.msra.mxu0 0.0
        %2518 = vmatpush.msra.mxu0 0.0
        %2519 = vmatpush.msra.mxu0 0.0
        %2520 = vmatpush.msra.mxu0 %v782
        %2521 = vmatpush.msra.mxu0 %v781
        %2522 = vmatpush.msra.mxu0 %v780
        %2523 = vmatpush.msra.mxu0 %v779
        %2524 = vmatmul.f32.gmra.mxu0 %v2506
        %v2525 = vpop.f32.mrf.mxu0
        %v2526 = vadd.f32 %v855, %v2525
        %2527 = vdwg.mxu0
        %v2529 = vrot.slane %v2526, 4
        %v2530 = vrot.slane %v2526, 5
        %v2531 = vrot.slane %v2526, 6
        %v2532 = vrot.slane %v2526, 7
        %v2533 = vrot.slane %v2526, 1
        %v2534 = vrot.slane %v2526, 2
        %v2535 = vrot.slane %v2526, 3
        %v2544 = vadd.f32 %v831, %v2529
        %v2545 = vadd.f32 %v834, %v2530
        %v2546 = vadd.f32 %v837, %v2531
        %v2547 = vadd.f32 %v840, %v2532
        %v2548 = vadd.f32 %v843, %v2526
        %v2549 = vadd.f32 %v846, %v2533
        %v2550 = vadd.f32 %v849, %v2534
        %v2551 = vadd.f32 %v852, %v2535
        %v2552 = vxor.u32 %v2544, 2147483648
        %v2553 = vxor.u32 %v2545, 2147483648
        %v2554 = vxor.u32 %v2546, 2147483648
        %v2555 = vxor.u32 %v2547, 2147483648
        %v2556 = vxor.u32 %v2548, 2147483648
        %v2557 = vxor.u32 %v2549, 2147483648
        %v2558 = vxor.u32 %v2550, 2147483648
        %v2559 = vxor.u32 %v2551, 2147483648
        %v2560 = vmul.f32 %v2552, 1.442695
        %v2561 = vpow.pop %v2560
        %v2562 = vmul.f32 %v2553, 1.442695
        %v2563 = vpow.pop %v2562
        %v2564 = vmul.f32 %v2554, 1.442695
        %v2565 = vpow.pop %v2564
        %v2566 = vmul.f32 %v2555, 1.442695
        %v2567 = vpow.pop %v2566
        %v2568 = vmul.f32 %v2556, 1.442695
        %v2569 = vpow.pop %v2568
        %v2570 = vmul.f32 %v2557, 1.442695
        %v2571 = vpow.pop %v2570
        %v2572 = vmul.f32 %v2558, 1.442695
        %v2573 = vpow.pop %v2572
        %v2574 = vmul.f32 %v2559, 1.442695
        %v2575 = vpow.pop %v2574
        %v2576 = vadd.f32 %v2561, 1.0
        %v2577 = vadd.f32 %v2563, 1.0
        %v2578 = vadd.f32 %v2565, 1.0
        %v2579 = vadd.f32 %v2567, 1.0
        %v2580 = vadd.f32 %v2569, 1.0
        %v2581 = vadd.f32 %v2571, 1.0
        %v2582 = vadd.f32 %v2573, 1.0
        %v2583 = vadd.f32 %v2575, 1.0
        %v2584 = vrcp.pop %v2576
        %v2585 = vmul.f32 %v2576, %v2584
        %v2586 = vsub.f32 1.0, %v2585
        %v2587 = vmul.f32 %v2584, %v2586
        %v2588 = vadd.f32 %v2584, %v2587
        %vm2589 = vweird.f32 %v2576
        %vm2590 = vweird.f32 %v2584
        %vm2591 = vmor %vm2589, %vm2590
        %v2592 = vsel %vm2591, %v2584, %v2588
        %v2593 = vand.u32 2147483647, %v2576
        %vm2594 = vcmp.eq.f32.partialorder %v2593, 8.507059e+37
        %v2595 = vand.u32 %v2576, 2147483648
        %v2596 = vor.u32 1.1754944e-38, %v2595
        %v2597 = vsel %vm2594, %v2596, %v2592
        %v2598 = vmul.f32 1.0, %v2597
        %v2599 = vrcp.pop %v2577
        %v2600 = vmul.f32 %v2577, %v2599
        %v2601 = vsub.f32 1.0, %v2600
        %v2602 = vmul.f32 %v2599, %v2601
        %v2603 = vadd.f32 %v2599, %v2602
        %vm2604 = vweird.f32 %v2577
        %vm2605 = vweird.f32 %v2599
        %vm2606 = vmor %vm2604, %vm2605
        %v2607 = vsel %vm2606, %v2599, %v2603
        %v2608 = vand.u32 2147483647, %v2577
        %vm2609 = vcmp.eq.f32.partialorder %v2608, 8.507059e+37
        %v2610 = vand.u32 %v2577, 2147483648
        %v2611 = vor.u32 1.1754944e-38, %v2610
        %v2612 = vsel %vm2609, %v2611, %v2607
        %v2613 = vmul.f32 1.0, %v2612
        %v2614 = vrcp.pop %v2578
        %v2615 = vmul.f32 %v2578, %v2614
        %v2616 = vsub.f32 1.0, %v2615
        %v2617 = vmul.f32 %v2614, %v2616
        %v2618 = vadd.f32 %v2614, %v2617
        %vm2619 = vweird.f32 %v2578
        %vm2620 = vweird.f32 %v2614
        %vm2621 = vmor %vm2619, %vm2620
        %v2622 = vsel %vm2621, %v2614, %v2618
        %v2623 = vand.u32 2147483647, %v2578
        %vm2624 = vcmp.eq.f32.partialorder %v2623, 8.507059e+37
        %v2625 = vand.u32 %v2578, 2147483648
        %v2626 = vor.u32 1.1754944e-38, %v2625
        %v2627 = vsel %vm2624, %v2626, %v2622
        %v2628 = vmul.f32 1.0, %v2627
        %v2629 = vrcp.pop %v2579
        %v2630 = vmul.f32 %v2579, %v2629
        %v2631 = vsub.f32 1.0, %v2630
        %v2632 = vmul.f32 %v2629, %v2631
        %v2633 = vadd.f32 %v2629, %v2632
        %vm2634 = vweird.f32 %v2579
        %vm2635 = vweird.f32 %v2629
        %vm2636 = vmor %vm2634, %vm2635
        %v2637 = vsel %vm2636, %v2629, %v2633
        %v2638 = vand.u32 2147483647, %v2579
        %vm2639 = vcmp.eq.f32.partialorder %v2638, 8.507059e+37
        %v2640 = vand.u32 %v2579, 2147483648
        %v2641 = vor.u32 1.1754944e-38, %v2640
        %v2642 = vsel %vm2639, %v2641, %v2637
        %v2643 = vmul.f32 1.0, %v2642
        %v2644 = vrcp.pop %v2580
        %v2645 = vmul.f32 %v2580, %v2644
        %v2646 = vsub.f32 1.0, %v2645
        %v2647 = vmul.f32 %v2644, %v2646
        %v2648 = vadd.f32 %v2644, %v2647
        %vm2649 = vweird.f32 %v2580
        %vm2650 = vweird.f32 %v2644
        %vm2651 = vmor %vm2649, %vm2650
        %v2652 = vsel %vm2651, %v2644, %v2648
        %v2653 = vand.u32 2147483647, %v2580
        %vm2654 = vcmp.eq.f32.partialorder %v2653, 8.507059e+37
        %v2655 = vand.u32 %v2580, 2147483648
        %v2656 = vor.u32 1.1754944e-38, %v2655
        %v2657 = vsel %vm2654, %v2656, %v2652
        %v2658 = vmul.f32 1.0, %v2657
        %v2659 = vrcp.pop %v2581
        %v2660 = vmul.f32 %v2581, %v2659
        %v2661 = vsub.f32 1.0, %v2660
        %v2662 = vmul.f32 %v2659, %v2661
        %v2663 = vadd.f32 %v2659, %v2662
        %vm2664 = vweird.f32 %v2581
        %vm2665 = vweird.f32 %v2659
        %vm2666 = vmor %vm2664, %vm2665
        %v2667 = vsel %vm2666, %v2659, %v2663
        %v2668 = vand.u32 2147483647, %v2581
        %vm2669 = vcmp.eq.f32.partialorder %v2668, 8.507059e+37
        %v2670 = vand.u32 %v2581, 2147483648
        %v2671 = vor.u32 1.1754944e-38, %v2670
        %v2672 = vsel %vm2669, %v2671, %v2667
        %v2673 = vmul.f32 1.0, %v2672
        %v2674 = vrcp.pop %v2582
        %v2675 = vmul.f32 %v2582, %v2674
        %v2676 = vsub.f32 1.0, %v2675
        %v2677 = vmul.f32 %v2674, %v2676
        %v2678 = vadd.f32 %v2674, %v2677
        %vm2679 = vweird.f32 %v2582
        %vm2680 = vweird.f32 %v2674
        %vm2681 = vmor %vm2679, %vm2680
        %v2682 = vsel %vm2681, %v2674, %v2678
        %v2683 = vand.u32 2147483647, %v2582
        %vm2684 = vcmp.eq.f32.partialorder %v2683, 8.507059e+37
        %v2685 = vand.u32 %v2582, 2147483648
        %v2686 = vor.u32 1.1754944e-38, %v2685
        %v2687 = vsel %vm2684, %v2686, %v2682
        %v2688 = vmul.f32 1.0, %v2687
        %v2689 = vrcp.pop %v2583
        %v2690 = vmul.f32 %v2583, %v2689
        %v2691 = vsub.f32 1.0, %v2690
        %v2692 = vmul.f32 %v2689, %v2691
        %v2693 = vadd.f32 %v2689, %v2692
        %vm2694 = vweird.f32 %v2583
        %vm2695 = vweird.f32 %v2689
        %vm2696 = vmor %vm2694, %vm2695
        %v2697 = vsel %vm2696, %v2689, %v2693
        %v2698 = vand.u32 2147483647, %v2583
        %vm2699 = vcmp.eq.f32.partialorder %v2698, 8.507059e+37
        %v2700 = vand.u32 %v2583, 2147483648
        %v2701 = vor.u32 1.1754944e-38, %v2700
        %v2702 = vsel %vm2699, %v2701, %v2697
        %v2703 = vmul.f32 1.0, %v2702
        %2704 = vrot.lane.b32.xlu0 %v2529, 64
        %v2705 = vpop.permute.xlu0 %2704
        %2706 = vrot.lane.b32.xlu0 %v2530, 64
        %v2707 = vpop.permute.xlu0 %2706
        %2708 = vrot.lane.b32.xlu0 %v2531, 64
        %v2709 = vpop.permute.xlu0 %2708
        %2710 = vrot.lane.b32.xlu0 %v2532, 64
        %v2711 = vpop.permute.xlu0 %2710
        %2712 = vrot.lane.b32.xlu0 %v2526, 64
        %v2713 = vpop.permute.xlu0 %2712
        %2714 = vrot.lane.b32.xlu0 %v2533, 64
        %v2715 = vpop.permute.xlu0 %2714
        %2716 = vrot.lane.b32.xlu0 %v2534, 64
        %v2717 = vpop.permute.xlu0 %2716
        %2718 = vrot.lane.b32.xlu0 %v2535, 64
        %v2719 = vpop.permute.xlu0 %2718
        %v2728 = vmul.f32 %v2598, %v2705
        %v2729 = vmul.f32 %v2613, %v2707
        %v2730 = vmul.f32 %v2628, %v2709
        %v2731 = vmul.f32 %v2643, %v2711
        %v2732 = vmul.f32 %v2658, %v2713
        %v2733 = vmul.f32 %v2673, %v2715
        %v2734 = vmul.f32 %v2688, %v2717
        %v2735 = vmul.f32 %v2703, %v2719
        %2744 = vrot.lane.b32.xlu0 %v2728, 64
        %v2745 = vpop.permute.xlu0 %2744
        %2746 = vrot.lane.b32.xlu0 %v2729, 64
        %v2747 = vpop.permute.xlu0 %2746
        %2748 = vrot.lane.b32.xlu0 %v2730, 64
        %v2749 = vpop.permute.xlu0 %2748
        %2750 = vrot.lane.b32.xlu0 %v2731, 64
        %v2751 = vpop.permute.xlu0 %2750
        %2752 = vrot.lane.b32.xlu0 %v2732, 64
        %v2753 = vpop.permute.xlu0 %2752
        %2754 = vrot.lane.b32.xlu0 %v2733, 64
        %v2755 = vpop.permute.xlu0 %2754
        %2756 = vrot.lane.b32.xlu0 %v2734, 64
        %v2757 = vpop.permute.xlu0 %2756
        %2758 = vrot.lane.b32.xlu0 %v2735, 64
        %v2759 = vpop.permute.xlu0 %2758
        %v2768 = vadd.f32 %v831, %v2745
        %v2769 = vadd.f32 %v834, %v2747
        %v2770 = vadd.f32 %v837, %v2749
        %v2771 = vadd.f32 %v840, %v2751
        %v2772 = vadd.f32 %v843, %v2753
        %v2773 = vadd.f32 %v846, %v2755
        %v2774 = vadd.f32 %v849, %v2757
        %v2775 = vadd.f32 %v852, %v2759
        %v2776 = vtanh.pop %v2768
        %v2777 = vtanh.pop %v2769
        %v2778 = vtanh.pop %v2770
        %v2779 = vtanh.pop %v2771
        %v2780 = vtanh.pop %v2772
        %v2781 = vtanh.pop %v2773
        %v2782 = vtanh.pop %v2774
        %v2783 = vtanh.pop %v2775
        %v2784 = vsub.f32 1.0, %v2598
        %v2785 = vsub.f32 1.0, %v2613
        %v2786 = vsub.f32 1.0, %v2628
        %v2787 = vsub.f32 1.0, %v2643
        %v2788 = vsub.f32 1.0, %v2658
        %v2789 = vsub.f32 1.0, %v2673
        %v2790 = vsub.f32 1.0, %v2688
        %v2791 = vsub.f32 1.0, %v2703
        %2800 = vrot.lane.b32.xlu0 %v2776, 96
        %v2801 = vpop.permute.xlu0 %2800
        %2802 = vrot.lane.b32.xlu0 %v2777, 96
        %v2803 = vpop.permute.xlu0 %2802
        %2804 = vrot.lane.b32.xlu0 %v2778, 96
        %v2805 = vpop.permute.xlu0 %2804
        %2806 = vrot.lane.b32.xlu0 %v2779, 96
        %v2807 = vpop.permute.xlu0 %2806
        %2808 = vrot.lane.b32.xlu0 %v2780, 96
        %v2809 = vpop.permute.xlu0 %2808
        %2810 = vrot.lane.b32.xlu0 %v2781, 96
        %v2811 = vpop.permute.xlu0 %2810
        %2812 = vrot.lane.b32.xlu0 %v2782, 96
        %v2813 = vpop.permute.xlu0 %2812
        %2814 = vrot.lane.b32.xlu0 %v2783, 96
        %v2815 = vpop.permute.xlu0 %2814
        %v2824 = vmul.f32 %v2784, %v2801
        %v2825 = vmul.f32 %v2785, %v2803
        %v2826 = vmul.f32 %v2786, %v2805
        %v2827 = vmul.f32 %v2787, %v2807
        %v2828 = vmul.f32 %v2788, %v2809
        %v2829 = vmul.f32 %v2789, %v2811
        %v2830 = vmul.f32 %v2790, %v2813
        %v2831 = vmul.f32 %v2791, %v2815
        %v2832 = vrot.slane %v2441, 7
        %v2833 = vrot.slane %v2442, 7
        %v2834 = vrot.slane %v2443, 7
        %v2835 = vrot.slane %v2444, 7
        %v2836 = vrot.slane %v2446, 7
        %v2837 = vrot.slane %v2447, 7
        %v2838 = vrot.slane %v2448, 7
        %v2847 = vmul.f32 %v2598, %v2832
        %v2848 = vmul.f32 %v2613, %v2833
        %v2849 = vmul.f32 %v2628, %v2834
        %v2850 = vmul.f32 %v2643, %v2835
        %v2851 = vmul.f32 %v2658, %v2496
        %v2852 = vmul.f32 %v2673, %v2836
        %v2853 = vmul.f32 %v2688, %v2837
        %v2854 = vmul.f32 %v2703, %v2838
        %v2855 = vadd.f32 %v2824, %v2847
        %v2856 = vadd.f32 %v2825, %v2848
        %v2857 = vadd.f32 %v2826, %v2849
        %v2858 = vadd.f32 %v2827, %v2850
        %v2859 = vadd.f32 %v2828, %v2851
        %v2860 = vadd.f32 %v2829, %v2852
        %v2861 = vadd.f32 %v2830, %v2853
        %v2862 = vadd.f32 %v2831, %v2854
        %2871 = vrot.lane.b32.xlu0 %v2855, 96
        %v2872 = vpop.permute.xlu0 %2871
        %2873 = vrot.lane.b32.xlu0 %v2856, 96
        %v2874 = vpop.permute.xlu0 %2873
        %2875 = vrot.lane.b32.xlu0 %v2857, 96
        %v2876 = vpop.permute.xlu0 %2875
        %2877 = vrot.lane.b32.xlu0 %v2858, 96
        %v2878 = vpop.permute.xlu0 %2877
        %2879 = vrot.lane.b32.xlu0 %v2859, 96
        %v2880 = vpop.permute.xlu0 %2879
        %2881 = vrot.lane.b32.xlu0 %v2860, 96
        %v2882 = vpop.permute.xlu0 %2881
        %2883 = vrot.lane.b32.xlu0 %v2861, 96
        %v2884 = vpop.permute.xlu0 %2883
        %2885 = vrot.lane.b32.xlu0 %v2862, 96
        %v2886 = vpop.permute.xlu0 %2885
        %vm2895 = vcmask 258052
        %2896 = vst.msk [vmem:[#allocation2] sm:$0x10] %vm2895, %v2872
        %2897 = vst.msk [vmem:[#allocation2 + $0x8] sm:$0x10] %vm2895, %v2874
        %2898 = vst.msk [vmem:[#allocation2 + $0x10] sm:$0x10] %vm2895, %v2876
        %2899 = vst.msk [vmem:[#allocation2 + $0x18] sm:$0x10] %vm2895, %v2878
        %2900 = vst.msk [vmem:[#allocation2 + $0x20] sm:$0x10] %vm2895, %v2880
        %2901 = vst.msk [vmem:[#allocation2 + $0x28] sm:$0x10] %vm2895, %v2882
        %2902 = vst.msk [vmem:[#allocation2 + $0x30] sm:$0x10] %vm2895, %v2884
        %2903 = vst.msk [vmem:[#allocation2 + $0x38] sm:$0x10] %vm2895, %v2886
        %v2904 = vrot.slane %v2855, 4
        %v2905 = vrot.slane %v2856, 3
        %v2906 = vsel %vm1242, %v2905, %v2904
        %v2907 = vrot.slane %v2857, 2
        %v2908 = vsel %vm1245, %v2907, %v2906
        %v2909 = vrot.slane %v2858, 1
        %v2910 = vsel %vm1248, %v2909, %v2908
        %v2911 = vsel %vm1251, %v2859, %v2910
        %v2912 = vrot.slane %v2860, 7
        %v2913 = vsel %vm1254, %v2912, %v2911
        %v2914 = vrot.slane %v2861, 6
        %v2915 = vsel %vm1257, %v2914, %v2913
        %v2916 = vrot.slane %v2862, 5
        %v2917 = vsel %vm1260, %v2916, %v2915
        %2918 = vrot.lane.b32.xlu0 %v2917, 96
        %v2919 = vpop.permute.xlu0 %2918
        %v2920 = vsel %vm788, %v2919, 0
        %2922 = vmatpush.msra.mxu0 0.0
        %2923 = vmatpush.msra.mxu0 0.0
        %2924 = vmatpush.msra.mxu0 0.0
        %2925 = vmatpush.msra.mxu0 0.0
        %2926 = vmatpush.msra.mxu0 0.0
        %2927 = vmatpush.msra.mxu0 0.0
        %2928 = vmatpush.msra.mxu0 0.0
        %2929 = vmatpush.msra.mxu0 0.0
        %2930 = vmatpush.msra.mxu0 0.0
        %2931 = vmatpush.msra.mxu0 0.0
        %2932 = vmatpush.msra.mxu0 0.0
        %2933 = vmatpush.msra.mxu0 0.0
        %2934 = vmatpush.msra.mxu0 %v782
        %2935 = vmatpush.msra.mxu0 %v781
        %2936 = vmatpush.msra.mxu0 %v780
        %2937 = vmatpush.msra.mxu0 %v779
        %2938 = vmatmul.f32.gmra.mxu0 %v2920
        %v2939 = vpop.f32.mrf.mxu0
        %v2940 = vadd.f32 %v855, %v2939
        %2941 = vdwg.mxu0
        %v2943 = vrot.slane %v2940, 3
        %v2944 = vrot.slane %v2940, 4
        %v2945 = vrot.slane %v2940, 5
        %v2946 = vrot.slane %v2940, 6
        %v2947 = vrot.slane %v2940, 7
        %v2948 = vrot.slane %v2940, 1
        %v2949 = vrot.slane %v2940, 2
        %v2958 = vadd.f32 %v831, %v2943
        %v2959 = vadd.f32 %v834, %v2944
        %v2960 = vadd.f32 %v837, %v2945
        %v2961 = vadd.f32 %v840, %v2946
        %v2962 = vadd.f32 %v843, %v2947
        %v2963 = vadd.f32 %v846, %v2940
        %v2964 = vadd.f32 %v849, %v2948
        %v2965 = vadd.f32 %v852, %v2949
        %v2966 = vxor.u32 %v2958, 2147483648
        %v2967 = vxor.u32 %v2959, 2147483648
        %v2968 = vxor.u32 %v2960, 2147483648
        %v2969 = vxor.u32 %v2961, 2147483648
        %v2970 = vxor.u32 %v2962, 2147483648
        %v2971 = vxor.u32 %v2963, 2147483648
        %v2972 = vxor.u32 %v2964, 2147483648
        %v2973 = vxor.u32 %v2965, 2147483648
        %v2974 = vmul.f32 %v2966, 1.442695
        %v2975 = vpow.pop %v2974
        %v2976 = vmul.f32 %v2967, 1.442695
        %v2977 = vpow.pop %v2976
        %v2978 = vmul.f32 %v2968, 1.442695
        %v2979 = vpow.pop %v2978
        %v2980 = vmul.f32 %v2969, 1.442695
        %v2981 = vpow.pop %v2980
        %v2982 = vmul.f32 %v2970, 1.442695
        %v2983 = vpow.pop %v2982
        %v2984 = vmul.f32 %v2971, 1.442695
        %v2985 = vpow.pop %v2984
        %v2986 = vmul.f32 %v2972, 1.442695
        %v2987 = vpow.pop %v2986
        %v2988 = vmul.f32 %v2973, 1.442695
        %v2989 = vpow.pop %v2988
        %v2990 = vadd.f32 %v2975, 1.0
        %v2991 = vadd.f32 %v2977, 1.0
        %v2992 = vadd.f32 %v2979, 1.0
        %v2993 = vadd.f32 %v2981, 1.0
        %v2994 = vadd.f32 %v2983, 1.0
        %v2995 = vadd.f32 %v2985, 1.0
        %v2996 = vadd.f32 %v2987, 1.0
        %v2997 = vadd.f32 %v2989, 1.0
        %v2998 = vrcp.pop %v2990
        %v2999 = vmul.f32 %v2990, %v2998
        %v3000 = vsub.f32 1.0, %v2999
        %v3001 = vmul.f32 %v2998, %v3000
        %v3002 = vadd.f32 %v2998, %v3001
        %vm3003 = vweird.f32 %v2990
        %vm3004 = vweird.f32 %v2998
        %vm3005 = vmor %vm3003, %vm3004
        %v3006 = vsel %vm3005, %v2998, %v3002
        %v3007 = vand.u32 2147483647, %v2990
        %vm3008 = vcmp.eq.f32.partialorder %v3007, 8.507059e+37
        %v3009 = vand.u32 %v2990, 2147483648
        %v3010 = vor.u32 1.1754944e-38, %v3009
        %v3011 = vsel %vm3008, %v3010, %v3006
        %v3012 = vmul.f32 1.0, %v3011
        %v3013 = vrcp.pop %v2991
        %v3014 = vmul.f32 %v2991, %v3013
        %v3015 = vsub.f32 1.0, %v3014
        %v3016 = vmul.f32 %v3013, %v3015
        %v3017 = vadd.f32 %v3013, %v3016
        %vm3018 = vweird.f32 %v2991
        %vm3019 = vweird.f32 %v3013
        %vm3020 = vmor %vm3018, %vm3019
        %v3021 = vsel %vm3020, %v3013, %v3017
        %v3022 = vand.u32 2147483647, %v2991
        %vm3023 = vcmp.eq.f32.partialorder %v3022, 8.507059e+37
        %v3024 = vand.u32 %v2991, 2147483648
        %v3025 = vor.u32 1.1754944e-38, %v3024
        %v3026 = vsel %vm3023, %v3025, %v3021
        %v3027 = vmul.f32 1.0, %v3026
        %v3028 = vrcp.pop %v2992
        %v3029 = vmul.f32 %v2992, %v3028
        %v3030 = vsub.f32 1.0, %v3029
        %v3031 = vmul.f32 %v3028, %v3030
        %v3032 = vadd.f32 %v3028, %v3031
        %vm3033 = vweird.f32 %v2992
        %vm3034 = vweird.f32 %v3028
        %vm3035 = vmor %vm3033, %vm3034
        %v3036 = vsel %vm3035, %v3028, %v3032
        %v3037 = vand.u32 2147483647, %v2992
        %vm3038 = vcmp.eq.f32.partialorder %v3037, 8.507059e+37
        %v3039 = vand.u32 %v2992, 2147483648
        %v3040 = vor.u32 1.1754944e-38, %v3039
        %v3041 = vsel %vm3038, %v3040, %v3036
        %v3042 = vmul.f32 1.0, %v3041
        %v3043 = vrcp.pop %v2993
        %v3044 = vmul.f32 %v2993, %v3043
        %v3045 = vsub.f32 1.0, %v3044
        %v3046 = vmul.f32 %v3043, %v3045
        %v3047 = vadd.f32 %v3043, %v3046
        %vm3048 = vweird.f32 %v2993
        %vm3049 = vweird.f32 %v3043
        %vm3050 = vmor %vm3048, %vm3049
        %v3051 = vsel %vm3050, %v3043, %v3047
        %v3052 = vand.u32 2147483647, %v2993
        %vm3053 = vcmp.eq.f32.partialorder %v3052, 8.507059e+37
        %v3054 = vand.u32 %v2993, 2147483648
        %v3055 = vor.u32 1.1754944e-38, %v3054
        %v3056 = vsel %vm3053, %v3055, %v3051
        %v3057 = vmul.f32 1.0, %v3056
        %v3058 = vrcp.pop %v2994
        %v3059 = vmul.f32 %v2994, %v3058
        %v3060 = vsub.f32 1.0, %v3059
        %v3061 = vmul.f32 %v3058, %v3060
        %v3062 = vadd.f32 %v3058, %v3061
        %vm3063 = vweird.f32 %v2994
        %vm3064 = vweird.f32 %v3058
        %vm3065 = vmor %vm3063, %vm3064
        %v3066 = vsel %vm3065, %v3058, %v3062
        %v3067 = vand.u32 2147483647, %v2994
        %vm3068 = vcmp.eq.f32.partialorder %v3067, 8.507059e+37
        %v3069 = vand.u32 %v2994, 2147483648
        %v3070 = vor.u32 1.1754944e-38, %v3069
        %v3071 = vsel %vm3068, %v3070, %v3066
        %v3072 = vmul.f32 1.0, %v3071
        %v3073 = vrcp.pop %v2995
        %v3074 = vmul.f32 %v2995, %v3073
        %v3075 = vsub.f32 1.0, %v3074
        %v3076 = vmul.f32 %v3073, %v3075
        %v3077 = vadd.f32 %v3073, %v3076
        %vm3078 = vweird.f32 %v2995
        %vm3079 = vweird.f32 %v3073
        %vm3080 = vmor %vm3078, %vm3079
        %v3081 = vsel %vm3080, %v3073, %v3077
        %v3082 = vand.u32 2147483647, %v2995
        %vm3083 = vcmp.eq.f32.partialorder %v3082, 8.507059e+37
        %v3084 = vand.u32 %v2995, 2147483648
        %v3085 = vor.u32 1.1754944e-38, %v3084
        %v3086 = vsel %vm3083, %v3085, %v3081
        %v3087 = vmul.f32 1.0, %v3086
        %v3088 = vrcp.pop %v2996
        %v3089 = vmul.f32 %v2996, %v3088
        %v3090 = vsub.f32 1.0, %v3089
        %v3091 = vmul.f32 %v3088, %v3090
        %v3092 = vadd.f32 %v3088, %v3091
        %vm3093 = vweird.f32 %v2996
        %vm3094 = vweird.f32 %v3088
        %vm3095 = vmor %vm3093, %vm3094
        %v3096 = vsel %vm3095, %v3088, %v3092
        %v3097 = vand.u32 2147483647, %v2996
        %vm3098 = vcmp.eq.f32.partialorder %v3097, 8.507059e+37
        %v3099 = vand.u32 %v2996, 2147483648
        %v3100 = vor.u32 1.1754944e-38, %v3099
        %v3101 = vsel %vm3098, %v3100, %v3096
        %v3102 = vmul.f32 1.0, %v3101
        %v3103 = vrcp.pop %v2997
        %v3104 = vmul.f32 %v2997, %v3103
        %v3105 = vsub.f32 1.0, %v3104
        %v3106 = vmul.f32 %v3103, %v3105
        %v3107 = vadd.f32 %v3103, %v3106
        %vm3108 = vweird.f32 %v2997
        %vm3109 = vweird.f32 %v3103
        %vm3110 = vmor %vm3108, %vm3109
        %v3111 = vsel %vm3110, %v3103, %v3107
        %v3112 = vand.u32 2147483647, %v2997
        %vm3113 = vcmp.eq.f32.partialorder %v3112, 8.507059e+37
        %v3114 = vand.u32 %v2997, 2147483648
        %v3115 = vor.u32 1.1754944e-38, %v3114
        %v3116 = vsel %vm3113, %v3115, %v3111
        %v3117 = vmul.f32 1.0, %v3116
        %3118 = vrot.lane.b32.xlu0 %v2943, 64
        %v3119 = vpop.permute.xlu0 %3118
        %3120 = vrot.lane.b32.xlu0 %v2944, 64
        %v3121 = vpop.permute.xlu0 %3120
        %3122 = vrot.lane.b32.xlu0 %v2945, 64
        %v3123 = vpop.permute.xlu0 %3122
        %3124 = vrot.lane.b32.xlu0 %v2946, 64
        %v3125 = vpop.permute.xlu0 %3124
        %3126 = vrot.lane.b32.xlu0 %v2947, 64
        %v3127 = vpop.permute.xlu0 %3126
        %3128 = vrot.lane.b32.xlu0 %v2940, 64
        %v3129 = vpop.permute.xlu0 %3128
        %3130 = vrot.lane.b32.xlu0 %v2948, 64
        %v3131 = vpop.permute.xlu0 %3130
        %3132 = vrot.lane.b32.xlu0 %v2949, 64
        %v3133 = vpop.permute.xlu0 %3132
        %v3142 = vmul.f32 %v3012, %v3119
        %v3143 = vmul.f32 %v3027, %v3121
        %v3144 = vmul.f32 %v3042, %v3123
        %v3145 = vmul.f32 %v3057, %v3125
        %v3146 = vmul.f32 %v3072, %v3127
        %v3147 = vmul.f32 %v3087, %v3129
        %v3148 = vmul.f32 %v3102, %v3131
        %v3149 = vmul.f32 %v3117, %v3133
        %3158 = vrot.lane.b32.xlu0 %v3142, 64
        %v3159 = vpop.permute.xlu0 %3158
        %3160 = vrot.lane.b32.xlu0 %v3143, 64
        %v3161 = vpop.permute.xlu0 %3160
        %3162 = vrot.lane.b32.xlu0 %v3144, 64
        %v3163 = vpop.permute.xlu0 %3162
        %3164 = vrot.lane.b32.xlu0 %v3145, 64
        %v3165 = vpop.permute.xlu0 %3164
        %3166 = vrot.lane.b32.xlu0 %v3146, 64
        %v3167 = vpop.permute.xlu0 %3166
        %3168 = vrot.lane.b32.xlu0 %v3147, 64
        %v3169 = vpop.permute.xlu0 %3168
        %3170 = vrot.lane.b32.xlu0 %v3148, 64
        %v3171 = vpop.permute.xlu0 %3170
        %3172 = vrot.lane.b32.xlu0 %v3149, 64
        %v3173 = vpop.permute.xlu0 %3172
        %v3182 = vadd.f32 %v831, %v3159
        %v3183 = vadd.f32 %v834, %v3161
        %v3184 = vadd.f32 %v837, %v3163
        %v3185 = vadd.f32 %v840, %v3165
        %v3186 = vadd.f32 %v843, %v3167
        %v3187 = vadd.f32 %v846, %v3169
        %v3188 = vadd.f32 %v849, %v3171
        %v3189 = vadd.f32 %v852, %v3173
        %v3190 = vtanh.pop %v3182
        %v3191 = vtanh.pop %v3183
        %v3192 = vtanh.pop %v3184
        %v3193 = vtanh.pop %v3185
        %v3194 = vtanh.pop %v3186
        %v3195 = vtanh.pop %v3187
        %v3196 = vtanh.pop %v3188
        %v3197 = vtanh.pop %v3189
        %v3198 = vsub.f32 1.0, %v3012
        %v3199 = vsub.f32 1.0, %v3027
        %v3200 = vsub.f32 1.0, %v3042
        %v3201 = vsub.f32 1.0, %v3057
        %v3202 = vsub.f32 1.0, %v3072
        %v3203 = vsub.f32 1.0, %v3087
        %v3204 = vsub.f32 1.0, %v3102
        %v3205 = vsub.f32 1.0, %v3117
        %3214 = vrot.lane.b32.xlu0 %v3190, 96
        %v3215 = vpop.permute.xlu0 %3214
        %3216 = vrot.lane.b32.xlu0 %v3191, 96
        %v3217 = vpop.permute.xlu0 %3216
        %3218 = vrot.lane.b32.xlu0 %v3192, 96
        %v3219 = vpop.permute.xlu0 %3218
        %3220 = vrot.lane.b32.xlu0 %v3193, 96
        %v3221 = vpop.permute.xlu0 %3220
        %3222 = vrot.lane.b32.xlu0 %v3194, 96
        %v3223 = vpop.permute.xlu0 %3222
        %3224 = vrot.lane.b32.xlu0 %v3195, 96
        %v3225 = vpop.permute.xlu0 %3224
        %3226 = vrot.lane.b32.xlu0 %v3196, 96
        %v3227 = vpop.permute.xlu0 %3226
        %3228 = vrot.lane.b32.xlu0 %v3197, 96
        %v3229 = vpop.permute.xlu0 %3228
        %v3238 = vmul.f32 %v3198, %v3215
        %v3239 = vmul.f32 %v3199, %v3217
        %v3240 = vmul.f32 %v3200, %v3219
        %v3241 = vmul.f32 %v3201, %v3221
        %v3242 = vmul.f32 %v3202, %v3223
        %v3243 = vmul.f32 %v3203, %v3225
        %v3244 = vmul.f32 %v3204, %v3227
        %v3245 = vmul.f32 %v3205, %v3229
        %v3246 = vrot.slane %v2855, 7
        %v3247 = vrot.slane %v2856, 7
        %v3248 = vrot.slane %v2857, 7
        %v3249 = vrot.slane %v2858, 7
        %v3250 = vrot.slane %v2859, 7
        %v3251 = vrot.slane %v2861, 7
        %v3252 = vrot.slane %v2862, 7
        %v3261 = vmul.f32 %v3012, %v3246
        %v3262 = vmul.f32 %v3027, %v3247
        %v3263 = vmul.f32 %v3042, %v3248
        %v3264 = vmul.f32 %v3057, %v3249
        %v3265 = vmul.f32 %v3072, %v3250
        %v3266 = vmul.f32 %v3087, %v2912
        %v3267 = vmul.f32 %v3102, %v3251
        %v3268 = vmul.f32 %v3117, %v3252
        %v3269 = vadd.f32 %v3238, %v3261
        %v3270 = vadd.f32 %v3239, %v3262
        %v3271 = vadd.f32 %v3240, %v3263
        %v3272 = vadd.f32 %v3241, %v3264
        %v3273 = vadd.f32 %v3242, %v3265
        %v3274 = vadd.f32 %v3243, %v3266
        %v3275 = vadd.f32 %v3244, %v3267
        %v3276 = vadd.f32 %v3245, %v3268
        %3285 = vrot.lane.b32.xlu0 %v3269, 96
        %v3286 = vpop.permute.xlu0 %3285
        %3287 = vrot.lane.b32.xlu0 %v3270, 96
        %v3288 = vpop.permute.xlu0 %3287
        %3289 = vrot.lane.b32.xlu0 %v3271, 96
        %v3290 = vpop.permute.xlu0 %3289
        %3291 = vrot.lane.b32.xlu0 %v3272, 96
        %v3292 = vpop.permute.xlu0 %3291
        %3293 = vrot.lane.b32.xlu0 %v3273, 96
        %v3294 = vpop.permute.xlu0 %3293
        %3295 = vrot.lane.b32.xlu0 %v3274, 96
        %v3296 = vpop.permute.xlu0 %3295
        %3297 = vrot.lane.b32.xlu0 %v3275, 96
        %v3298 = vpop.permute.xlu0 %3297
        %3299 = vrot.lane.b32.xlu0 %v3276, 96
        %v3300 = vpop.permute.xlu0 %3299
        %vm3309 = vcmask 259077
        %3310 = vst.msk [vmem:[#allocation2] sm:$0x20] %vm3309, %v3286
        %3311 = vst.msk [vmem:[#allocation2 + $0x8] sm:$0x20] %vm3309, %v3288
        %3312 = vst.msk [vmem:[#allocation2 + $0x10] sm:$0x20] %vm3309, %v3290
        %3313 = vst.msk [vmem:[#allocation2 + $0x18] sm:$0x20] %vm3309, %v3292
        %3314 = vst.msk [vmem:[#allocation2 + $0x20] sm:$0x20] %vm3309, %v3294
        %3315 = vst.msk [vmem:[#allocation2 + $0x28] sm:$0x20] %vm3309, %v3296
        %3316 = vst.msk [vmem:[#allocation2 + $0x30] sm:$0x20] %vm3309, %v3298
        %3317 = vst.msk [vmem:[#allocation2 + $0x38] sm:$0x20] %vm3309, %v3300
        %v3318 = vrot.slane %v3269, 5
        %v3319 = vrot.slane %v3270, 4
        %v3320 = vsel %vm1242, %v3319, %v3318
        %v3321 = vrot.slane %v3271, 3
        %v3322 = vsel %vm1245, %v3321, %v3320
        %v3323 = vrot.slane %v3272, 2
        %v3324 = vsel %vm1248, %v3323, %v3322
        %v3325 = vrot.slane %v3273, 1
        %v3326 = vsel %vm1251, %v3325, %v3324
        %v3327 = vsel %vm1254, %v3274, %v3326
        %v3328 = vrot.slane %v3275, 7
        %v3329 = vsel %vm1257, %v3328, %v3327
        %v3330 = vrot.slane %v3276, 6
        %v3331 = vsel %vm1260, %v3330, %v3329
        %3332 = vrot.lane.b32.xlu0 %v3331, 96
        %v3333 = vpop.permute.xlu0 %3332
        %v3334 = vsel %vm788, %v3333, 0
        %3336 = vmatpush.msra.mxu0 0.0
        %3337 = vmatpush.msra.mxu0 0.0
        %3338 = vmatpush.msra.mxu0 0.0
        %3339 = vmatpush.msra.mxu0 0.0
        %3340 = vmatpush.msra.mxu0 0.0
        %3341 = vmatpush.msra.mxu0 0.0
        %3342 = vmatpush.msra.mxu0 0.0
        %3343 = vmatpush.msra.mxu0 0.0
        %3344 = vmatpush.msra.mxu0 0.0
        %3345 = vmatpush.msra.mxu0 0.0
        %3346 = vmatpush.msra.mxu0 0.0
        %3347 = vmatpush.msra.mxu0 0.0
        %3348 = vmatpush.msra.mxu0 %v782
        %3349 = vmatpush.msra.mxu0 %v781
        %3350 = vmatpush.msra.mxu0 %v780
        %3351 = vmatpush.msra.mxu0 %v779
        %3352 = vmatmul.f32.gmra.mxu0 %v3334
        %v3353 = vpop.f32.mrf.mxu0
        %v3354 = vadd.f32 %v855, %v3353
        %3355 = vdwg.mxu0
        %v3357 = vrot.slane %v3354, 2
        %v3358 = vrot.slane %v3354, 3
        %v3359 = vrot.slane %v3354, 4
        %v3360 = vrot.slane %v3354, 5
        %v3361 = vrot.slane %v3354, 6
        %v3362 = vrot.slane %v3354, 7
        %v3363 = vrot.slane %v3354, 1
        %v3372 = vadd.f32 %v831, %v3357
        %v3373 = vadd.f32 %v834, %v3358
        %v3374 = vadd.f32 %v837, %v3359
        %v3375 = vadd.f32 %v840, %v3360
        %v3376 = vadd.f32 %v843, %v3361
        %v3377 = vadd.f32 %v846, %v3362
        %v3378 = vadd.f32 %v849, %v3354
        %v3379 = vadd.f32 %v852, %v3363
        %v3380 = vxor.u32 %v3372, 2147483648
        %v3381 = vxor.u32 %v3373, 2147483648
        %v3382 = vxor.u32 %v3374, 2147483648
        %v3383 = vxor.u32 %v3375, 2147483648
        %v3384 = vxor.u32 %v3376, 2147483648
        %v3385 = vxor.u32 %v3377, 2147483648
        %v3386 = vxor.u32 %v3378, 2147483648
        %v3387 = vxor.u32 %v3379, 2147483648
        %v3388 = vmul.f32 %v3380, 1.442695
        %v3389 = vpow.pop %v3388
        %v3390 = vmul.f32 %v3381, 1.442695
        %v3391 = vpow.pop %v3390
        %v3392 = vmul.f32 %v3382, 1.442695
        %v3393 = vpow.pop %v3392
        %v3394 = vmul.f32 %v3383, 1.442695
        %v3395 = vpow.pop %v3394
        %v3396 = vmul.f32 %v3384, 1.442695
        %v3397 = vpow.pop %v3396
        %v3398 = vmul.f32 %v3385, 1.442695
        %v3399 = vpow.pop %v3398
        %v3400 = vmul.f32 %v3386, 1.442695
        %v3401 = vpow.pop %v3400
        %v3402 = vmul.f32 %v3387, 1.442695
        %v3403 = vpow.pop %v3402
        %v3404 = vadd.f32 %v3389, 1.0
        %v3405 = vadd.f32 %v3391, 1.0
        %v3406 = vadd.f32 %v3393, 1.0
        %v3407 = vadd.f32 %v3395, 1.0
        %v3408 = vadd.f32 %v3397, 1.0
        %v3409 = vadd.f32 %v3399, 1.0
        %v3410 = vadd.f32 %v3401, 1.0
        %v3411 = vadd.f32 %v3403, 1.0
        %v3412 = vrcp.pop %v3404
        %v3413 = vmul.f32 %v3404, %v3412
        %v3414 = vsub.f32 1.0, %v3413
        %v3415 = vmul.f32 %v3412, %v3414
        %v3416 = vadd.f32 %v3412, %v3415
        %vm3417 = vweird.f32 %v3404
        %vm3418 = vweird.f32 %v3412
        %vm3419 = vmor %vm3417, %vm3418
        %v3420 = vsel %vm3419, %v3412, %v3416
        %v3421 = vand.u32 2147483647, %v3404
        %vm3422 = vcmp.eq.f32.partialorder %v3421, 8.507059e+37
        %v3423 = vand.u32 %v3404, 2147483648
        %v3424 = vor.u32 1.1754944e-38, %v3423
        %v3425 = vsel %vm3422, %v3424, %v3420
        %v3426 = vmul.f32 1.0, %v3425
        %v3427 = vrcp.pop %v3405
        %v3428 = vmul.f32 %v3405, %v3427
        %v3429 = vsub.f32 1.0, %v3428
        %v3430 = vmul.f32 %v3427, %v3429
        %v3431 = vadd.f32 %v3427, %v3430
        %vm3432 = vweird.f32 %v3405
        %vm3433 = vweird.f32 %v3427
        %vm3434 = vmor %vm3432, %vm3433
        %v3435 = vsel %vm3434, %v3427, %v3431
        %v3436 = vand.u32 2147483647, %v3405
        %vm3437 = vcmp.eq.f32.partialorder %v3436, 8.507059e+37
        %v3438 = vand.u32 %v3405, 2147483648
        %v3439 = vor.u32 1.1754944e-38, %v3438
        %v3440 = vsel %vm3437, %v3439, %v3435
        %v3441 = vmul.f32 1.0, %v3440
        %v3442 = vrcp.pop %v3406
        %v3443 = vmul.f32 %v3406, %v3442
        %v3444 = vsub.f32 1.0, %v3443
        %v3445 = vmul.f32 %v3442, %v3444
        %v3446 = vadd.f32 %v3442, %v3445
        %vm3447 = vweird.f32 %v3406
        %vm3448 = vweird.f32 %v3442
        %vm3449 = vmor %vm3447, %vm3448
        %v3450 = vsel %vm3449, %v3442, %v3446
        %v3451 = vand.u32 2147483647, %v3406
        %vm3452 = vcmp.eq.f32.partialorder %v3451, 8.507059e+37
        %v3453 = vand.u32 %v3406, 2147483648
        %v3454 = vor.u32 1.1754944e-38, %v3453
        %v3455 = vsel %vm3452, %v3454, %v3450
        %v3456 = vmul.f32 1.0, %v3455
        %v3457 = vrcp.pop %v3407
        %v3458 = vmul.f32 %v3407, %v3457
        %v3459 = vsub.f32 1.0, %v3458
        %v3460 = vmul.f32 %v3457, %v3459
        %v3461 = vadd.f32 %v3457, %v3460
        %vm3462 = vweird.f32 %v3407
        %vm3463 = vweird.f32 %v3457
        %vm3464 = vmor %vm3462, %vm3463
        %v3465 = vsel %vm3464, %v3457, %v3461
        %v3466 = vand.u32 2147483647, %v3407
        %vm3467 = vcmp.eq.f32.partialorder %v3466, 8.507059e+37
        %v3468 = vand.u32 %v3407, 2147483648
        %v3469 = vor.u32 1.1754944e-38, %v3468
        %v3470 = vsel %vm3467, %v3469, %v3465
        %v3471 = vmul.f32 1.0, %v3470
        %v3472 = vrcp.pop %v3408
        %v3473 = vmul.f32 %v3408, %v3472
        %v3474 = vsub.f32 1.0, %v3473
        %v3475 = vmul.f32 %v3472, %v3474
        %v3476 = vadd.f32 %v3472, %v3475
        %vm3477 = vweird.f32 %v3408
        %vm3478 = vweird.f32 %v3472
        %vm3479 = vmor %vm3477, %vm3478
        %v3480 = vsel %vm3479, %v3472, %v3476
        %v3481 = vand.u32 2147483647, %v3408
        %vm3482 = vcmp.eq.f32.partialorder %v3481, 8.507059e+37
        %v3483 = vand.u32 %v3408, 2147483648
        %v3484 = vor.u32 1.1754944e-38, %v3483
        %v3485 = vsel %vm3482, %v3484, %v3480
        %v3486 = vmul.f32 1.0, %v3485
        %v3487 = vrcp.pop %v3409
        %v3488 = vmul.f32 %v3409, %v3487
        %v3489 = vsub.f32 1.0, %v3488
        %v3490 = vmul.f32 %v3487, %v3489
        %v3491 = vadd.f32 %v3487, %v3490
        %vm3492 = vweird.f32 %v3409
        %vm3493 = vweird.f32 %v3487
        %vm3494 = vmor %vm3492, %vm3493
        %v3495 = vsel %vm3494, %v3487, %v3491
        %v3496 = vand.u32 2147483647, %v3409
        %vm3497 = vcmp.eq.f32.partialorder %v3496, 8.507059e+37
        %v3498 = vand.u32 %v3409, 2147483648
        %v3499 = vor.u32 1.1754944e-38, %v3498
        %v3500 = vsel %vm3497, %v3499, %v3495
        %v3501 = vmul.f32 1.0, %v3500
        %v3502 = vrcp.pop %v3410
        %v3503 = vmul.f32 %v3410, %v3502
        %v3504 = vsub.f32 1.0, %v3503
        %v3505 = vmul.f32 %v3502, %v3504
        %v3506 = vadd.f32 %v3502, %v3505
        %vm3507 = vweird.f32 %v3410
        %vm3508 = vweird.f32 %v3502
        %vm3509 = vmor %vm3507, %vm3508
        %v3510 = vsel %vm3509, %v3502, %v3506
        %v3511 = vand.u32 2147483647, %v3410
        %vm3512 = vcmp.eq.f32.partialorder %v3511, 8.507059e+37
        %v3513 = vand.u32 %v3410, 2147483648
        %v3514 = vor.u32 1.1754944e-38, %v3513
        %v3515 = vsel %vm3512, %v3514, %v3510
        %v3516 = vmul.f32 1.0, %v3515
        %v3517 = vrcp.pop %v3411
        %v3518 = vmul.f32 %v3411, %v3517
        %v3519 = vsub.f32 1.0, %v3518
        %v3520 = vmul.f32 %v3517, %v3519
        %v3521 = vadd.f32 %v3517, %v3520
        %vm3522 = vweird.f32 %v3411
        %vm3523 = vweird.f32 %v3517
        %vm3524 = vmor %vm3522, %vm3523
        %v3525 = vsel %vm3524, %v3517, %v3521
        %v3526 = vand.u32 2147483647, %v3411
        %vm3527 = vcmp.eq.f32.partialorder %v3526, 8.507059e+37
        %v3528 = vand.u32 %v3411, 2147483648
        %v3529 = vor.u32 1.1754944e-38, %v3528
        %v3530 = vsel %vm3527, %v3529, %v3525
        %v3531 = vmul.f32 1.0, %v3530
        %3532 = vrot.lane.b32.xlu0 %v3357, 64
        %v3533 = vpop.permute.xlu0 %3532
        %3534 = vrot.lane.b32.xlu0 %v3358, 64
        %v3535 = vpop.permute.xlu0 %3534
        %3536 = vrot.lane.b32.xlu0 %v3359, 64
        %v3537 = vpop.permute.xlu0 %3536
        %3538 = vrot.lane.b32.xlu0 %v3360, 64
        %v3539 = vpop.permute.xlu0 %3538
        %3540 = vrot.lane.b32.xlu0 %v3361, 64
        %v3541 = vpop.permute.xlu0 %3540
        %3542 = vrot.lane.b32.xlu0 %v3362, 64
        %v3543 = vpop.permute.xlu0 %3542
        %3544 = vrot.lane.b32.xlu0 %v3354, 64
        %v3545 = vpop.permute.xlu0 %3544
        %3546 = vrot.lane.b32.xlu0 %v3363, 64
        %v3547 = vpop.permute.xlu0 %3546
        %v3556 = vmul.f32 %v3426, %v3533
        %v3557 = vmul.f32 %v3441, %v3535
        %v3558 = vmul.f32 %v3456, %v3537
        %v3559 = vmul.f32 %v3471, %v3539
        %v3560 = vmul.f32 %v3486, %v3541
        %v3561 = vmul.f32 %v3501, %v3543
        %v3562 = vmul.f32 %v3516, %v3545
        %v3563 = vmul.f32 %v3531, %v3547
        %3572 = vrot.lane.b32.xlu0 %v3556, 64
        %v3573 = vpop.permute.xlu0 %3572
        %3574 = vrot.lane.b32.xlu0 %v3557, 64
        %v3575 = vpop.permute.xlu0 %3574
        %3576 = vrot.lane.b32.xlu0 %v3558, 64
        %v3577 = vpop.permute.xlu0 %3576
        %3578 = vrot.lane.b32.xlu0 %v3559, 64
        %v3579 = vpop.permute.xlu0 %3578
        %3580 = vrot.lane.b32.xlu0 %v3560, 64
        %v3581 = vpop.permute.xlu0 %3580
        %3582 = vrot.lane.b32.xlu0 %v3561, 64
        %v3583 = vpop.permute.xlu0 %3582
        %3584 = vrot.lane.b32.xlu0 %v3562, 64
        %v3585 = vpop.permute.xlu0 %3584
        %3586 = vrot.lane.b32.xlu0 %v3563, 64
        %v3587 = vpop.permute.xlu0 %3586
        %v3596 = vadd.f32 %v831, %v3573
        %v3597 = vadd.f32 %v834, %v3575
        %v3598 = vadd.f32 %v837, %v3577
        %v3599 = vadd.f32 %v840, %v3579
        %v3600 = vadd.f32 %v843, %v3581
        %v3601 = vadd.f32 %v846, %v3583
        %v3602 = vadd.f32 %v849, %v3585
        %v3603 = vadd.f32 %v852, %v3587
        %v3604 = vtanh.pop %v3596
        %v3605 = vtanh.pop %v3597
        %v3606 = vtanh.pop %v3598
        %v3607 = vtanh.pop %v3599
        %v3608 = vtanh.pop %v3600
        %v3609 = vtanh.pop %v3601
        %v3610 = vtanh.pop %v3602
        %v3611 = vtanh.pop %v3603
        %v3612 = vsub.f32 1.0, %v3426
        %v3613 = vsub.f32 1.0, %v3441
        %v3614 = vsub.f32 1.0, %v3456
        %v3615 = vsub.f32 1.0, %v3471
        %v3616 = vsub.f32 1.0, %v3486
        %v3617 = vsub.f32 1.0, %v3501
        %v3618 = vsub.f32 1.0, %v3516
        %v3619 = vsub.f32 1.0, %v3531
        %3628 = vrot.lane.b32.xlu0 %v3604, 96
        %v3629 = vpop.permute.xlu0 %3628
        %3630 = vrot.lane.b32.xlu0 %v3605, 96
        %v3631 = vpop.permute.xlu0 %3630
        %3632 = vrot.lane.b32.xlu0 %v3606, 96
        %v3633 = vpop.permute.xlu0 %3632
        %3634 = vrot.lane.b32.xlu0 %v3607, 96
        %v3635 = vpop.permute.xlu0 %3634
        %3636 = vrot.lane.b32.xlu0 %v3608, 96
        %v3637 = vpop.permute.xlu0 %3636
        %3638 = vrot.lane.b32.xlu0 %v3609, 96
        %v3639 = vpop.permute.xlu0 %3638
        %3640 = vrot.lane.b32.xlu0 %v3610, 96
        %v3641 = vpop.permute.xlu0 %3640
        %3642 = vrot.lane.b32.xlu0 %v3611, 96
        %v3643 = vpop.permute.xlu0 %3642
        %v3652 = vmul.f32 %v3612, %v3629
        %v3653 = vmul.f32 %v3613, %v3631
        %v3654 = vmul.f32 %v3614, %v3633
        %v3655 = vmul.f32 %v3615, %v3635
        %v3656 = vmul.f32 %v3616, %v3637
        %v3657 = vmul.f32 %v3617, %v3639
        %v3658 = vmul.f32 %v3618, %v3641
        %v3659 = vmul.f32 %v3619, %v3643
        %v3660 = vrot.slane %v3269, 7
        %v3661 = vrot.slane %v3270, 7
        %v3662 = vrot.slane %v3271, 7
        %v3663 = vrot.slane %v3272, 7
        %v3664 = vrot.slane %v3273, 7
        %v3665 = vrot.slane %v3274, 7
        %v3666 = vrot.slane %v3276, 7
        %v3675 = vmul.f32 %v3426, %v3660
        %v3676 = vmul.f32 %v3441, %v3661
        %v3677 = vmul.f32 %v3456, %v3662
        %v3678 = vmul.f32 %v3471, %v3663
        %v3679 = vmul.f32 %v3486, %v3664
        %v3680 = vmul.f32 %v3501, %v3665
        %v3681 = vmul.f32 %v3516, %v3328
        %v3682 = vmul.f32 %v3531, %v3666
        %v3683 = vadd.f32 %v3652, %v3675
        %v3684 = vadd.f32 %v3653, %v3676
        %v3685 = vadd.f32 %v3654, %v3677
        %v3686 = vadd.f32 %v3655, %v3678
        %v3687 = vadd.f32 %v3656, %v3679
        %v3688 = vadd.f32 %v3657, %v3680
        %v3689 = vadd.f32 %v3658, %v3681
        %v3690 = vadd.f32 %v3659, %v3682
        %3699 = vrot.lane.b32.xlu0 %v3683, 96
        %v3700 = vpop.permute.xlu0 %3699
        %3701 = vrot.lane.b32.xlu0 %v3684, 96
        %v3702 = vpop.permute.xlu0 %3701
        %3703 = vrot.lane.b32.xlu0 %v3685, 96
        %v3704 = vpop.permute.xlu0 %3703
        %3705 = vrot.lane.b32.xlu0 %v3686, 96
        %v3706 = vpop.permute.xlu0 %3705
        %3707 = vrot.lane.b32.xlu0 %v3687, 96
        %v3708 = vpop.permute.xlu0 %3707
        %3709 = vrot.lane.b32.xlu0 %v3688, 96
        %v3710 = vpop.permute.xlu0 %3709
        %3711 = vrot.lane.b32.xlu0 %v3689, 96
        %v3712 = vpop.permute.xlu0 %3711
        %3713 = vrot.lane.b32.xlu0 %v3690, 96
        %v3714 = vpop.permute.xlu0 %3713
        %vm3723 = vcmask 260102
        %3724 = vst.msk [vmem:[#allocation2] sm:$0x40] %vm3723, %v3700
        %3725 = vst.msk [vmem:[#allocation2 + $0x8] sm:$0x40] %vm3723, %v3702
        %3726 = vst.msk [vmem:[#allocation2 + $0x10] sm:$0x40] %vm3723, %v3704
        %3727 = vst.msk [vmem:[#allocation2 + $0x18] sm:$0x40] %vm3723, %v3706
        %3728 = vst.msk [vmem:[#allocation2 + $0x20] sm:$0x40] %vm3723, %v3708
        %3729 = vst.msk [vmem:[#allocation2 + $0x28] sm:$0x40] %vm3723, %v3710
        %3730 = vst.msk [vmem:[#allocation2 + $0x30] sm:$0x40] %vm3723, %v3712
        %3731 = vst.msk [vmem:[#allocation2 + $0x38] sm:$0x40] %vm3723, %v3714
        %v3732 = vrot.slane %v3683, 6
        %v3733 = vrot.slane %v3684, 5
        %v3734 = vsel %vm1242, %v3733, %v3732
        %v3735 = vrot.slane %v3685, 4
        %v3736 = vsel %vm1245, %v3735, %v3734
        %v3737 = vrot.slane %v3686, 3
        %v3738 = vsel %vm1248, %v3737, %v3736
        %v3739 = vrot.slane %v3687, 2
        %v3740 = vsel %vm1251, %v3739, %v3738
        %v3741 = vrot.slane %v3688, 1
        %v3742 = vsel %vm1254, %v3741, %v3740
        %v3743 = vsel %vm1257, %v3689, %v3742
        %v3744 = vrot.slane %v3690, 7
        %v3745 = vsel %vm1260, %v3744, %v3743
        %3746 = vrot.lane.b32.xlu0 %v3745, 96
        %v3747 = vpop.permute.xlu0 %3746
        %v3748 = vsel %vm788, %v3747, 0
        %3750 = vmatpush.msra.mxu0 0.0
        %3751 = vmatpush.msra.mxu0 0.0
        %3752 = vmatpush.msra.mxu0 0.0
        %3753 = vmatpush.msra.mxu0 0.0
        %3754 = vmatpush.msra.mxu0 0.0
        %3755 = vmatpush.msra.mxu0 0.0
        %3756 = vmatpush.msra.mxu0 0.0
        %3757 = vmatpush.msra.mxu0 0.0
        %3758 = vmatpush.msra.mxu0 0.0
        %3759 = vmatpush.msra.mxu0 0.0
        %3760 = vmatpush.msra.mxu0 0.0
        %3761 = vmatpush.msra.mxu0 0.0
        %3762 = vmatpush.msra.mxu0 %v782
        %3763 = vmatpush.msra.mxu0 %v781
        %3764 = vmatpush.msra.mxu0 %v780
        %3765 = vmatpush.msra.mxu0 %v779
        %3766 = vmatmul.f32.gmra.mxu0 %v3748
        %v3767 = vpop.f32.mrf.mxu0
        %v3768 = vadd.f32 %v855, %v3767
        %3769 = vdwg.mxu0
        %v3771 = vrot.slane %v3768, 1
        %v3772 = vrot.slane %v3768, 2
        %v3773 = vrot.slane %v3768, 3
        %v3774 = vrot.slane %v3768, 4
        %v3775 = vrot.slane %v3768, 5
        %v3776 = vrot.slane %v3768, 6
        %v3777 = vrot.slane %v3768, 7
        %v3786 = vadd.f32 %v831, %v3771
        %v3787 = vadd.f32 %v834, %v3772
        %v3788 = vadd.f32 %v837, %v3773
        %v3789 = vadd.f32 %v840, %v3774
        %v3790 = vadd.f32 %v843, %v3775
        %v3791 = vadd.f32 %v846, %v3776
        %v3792 = vadd.f32 %v849, %v3777
        %v3793 = vadd.f32 %v852, %v3768
        %v3794 = vxor.u32 %v3786, 2147483648
        %v3795 = vxor.u32 %v3787, 2147483648
        %v3796 = vxor.u32 %v3788, 2147483648
        %v3797 = vxor.u32 %v3789, 2147483648
        %v3798 = vxor.u32 %v3790, 2147483648
        %v3799 = vxor.u32 %v3791, 2147483648
        %v3800 = vxor.u32 %v3792, 2147483648
        %v3801 = vxor.u32 %v3793, 2147483648
        %v3802 = vmul.f32 %v3794, 1.442695
        %v3803 = vpow.pop %v3802
        %v3804 = vmul.f32 %v3795, 1.442695
        %v3805 = vpow.pop %v3804
        %v3806 = vmul.f32 %v3796, 1.442695
        %v3807 = vpow.pop %v3806
        %v3808 = vmul.f32 %v3797, 1.442695
        %v3809 = vpow.pop %v3808
        %v3810 = vmul.f32 %v3798, 1.442695
        %v3811 = vpow.pop %v3810
        %v3812 = vmul.f32 %v3799, 1.442695
        %v3813 = vpow.pop %v3812
        %v3814 = vmul.f32 %v3800, 1.442695
        %v3815 = vpow.pop %v3814
        %v3816 = vmul.f32 %v3801, 1.442695
        %v3817 = vpow.pop %v3816
        %v3818 = vadd.f32 %v3803, 1.0
        %v3819 = vadd.f32 %v3805, 1.0
        %v3820 = vadd.f32 %v3807, 1.0
        %v3821 = vadd.f32 %v3809, 1.0
        %v3822 = vadd.f32 %v3811, 1.0
        %v3823 = vadd.f32 %v3813, 1.0
        %v3824 = vadd.f32 %v3815, 1.0
        %v3825 = vadd.f32 %v3817, 1.0
        %v3826 = vrcp.pop %v3818
        %v3827 = vmul.f32 %v3818, %v3826
        %v3828 = vsub.f32 1.0, %v3827
        %v3829 = vmul.f32 %v3826, %v3828
        %v3830 = vadd.f32 %v3826, %v3829
        %vm3831 = vweird.f32 %v3818
        %vm3832 = vweird.f32 %v3826
        %vm3833 = vmor %vm3831, %vm3832
        %v3834 = vsel %vm3833, %v3826, %v3830
        %v3835 = vand.u32 2147483647, %v3818
        %vm3836 = vcmp.eq.f32.partialorder %v3835, 8.507059e+37
        %v3837 = vand.u32 %v3818, 2147483648
        %v3838 = vor.u32 1.1754944e-38, %v3837
        %v3839 = vsel %vm3836, %v3838, %v3834
        %v3840 = vmul.f32 1.0, %v3839
        %v3841 = vrcp.pop %v3819
        %v3842 = vmul.f32 %v3819, %v3841
        %v3843 = vsub.f32 1.0, %v3842
        %v3844 = vmul.f32 %v3841, %v3843
        %v3845 = vadd.f32 %v3841, %v3844
        %vm3846 = vweird.f32 %v3819
        %vm3847 = vweird.f32 %v3841
        %vm3848 = vmor %vm3846, %vm3847
        %v3849 = vsel %vm3848, %v3841, %v3845
        %v3850 = vand.u32 2147483647, %v3819
        %vm3851 = vcmp.eq.f32.partialorder %v3850, 8.507059e+37
        %v3852 = vand.u32 %v3819, 2147483648
        %v3853 = vor.u32 1.1754944e-38, %v3852
        %v3854 = vsel %vm3851, %v3853, %v3849
        %v3855 = vmul.f32 1.0, %v3854
        %v3856 = vrcp.pop %v3820
        %v3857 = vmul.f32 %v3820, %v3856
        %v3858 = vsub.f32 1.0, %v3857
        %v3859 = vmul.f32 %v3856, %v3858
        %v3860 = vadd.f32 %v3856, %v3859
        %vm3861 = vweird.f32 %v3820
        %vm3862 = vweird.f32 %v3856
        %vm3863 = vmor %vm3861, %vm3862
        %v3864 = vsel %vm3863, %v3856, %v3860
        %v3865 = vand.u32 2147483647, %v3820
        %vm3866 = vcmp.eq.f32.partialorder %v3865, 8.507059e+37
        %v3867 = vand.u32 %v3820, 2147483648
        %v3868 = vor.u32 1.1754944e-38, %v3867
        %v3869 = vsel %vm3866, %v3868, %v3864
        %v3870 = vmul.f32 1.0, %v3869
        %v3871 = vrcp.pop %v3821
        %v3872 = vmul.f32 %v3821, %v3871
        %v3873 = vsub.f32 1.0, %v3872
        %v3874 = vmul.f32 %v3871, %v3873
        %v3875 = vadd.f32 %v3871, %v3874
        %vm3876 = vweird.f32 %v3821
        %vm3877 = vweird.f32 %v3871
        %vm3878 = vmor %vm3876, %vm3877
        %v3879 = vsel %vm3878, %v3871, %v3875
        %v3880 = vand.u32 2147483647, %v3821
        %vm3881 = vcmp.eq.f32.partialorder %v3880, 8.507059e+37
        %v3882 = vand.u32 %v3821, 2147483648
        %v3883 = vor.u32 1.1754944e-38, %v3882
        %v3884 = vsel %vm3881, %v3883, %v3879
        %v3885 = vmul.f32 1.0, %v3884
        %v3886 = vrcp.pop %v3822
        %v3887 = vmul.f32 %v3822, %v3886
        %v3888 = vsub.f32 1.0, %v3887
        %v3889 = vmul.f32 %v3886, %v3888
        %v3890 = vadd.f32 %v3886, %v3889
        %vm3891 = vweird.f32 %v3822
        %vm3892 = vweird.f32 %v3886
        %vm3893 = vmor %vm3891, %vm3892
        %v3894 = vsel %vm3893, %v3886, %v3890
        %v3895 = vand.u32 2147483647, %v3822
        %vm3896 = vcmp.eq.f32.partialorder %v3895, 8.507059e+37
        %v3897 = vand.u32 %v3822, 2147483648
        %v3898 = vor.u32 1.1754944e-38, %v3897
        %v3899 = vsel %vm3896, %v3898, %v3894
        %v3900 = vmul.f32 1.0, %v3899
        %v3901 = vrcp.pop %v3823
        %v3902 = vmul.f32 %v3823, %v3901
        %v3903 = vsub.f32 1.0, %v3902
        %v3904 = vmul.f32 %v3901, %v3903
        %v3905 = vadd.f32 %v3901, %v3904
        %vm3906 = vweird.f32 %v3823
        %vm3907 = vweird.f32 %v3901
        %vm3908 = vmor %vm3906, %vm3907
        %v3909 = vsel %vm3908, %v3901, %v3905
        %v3910 = vand.u32 2147483647, %v3823
        %vm3911 = vcmp.eq.f32.partialorder %v3910, 8.507059e+37
        %v3912 = vand.u32 %v3823, 2147483648
        %v3913 = vor.u32 1.1754944e-38, %v3912
        %v3914 = vsel %vm3911, %v3913, %v3909
        %v3915 = vmul.f32 1.0, %v3914
        %v3916 = vrcp.pop %v3824
        %v3917 = vmul.f32 %v3824, %v3916
        %v3918 = vsub.f32 1.0, %v3917
        %v3919 = vmul.f32 %v3916, %v3918
        %v3920 = vadd.f32 %v3916, %v3919
        %vm3921 = vweird.f32 %v3824
        %vm3922 = vweird.f32 %v3916
        %vm3923 = vmor %vm3921, %vm3922
        %v3924 = vsel %vm3923, %v3916, %v3920
        %v3925 = vand.u32 2147483647, %v3824
        %vm3926 = vcmp.eq.f32.partialorder %v3925, 8.507059e+37
        %v3927 = vand.u32 %v3824, 2147483648
        %v3928 = vor.u32 1.1754944e-38, %v3927
        %v3929 = vsel %vm3926, %v3928, %v3924
        %v3930 = vmul.f32 1.0, %v3929
        %v3931 = vrcp.pop %v3825
        %v3932 = vmul.f32 %v3825, %v3931
        %v3933 = vsub.f32 1.0, %v3932
        %v3934 = vmul.f32 %v3931, %v3933
        %v3935 = vadd.f32 %v3931, %v3934
        %vm3936 = vweird.f32 %v3825
        %vm3937 = vweird.f32 %v3931
        %vm3938 = vmor %vm3936, %vm3937
        %v3939 = vsel %vm3938, %v3931, %v3935
        %v3940 = vand.u32 2147483647, %v3825
        %vm3941 = vcmp.eq.f32.partialorder %v3940, 8.507059e+37
        %v3942 = vand.u32 %v3825, 2147483648
        %v3943 = vor.u32 1.1754944e-38, %v3942
        %v3944 = vsel %vm3941, %v3943, %v3939
        %v3945 = vmul.f32 1.0, %v3944
        %3946 = vrot.lane.b32.xlu0 %v3771, 64
        %v3947 = vpop.permute.xlu0 %3946
        %3948 = vrot.lane.b32.xlu0 %v3772, 64
        %v3949 = vpop.permute.xlu0 %3948
        %3950 = vrot.lane.b32.xlu0 %v3773, 64
        %v3951 = vpop.permute.xlu0 %3950
        %3952 = vrot.lane.b32.xlu0 %v3774, 64
        %v3953 = vpop.permute.xlu0 %3952
        %3954 = vrot.lane.b32.xlu0 %v3775, 64
        %v3955 = vpop.permute.xlu0 %3954
        %3956 = vrot.lane.b32.xlu0 %v3776, 64
        %v3957 = vpop.permute.xlu0 %3956
        %3958 = vrot.lane.b32.xlu0 %v3777, 64
        %v3959 = vpop.permute.xlu0 %3958
        %3960 = vrot.lane.b32.xlu0 %v3768, 64
        %v3961 = vpop.permute.xlu0 %3960
        %v3970 = vmul.f32 %v3840, %v3947
        %v3971 = vmul.f32 %v3855, %v3949
        %v3972 = vmul.f32 %v3870, %v3951
        %v3973 = vmul.f32 %v3885, %v3953
        %v3974 = vmul.f32 %v3900, %v3955
        %v3975 = vmul.f32 %v3915, %v3957
        %v3976 = vmul.f32 %v3930, %v3959
        %v3977 = vmul.f32 %v3945, %v3961
        %3986 = vrot.lane.b32.xlu0 %v3970, 64
        %v3987 = vpop.permute.xlu0 %3986
        %3988 = vrot.lane.b32.xlu0 %v3971, 64
        %v3989 = vpop.permute.xlu0 %3988
        %3990 = vrot.lane.b32.xlu0 %v3972, 64
        %v3991 = vpop.permute.xlu0 %3990
        %3992 = vrot.lane.b32.xlu0 %v3973, 64
        %v3993 = vpop.permute.xlu0 %3992
        %3994 = vrot.lane.b32.xlu0 %v3974, 64
        %v3995 = vpop.permute.xlu0 %3994
        %3996 = vrot.lane.b32.xlu0 %v3975, 64
        %v3997 = vpop.permute.xlu0 %3996
        %3998 = vrot.lane.b32.xlu0 %v3976, 64
        %v3999 = vpop.permute.xlu0 %3998
        %4000 = vrot.lane.b32.xlu0 %v3977, 64
        %v4001 = vpop.permute.xlu0 %4000
        %v4010 = vadd.f32 %v831, %v3987
        %v4011 = vadd.f32 %v834, %v3989
        %v4012 = vadd.f32 %v837, %v3991
        %v4013 = vadd.f32 %v840, %v3993
        %v4014 = vadd.f32 %v843, %v3995
        %v4015 = vadd.f32 %v846, %v3997
        %v4016 = vadd.f32 %v849, %v3999
        %v4017 = vadd.f32 %v852, %v4001
        %v4018 = vtanh.pop %v4010
        %v4019 = vtanh.pop %v4011
        %v4020 = vtanh.pop %v4012
        %v4021 = vtanh.pop %v4013
        %v4022 = vtanh.pop %v4014
        %v4023 = vtanh.pop %v4015
        %v4024 = vtanh.pop %v4016
        %v4025 = vtanh.pop %v4017
        %v4026 = vsub.f32 1.0, %v3840
        %v4027 = vsub.f32 1.0, %v3855
        %v4028 = vsub.f32 1.0, %v3870
        %v4029 = vsub.f32 1.0, %v3885
        %v4030 = vsub.f32 1.0, %v3900
        %v4031 = vsub.f32 1.0, %v3915
        %v4032 = vsub.f32 1.0, %v3930
        %v4033 = vsub.f32 1.0, %v3945
        %4042 = vrot.lane.b32.xlu0 %v4018, 96
        %v4043 = vpop.permute.xlu0 %4042
        %4044 = vrot.lane.b32.xlu0 %v4019, 96
        %v4045 = vpop.permute.xlu0 %4044
        %4046 = vrot.lane.b32.xlu0 %v4020, 96
        %v4047 = vpop.permute.xlu0 %4046
        %4048 = vrot.lane.b32.xlu0 %v4021, 96
        %v4049 = vpop.permute.xlu0 %4048
        %4050 = vrot.lane.b32.xlu0 %v4022, 96
        %v4051 = vpop.permute.xlu0 %4050
        %4052 = vrot.lane.b32.xlu0 %v4023, 96
        %v4053 = vpop.permute.xlu0 %4052
        %4054 = vrot.lane.b32.xlu0 %v4024, 96
        %v4055 = vpop.permute.xlu0 %4054
        %4056 = vrot.lane.b32.xlu0 %v4025, 96
        %v4057 = vpop.permute.xlu0 %4056
        %v4066 = vmul.f32 %v4026, %v4043
        %v4067 = vmul.f32 %v4027, %v4045
        %v4068 = vmul.f32 %v4028, %v4047
        %v4069 = vmul.f32 %v4029, %v4049
        %v4070 = vmul.f32 %v4030, %v4051
        %v4071 = vmul.f32 %v4031, %v4053
        %v4072 = vmul.f32 %v4032, %v4055
        %v4073 = vmul.f32 %v4033, %v4057
        %v4074 = vrot.slane %v3683, 7
        %v4075 = vrot.slane %v3684, 7
        %v4076 = vrot.slane %v3685, 7
        %v4077 = vrot.slane %v3686, 7
        %v4078 = vrot.slane %v3687, 7
        %v4079 = vrot.slane %v3688, 7
        %v4080 = vrot.slane %v3689, 7
        %v4089 = vmul.f32 %v3840, %v4074
        %v4090 = vmul.f32 %v3855, %v4075
        %v4091 = vmul.f32 %v3870, %v4076
        %v4092 = vmul.f32 %v3885, %v4077
        %v4093 = vmul.f32 %v3900, %v4078
        %v4094 = vmul.f32 %v3915, %v4079
        %v4095 = vmul.f32 %v3930, %v4080
        %v4096 = vmul.f32 %v3945, %v3744
        %v4097 = vadd.f32 %v4066, %v4089
        %v4098 = vadd.f32 %v4067, %v4090
        %v4099 = vadd.f32 %v4068, %v4091
        %v4100 = vadd.f32 %v4069, %v4092
        %v4101 = vadd.f32 %v4070, %v4093
        %v4102 = vadd.f32 %v4071, %v4094
        %v4103 = vadd.f32 %v4072, %v4095
        %v4104 = vadd.f32 %v4073, %v4096
        %4113 = vrot.lane.b32.xlu0 %v4097, 96
        %v4114 = vpop.permute.xlu0 %4113
        %4115 = vrot.lane.b32.xlu0 %v4098, 96
        %v4116 = vpop.permute.xlu0 %4115
        %4117 = vrot.lane.b32.xlu0 %v4099, 96
        %v4118 = vpop.permute.xlu0 %4117
        %4119 = vrot.lane.b32.xlu0 %v4100, 96
        %v4120 = vpop.permute.xlu0 %4119
        %4121 = vrot.lane.b32.xlu0 %v4101, 96
        %v4122 = vpop.permute.xlu0 %4121
        %4123 = vrot.lane.b32.xlu0 %v4102, 96
        %v4124 = vpop.permute.xlu0 %4123
        %4125 = vrot.lane.b32.xlu0 %v4103, 96
        %v4126 = vpop.permute.xlu0 %4125
        %4127 = vrot.lane.b32.xlu0 %v4104, 96
        %v4128 = vpop.permute.xlu0 %4127
        %vm4137 = vcmask 261127
        %4138 = vst.msk [vmem:[#allocation2] sm:$0x80] %vm4137, %v4114
        %4139 = vst.msk [vmem:[#allocation2 + $0x8] sm:$0x80] %vm4137, %v4116
        %4140 = vst.msk [vmem:[#allocation2 + $0x10] sm:$0x80] %vm4137, %v4118
        %4141 = vst.msk [vmem:[#allocation2 + $0x18] sm:$0x80] %vm4137, %v4120
        %4142 = vst.msk [vmem:[#allocation2 + $0x20] sm:$0x80] %vm4137, %v4122
        %4143 = vst.msk [vmem:[#allocation2 + $0x28] sm:$0x80] %vm4137, %v4124
        %4144 = vst.msk [vmem:[#allocation2 + $0x30] sm:$0x80] %vm4137, %v4126
        %4145 = vst.msk [vmem:[#allocation2 + $0x38] sm:$0x80] %vm4137, %v4128
        %v4146 = vld [vmem:[#allocation2] sm:$0xff]
        %v4147 = vld [vmem:[#allocation2 + $0x8] sm:$0xff]
        %v4148 = vld [vmem:[#allocation2 + $0x10] sm:$0xff]
        %v4149 = vld [vmem:[#allocation2 + $0x18] sm:$0xff]
        %v4150 = vld [vmem:[#allocation2 + $0x20] sm:$0xff]
        %v4151 = vld [vmem:[#allocation2 + $0x28] sm:$0xff]
        %v4152 = vld [vmem:[#allocation2 + $0x30] sm:$0xff]
        %v4153 = vld [vmem:[#allocation2 + $0x38] sm:$0xff]
        %v4154 = vld [vmem:[#allocation12] sm:$0xff]
        %v4155 = vld [vmem:[#allocation12 + $0x8] sm:$0xff]
        %v4156 = vld [vmem:[#allocation12 + $0x10] sm:$0xff]
        %v4157 = vld [vmem:[#allocation12 + $0x18] sm:$0xff]
        %v4158 = vld [vmem:[#allocation12 + $0x20] sm:$0xff]
        %v4159 = vld [vmem:[#allocation12 + $0x28] sm:$0xff]
        %v4160 = vld [vmem:[#allocation12 + $0x30] sm:$0xff]
        %v4161 = vld [vmem:[#allocation12 + $0x38] sm:$0xff]
        %v4162 = vld [vmem:[%s7] sm:$0x1]
        %v4164 = vperm.slane %v4162, 0
        %vm4166 = vcmask 523264
        %v4168 = vsel %vm4166, %v774, 0
        %4170 = vmatpush.msra.mxu0 0.0
        %4171 = vmatpush.msra.mxu0 0.0
        %4172 = vmatpush.msra.mxu0 0.0
        %4173 = vmatpush.msra.mxu0 0.0
        %4174 = vmatpush.msra.mxu0 0.0
        %4175 = vmatpush.msra.mxu0 0.0
        %4176 = vmatpush.msra.mxu0 0.0
        %4177 = vmatpush.msra.mxu0 0.0
        %4178 = vmatpush.msra.mxu0 %v4161
        %4179 = vmatpush.msra.mxu0 %v4160
        %4180 = vmatpush.msra.mxu0 %v4159
        %4181 = vmatpush.msra.mxu0 %v4158
        %4182 = vmatpush.msra.mxu0 %v4157
        %4183 = vmatpush.msra.mxu0 %v4156
        %4184 = vmatpush.msra.mxu0 %v4155
        %4185 = vmatpush.msra.mxu0 %v4154
        %4186 = vmatmul.f32.gmra.mxu0 %v4168
        %v4187 = vpop.f32.mrf.mxu0
        %v4188 = vadd.f32 %v4164, %v4187
        %4189 = vdwg.mxu0
        %v4190 = vmax.f32 %v4188, 0.0
        %v4191 = vld [vmem:[#allocation14] sm:$0xff]
        %v4192 = vld [vmem:[#allocation14 + $0x8] sm:$0xff]
        %v4193 = vld [vmem:[#allocation14 + $0x10] sm:$0xff]
        %v4194 = vld [vmem:[#allocation14 + $0x18] sm:$0xff]
        %v4195 = vld [vmem:[%s9] sm:$0x1]
        %v4197 = vperm.slane %v4195, 0
        %v4200 = vsel %vm788, %v4146, 0
        %v4203 = vsel %vm788, %v4147, 0
        %v4206 = vsel %vm788, %v4148, 0
        %v4209 = vsel %vm788, %v4149, 0
        %v4212 = vsel %vm788, %v4150, 0
        %v4215 = vsel %vm788, %v4151, 0
        %v4218 = vsel %vm788, %v4152, 0
        %v4221 = vsel %vm788, %v4153, 0
        %4223 = vmatpush.msra.mxu0 0.0
        %4224 = vmatpush.msra.mxu0 0.0
        %4225 = vmatpush.msra.mxu0 0.0
        %4226 = vmatpush.msra.mxu0 0.0
        %4227 = vmatpush.msra.mxu0 0.0
        %4228 = vmatpush.msra.mxu0 0.0
        %4229 = vmatpush.msra.mxu0 0.0
        %4230 = vmatpush.msra.mxu0 0.0
        %4231 = vmatpush.msra.mxu0 0.0
        %4232 = vmatpush.msra.mxu0 0.0
        %4233 = vmatpush.msra.mxu0 0.0
        %4234 = vmatpush.msra.mxu0 0.0
        %4235 = vmatpush.msra.mxu0 %v4194
        %4236 = vmatpush.msra.mxu0 %v4193
        %4237 = vmatpush.msra.mxu0 %v4192
        %4238 = vmatpush.msra.mxu0 %v4191
        %4239 = vmatmul.f32.gmra.mxu0 %v4200
        %v4240 = vpop.f32.mrf.mxu0
        %v4241 = vadd.f32 %v4197, %v4240
        %4242 = vmatmul.f32.gmra.mxu0 %v4203
        %v4243 = vpop.f32.mrf.mxu0
        %v4244 = vadd.f32 %v4197, %v4243
        %4245 = vmatmul.f32.gmra.mxu0 %v4206
        %v4246 = vpop.f32.mrf.mxu0
        %v4247 = vadd.f32 %v4197, %v4246
        %4248 = vmatmul.f32.gmra.mxu0 %v4209
        %v4249 = vpop.f32.mrf.mxu0
        %v4250 = vadd.f32 %v4197, %v4249
        %4251 = vmatmul.f32.gmra.mxu0 %v4212
        %v4252 = vpop.f32.mrf.mxu0
        %v4253 = vadd.f32 %v4197, %v4252
        %4254 = vmatmul.f32.gmra.mxu0 %v4215
        %v4255 = vpop.f32.mrf.mxu0
        %v4256 = vadd.f32 %v4197, %v4255
        %4257 = vmatmul.f32.gmra.mxu0 %v4218
        %v4258 = vpop.f32.mrf.mxu0
        %v4259 = vadd.f32 %v4197, %v4258
        %4260 = vmatmul.f32.gmra.mxu0 %v4221
        %v4261 = vpop.f32.mrf.mxu0
        %v4262 = vadd.f32 %v4197, %v4261
        %4263 = vdwg.mxu0
        %v4264 = vmax.f32 %v4241, 0.0
        %v4265 = vmax.f32 %v4244, 0.0
        %v4266 = vmax.f32 %v4247, 0.0
        %v4267 = vmax.f32 %v4250, 0.0
        %v4268 = vmax.f32 %v4253, 0.0
        %v4269 = vmax.f32 %v4256, 0.0
        %v4270 = vmax.f32 %v4259, 0.0
        %v4271 = vmax.f32 %v4262, 0.0
        %v4272 = vld [vmem:[%s10] sm:$0x3]
        %v4273 = vld [vmem:[%s11] sm:$0x3]
        %v4275 = vrot.slane %v4190, 1
        %v4276 = vrot.slane %v4190, 2
        %v4277 = vrot.slane %v4190, 3
        %v4278 = vrot.slane %v4190, 4
        %v4279 = vrot.slane %v4190, 5
        %v4280 = vrot.slane %v4190, 6
        %v4281 = vrot.slane %v4190, 7
        %v4282 = vperm.slane %v4190, 0
        %v4283 = vperm.slane %v4275, 0
        %v4284 = vperm.slane %v4276, 0
        %v4285 = vperm.slane %v4277, 0
        %v4286 = vperm.slane %v4278, 0
        %v4287 = vperm.slane %v4279, 0
        %v4288 = vperm.slane %v4280, 0
        %v4289 = vperm.slane %v4281, 0
        %v4298 = vmul.f32 %v4282, %v4272
        %v4299 = vmul.f32 %v4283, %v4272
        %v4300 = vmul.f32 %v4284, %v4272
        %v4301 = vmul.f32 %v4285, %v4272
        %v4302 = vmul.f32 %v4286, %v4272
        %v4303 = vmul.f32 %v4287, %v4272
        %v4304 = vmul.f32 %v4288, %v4272
        %v4305 = vmul.f32 %v4289, %v4272
        %4307 = vset.pattern.permute.xlu0 0
        %4308 = vperm.xlu0 %4307, %v4273
        %v4309 = vpop.permute.xlu0 %4308
        %vm4311 = vcmask 785408
        %v4313 = vsel %vm4311, %v4298, 0
        %v4316 = vsel %vm4311, %v4264, 0
        %4318 = vmatpush.xpose.msra.mxu0 0.0
        %4319 = vmatpush.xpose.msra.mxu0 0.0
        %4320 = vmatpush.xpose.msra.mxu0 0.0
        %4321 = vmatpush.xpose.msra.mxu0 0.0
        %4322 = vmatpush.xpose.msra.mxu0 0.0
        %4323 = vmatpush.xpose.msra.mxu0 0.0
        %4324 = vmatpush.xpose.msra.mxu0 0.0
        %4325 = vmatpush.xpose.msra.mxu0 0.0
        %4326 = vmatpush.xpose.msra.mxu0 0.0
        %4327 = vmatpush.xpose.msra.mxu0 0.0
        %4328 = vmatpush.xpose.msra.mxu0 0.0
        %4329 = vmatpush.xpose.msra.mxu0 0.0
        %4330 = vmatpush.xpose.msra.mxu0 0.0
        %4331 = vmatpush.xpose.msra.mxu0 0.0
        %4332 = vmatpush.xpose.msra.mxu0 0.0
        %4333 = vmatpush.xpose.msra.mxu0 %v4316
        %4334 = vmatmul.f32.gmra.mxu0 %v4313
        %v4335 = vpop.f32.mrf.mxu0
        %v4336 = vadd.f32 %v4309, %v4335
        %4337 = vdwg.mxu0
        %v4339 = vsel %vm4311, %v4299, 0
        %v4342 = vsel %vm4311, %v4265, 0
        %4344 = vmatpush.xpose.msra.mxu0 0.0
        %4345 = vmatpush.xpose.msra.mxu0 0.0
        %4346 = vmatpush.xpose.msra.mxu0 0.0
        %4347 = vmatpush.xpose.msra.mxu0 0.0
        %4348 = vmatpush.xpose.msra.mxu0 0.0
        %4349 = vmatpush.xpose.msra.mxu0 0.0
        %4350 = vmatpush.xpose.msra.mxu0 0.0
        %4351 = vmatpush.xpose.msra.mxu0 0.0
        %4352 = vmatpush.xpose.msra.mxu0 0.0
        %4353 = vmatpush.xpose.msra.mxu0 0.0
        %4354 = vmatpush.xpose.msra.mxu0 0.0
        %4355 = vmatpush.xpose.msra.mxu0 0.0
        %4356 = vmatpush.xpose.msra.mxu0 0.0
        %4357 = vmatpush.xpose.msra.mxu0 0.0
        %4358 = vmatpush.xpose.msra.mxu0 0.0
        %4359 = vmatpush.xpose.msra.mxu0 %v4342
        %4360 = vmatmul.f32.gmra.mxu0 %v4339
        %v4361 = vpop.f32.mrf.mxu0
        %v4362 = vadd.f32 %v4309, %v4361
        %4363 = vdwg.mxu0
        %v4365 = vsel %vm4311, %v4300, 0
        %v4368 = vsel %vm4311, %v4266, 0
        %4370 = vmatpush.xpose.msra.mxu0 0.0
        %4371 = vmatpush.xpose.msra.mxu0 0.0
        %4372 = vmatpush.xpose.msra.mxu0 0.0
        %4373 = vmatpush.xpose.msra.mxu0 0.0
        %4374 = vmatpush.xpose.msra.mxu0 0.0
        %4375 = vmatpush.xpose.msra.mxu0 0.0
        %4376 = vmatpush.xpose.msra.mxu0 0.0
        %4377 = vmatpush.xpose.msra.mxu0 0.0
        %4378 = vmatpush.xpose.msra.mxu0 0.0
        %4379 = vmatpush.xpose.msra.mxu0 0.0
        %4380 = vmatpush.xpose.msra.mxu0 0.0
        %4381 = vmatpush.xpose.msra.mxu0 0.0
        %4382 = vmatpush.xpose.msra.mxu0 0.0
        %4383 = vmatpush.xpose.msra.mxu0 0.0
        %4384 = vmatpush.xpose.msra.mxu0 0.0
        %4385 = vmatpush.xpose.msra.mxu0 %v4368
        %4386 = vmatmul.f32.gmra.mxu0 %v4365
        %v4387 = vpop.f32.mrf.mxu0
        %v4388 = vadd.f32 %v4309, %v4387
        %4389 = vdwg.mxu0
        %v4391 = vsel %vm4311, %v4301, 0
        %v4394 = vsel %vm4311, %v4267, 0
        %4396 = vmatpush.xpose.msra.mxu0 0.0
        %4397 = vmatpush.xpose.msra.mxu0 0.0
        %4398 = vmatpush.xpose.msra.mxu0 0.0
        %4399 = vmatpush.xpose.msra.mxu0 0.0
        %4400 = vmatpush.xpose.msra.mxu0 0.0
        %4401 = vmatpush.xpose.msra.mxu0 0.0
        %4402 = vmatpush.xpose.msra.mxu0 0.0
        %4403 = vmatpush.xpose.msra.mxu0 0.0
        %4404 = vmatpush.xpose.msra.mxu0 0.0
        %4405 = vmatpush.xpose.msra.mxu0 0.0
        %4406 = vmatpush.xpose.msra.mxu0 0.0
        %4407 = vmatpush.xpose.msra.mxu0 0.0
        %4408 = vmatpush.xpose.msra.mxu0 0.0
        %4409 = vmatpush.xpose.msra.mxu0 0.0
        %4410 = vmatpush.xpose.msra.mxu0 0.0
        %4411 = vmatpush.xpose.msra.mxu0 %v4394
        %4412 = vmatmul.f32.gmra.mxu0 %v4391
        %v4413 = vpop.f32.mrf.mxu0
        %v4414 = vadd.f32 %v4309, %v4413
        %4415 = vdwg.mxu0
        %v4417 = vsel %vm4311, %v4302, 0
        %v4420 = vsel %vm4311, %v4268, 0
        %4422 = vmatpush.xpose.msra.mxu0 0.0
        %4423 = vmatpush.xpose.msra.mxu0 0.0
        %4424 = vmatpush.xpose.msra.mxu0 0.0
        %4425 = vmatpush.xpose.msra.mxu0 0.0
        %4426 = vmatpush.xpose.msra.mxu0 0.0
        %4427 = vmatpush.xpose.msra.mxu0 0.0
        %4428 = vmatpush.xpose.msra.mxu0 0.0
        %4429 = vmatpush.xpose.msra.mxu0 0.0
        %4430 = vmatpush.xpose.msra.mxu0 0.0
        %4431 = vmatpush.xpose.msra.mxu0 0.0
        %4432 = vmatpush.xpose.msra.mxu0 0.0
        %4433 = vmatpush.xpose.msra.mxu0 0.0
        %4434 = vmatpush.xpose.msra.mxu0 0.0
        %4435 = vmatpush.xpose.msra.mxu0 0.0
        %4436 = vmatpush.xpose.msra.mxu0 0.0
        %4437 = vmatpush.xpose.msra.mxu0 %v4420
        %4438 = vmatmul.f32.gmra.mxu0 %v4417
        %v4439 = vpop.f32.mrf.mxu0
        %v4440 = vadd.f32 %v4309, %v4439
        %4441 = vdwg.mxu0
        %v4443 = vsel %vm4311, %v4303, 0
        %v4446 = vsel %vm4311, %v4269, 0
        %4448 = vmatpush.xpose.msra.mxu0 0.0
        %4449 = vmatpush.xpose.msra.mxu0 0.0
        %4450 = vmatpush.xpose.msra.mxu0 0.0
        %4451 = vmatpush.xpose.msra.mxu0 0.0
        %4452 = vmatpush.xpose.msra.mxu0 0.0
        %4453 = vmatpush.xpose.msra.mxu0 0.0
        %4454 = vmatpush.xpose.msra.mxu0 0.0
        %4455 = vmatpush.xpose.msra.mxu0 0.0
        %4456 = vmatpush.xpose.msra.mxu0 0.0
        %4457 = vmatpush.xpose.msra.mxu0 0.0
        %4458 = vmatpush.xpose.msra.mxu0 0.0
        %4459 = vmatpush.xpose.msra.mxu0 0.0
        %4460 = vmatpush.xpose.msra.mxu0 0.0
        %4461 = vmatpush.xpose.msra.mxu0 0.0
        %4462 = vmatpush.xpose.msra.mxu0 0.0
        %4463 = vmatpush.xpose.msra.mxu0 %v4446
        %4464 = vmatmul.f32.gmra.mxu0 %v4443
        %v4465 = vpop.f32.mrf.mxu0
        %v4466 = vadd.f32 %v4309, %v4465
        %4467 = vdwg.mxu0
        %v4469 = vsel %vm4311, %v4304, 0
        %v4472 = vsel %vm4311, %v4270, 0
        %4474 = vmatpush.xpose.msra.mxu0 0.0
        %4475 = vmatpush.xpose.msra.mxu0 0.0
        %4476 = vmatpush.xpose.msra.mxu0 0.0
        %4477 = vmatpush.xpose.msra.mxu0 0.0
        %4478 = vmatpush.xpose.msra.mxu0 0.0
        %4479 = vmatpush.xpose.msra.mxu0 0.0
        %4480 = vmatpush.xpose.msra.mxu0 0.0
        %4481 = vmatpush.xpose.msra.mxu0 0.0
        %4482 = vmatpush.xpose.msra.mxu0 0.0
        %4483 = vmatpush.xpose.msra.mxu0 0.0
        %4484 = vmatpush.xpose.msra.mxu0 0.0
        %4485 = vmatpush.xpose.msra.mxu0 0.0
        %4486 = vmatpush.xpose.msra.mxu0 0.0
        %4487 = vmatpush.xpose.msra.mxu0 0.0
        %4488 = vmatpush.xpose.msra.mxu0 0.0
        %4489 = vmatpush.xpose.msra.mxu0 %v4472
        %4490 = vmatmul.f32.gmra.mxu0 %v4469
        %v4491 = vpop.f32.mrf.mxu0
        %v4492 = vadd.f32 %v4309, %v4491
        %4493 = vdwg.mxu0
        %v4495 = vsel %vm4311, %v4305, 0
        %v4498 = vsel %vm4311, %v4271, 0
        %4500 = vmatpush.xpose.msra.mxu0 0.0
        %4501 = vmatpush.xpose.msra.mxu0 0.0
        %4502 = vmatpush.xpose.msra.mxu0 0.0
        %4503 = vmatpush.xpose.msra.mxu0 0.0
        %4504 = vmatpush.xpose.msra.mxu0 0.0
        %4505 = vmatpush.xpose.msra.mxu0 0.0
        %4506 = vmatpush.xpose.msra.mxu0 0.0
        %4507 = vmatpush.xpose.msra.mxu0 0.0
        %4508 = vmatpush.xpose.msra.mxu0 0.0
        %4509 = vmatpush.xpose.msra.mxu0 0.0
        %4510 = vmatpush.xpose.msra.mxu0 0.0
        %4511 = vmatpush.xpose.msra.mxu0 0.0
        %4512 = vmatpush.xpose.msra.mxu0 0.0
        %4513 = vmatpush.xpose.msra.mxu0 0.0
        %4514 = vmatpush.xpose.msra.mxu0 0.0
        %4515 = vmatpush.xpose.msra.mxu0 %v4498
        %4516 = vmatmul.f32.gmra.mxu0 %v4495
        %v4517 = vpop.f32.mrf.mxu0
        %v4518 = vadd.f32 %v4309, %v4517
        %4519 = vdwg.mxu0
        %v4520 = vand.u32 2147483647, %v774
        %v4521 = vsel %vm4166, %v4520, 0.0
        %4522 = vadd.xlane.f32.xlu0 %v4521
        %v4523 = vpop.xlane.xlu0 %4522
        %vm4524 = vcmp.eq.f32.partialorder %v4523, 0.0
        %v4525 = vsel %vm4524, 1, 0
        %v4526 = vperm.slane %v4525, 0
        %v4527 = vperm.slane %v4525, 1
        %v4528 = vperm.slane %v4525, 2
        %v4529 = vperm.slane %v4525, 3
        %v4530 = vperm.slane %v4525, 4
        %v4531 = vperm.slane %v4525, 5
        %v4532 = vperm.slane %v4525, 6
        %v4533 = vperm.slane %v4525, 7
        %vm4534 = vcmp.ne.s32.totalorder %v4526, 0
        %vm4535 = vcmp.ne.s32.totalorder %v4527, 0
        %vm4536 = vcmp.ne.s32.totalorder %v4528, 0
        %vm4537 = vcmp.ne.s32.totalorder %v4529, 0
        %vm4538 = vcmp.ne.s32.totalorder %v4530, 0
        %vm4539 = vcmp.ne.s32.totalorder %v4531, 0
        %vm4540 = vcmp.ne.s32.totalorder %v4532, 0
        %vm4541 = vcmp.ne.s32.totalorder %v4533, 0
        %v4542 = vsel %vm4534, 1, 0
        %v4543 = vsel %vm4535, 1, 0
        %v4544 = vsel %vm4536, 1, 0
        %v4545 = vsel %vm4537, 1, 0
        %v4546 = vsel %vm4538, 1, 0
        %v4547 = vsel %vm4539, 1, 0
        %v4548 = vsel %vm4540, 1, 0
        %v4549 = vsel %vm4541, 1, 0
        %vm4550 = vcmp.eq.s32.totalorder %v4542, 1
        %vm4551 = vcmp.eq.s32.totalorder %v4543, 1
        %vm4552 = vcmp.eq.s32.totalorder %v4544, 1
        %vm4553 = vcmp.eq.s32.totalorder %v4545, 1
        %vm4554 = vcmp.eq.s32.totalorder %v4546, 1
        %vm4555 = vcmp.eq.s32.totalorder %v4547, 1
        %vm4556 = vcmp.eq.s32.totalorder %v4548, 1
        %vm4557 = vcmp.eq.s32.totalorder %v4549, 1
        %v4558 = vsel %vm4550, -inf, %v4336
        %v4559 = vsel %vm4551, -inf, %v4362
        %v4560 = vsel %vm4552, -inf, %v4388
        %v4561 = vsel %vm4553, -inf, %v4414
        %v4562 = vsel %vm4554, -inf, %v4440
        %v4563 = vsel %vm4555, -inf, %v4466
        %v4564 = vsel %vm4556, -inf, %v4492
        %v4565 = vsel %vm4557, -inf, %v4518
        %vm4566 = vcmask 58368
        %v4567 = vsel %vm4566, %v4558, -inf
        %4568 = vmax.xlane.f32.xlu0 %v4567
        %v4569 = vpop.xlane.xlu0 %4568
        %v4570 = vsel %vm4566, %v4559, -inf
        %4571 = vmax.xlane.f32.xlu0 %v4570
        %v4572 = vpop.xlane.xlu0 %4571
        %v4573 = vsel %vm4566, %v4560, -inf
        %4574 = vmax.xlane.f32.xlu0 %v4573
        %v4575 = vpop.xlane.xlu0 %4574
        %v4576 = vsel %vm4566, %v4561, -inf
        %4577 = vmax.xlane.f32.xlu0 %v4576
        %v4578 = vpop.xlane.xlu0 %4577
        %v4579 = vsel %vm4566, %v4562, -inf
        %4580 = vmax.xlane.f32.xlu0 %v4579
        %v4581 = vpop.xlane.xlu0 %4580
        %v4582 = vsel %vm4566, %v4563, -inf
        %4583 = vmax.xlane.f32.xlu0 %v4582
        %v4584 = vpop.xlane.xlu0 %4583
        %v4585 = vsel %vm4566, %v4564, -inf
        %4586 = vmax.xlane.f32.xlu0 %v4585
        %v4587 = vpop.xlane.xlu0 %4586
        %v4588 = vsel %vm4566, %v4565, -inf
        %4589 = vmax.xlane.f32.xlu0 %v4588
        %v4590 = vpop.xlane.xlu0 %4589
        %v4591 = vsub.f32 %v4558, %v4569
        %v4592 = vsub.f32 %v4559, %v4572
        %v4593 = vsub.f32 %v4560, %v4575
        %v4594 = vsub.f32 %v4561, %v4578
        %v4595 = vsub.f32 %v4562, %v4581
        %v4596 = vsub.f32 %v4563, %v4584
        %v4597 = vsub.f32 %v4564, %v4587
        %v4598 = vsub.f32 %v4565, %v4590
        %v4599 = vmul.f32 %v4591, 1.442695
        %v4600 = vpow.pop %v4599
        %v4601 = vmul.f32 %v4592, 1.442695
        %v4602 = vpow.pop %v4601
        %v4603 = vmul.f32 %v4593, 1.442695
        %v4604 = vpow.pop %v4603
        %v4605 = vmul.f32 %v4594, 1.442695
        %v4606 = vpow.pop %v4605
        %v4607 = vmul.f32 %v4595, 1.442695
        %v4608 = vpow.pop %v4607
        %v4609 = vmul.f32 %v4596, 1.442695
        %v4610 = vpow.pop %v4609
        %v4611 = vmul.f32 %v4597, 1.442695
        %v4612 = vpow.pop %v4611
        %v4613 = vmul.f32 %v4598, 1.442695
        %v4614 = vpow.pop %v4613
        %v4615 = vsel %vm4566, %v4600, 0.0
        %4616 = vadd.xlane.f32.xlu0 %v4615
        %v4617 = vpop.xlane.xlu0 %4616
        %v4618 = vsel %vm4566, %v4602, 0.0
        %4619 = vadd.xlane.f32.xlu0 %v4618
        %v4620 = vpop.xlane.xlu0 %4619
        %v4621 = vsel %vm4566, %v4604, 0.0
        %4622 = vadd.xlane.f32.xlu0 %v4621
        %v4623 = vpop.xlane.xlu0 %4622
        %v4624 = vsel %vm4566, %v4606, 0.0
        %4625 = vadd.xlane.f32.xlu0 %v4624
        %v4626 = vpop.xlane.xlu0 %4625
        %v4627 = vsel %vm4566, %v4608, 0.0
        %4628 = vadd.xlane.f32.xlu0 %v4627
        %v4629 = vpop.xlane.xlu0 %4628
        %v4630 = vsel %vm4566, %v4610, 0.0
        %4631 = vadd.xlane.f32.xlu0 %v4630
        %v4632 = vpop.xlane.xlu0 %4631
        %v4633 = vsel %vm4566, %v4612, 0.0
        %4634 = vadd.xlane.f32.xlu0 %v4633
        %v4635 = vpop.xlane.xlu0 %4634
        %v4636 = vsel %vm4566, %v4614, 0.0
        %4637 = vadd.xlane.f32.xlu0 %v4636
        %v4638 = vpop.xlane.xlu0 %4637
        %v4639 = vrcp.pop %v4617
        %v4640 = vmul.f32 %v4617, %v4639
        %v4641 = vsub.f32 1.0, %v4640
        %v4642 = vmul.f32 %v4639, %v4641
        %v4643 = vadd.f32 %v4639, %v4642
        %vm4644 = vweird.f32 %v4617
        %vm4645 = vweird.f32 %v4639
        %vm4646 = vmor %vm4644, %vm4645
        %v4647 = vsel %vm4646, %v4639, %v4643
        %v4648 = vand.u32 2147483647, %v4617
        %vm4649 = vcmp.eq.f32.partialorder %v4648, 8.507059e+37
        %v4650 = vand.u32 %v4617, 2147483648
        %v4651 = vor.u32 1.1754944e-38, %v4650
        %v4652 = vsel %vm4649, %v4651, %v4647
        %v4653 = vmul.f32 %v4600, %v4652
        %v4654 = vrcp.pop %v4620
        %v4655 = vmul.f32 %v4620, %v4654
        %v4656 = vsub.f32 1.0, %v4655
        %v4657 = vmul.f32 %v4654, %v4656
        %v4658 = vadd.f32 %v4654, %v4657
        %vm4659 = vweird.f32 %v4620
        %vm4660 = vweird.f32 %v4654
        %vm4661 = vmor %vm4659, %vm4660
        %v4662 = vsel %vm4661, %v4654, %v4658
        %v4663 = vand.u32 2147483647, %v4620
        %vm4664 = vcmp.eq.f32.partialorder %v4663, 8.507059e+37
        %v4665 = vand.u32 %v4620, 2147483648
        %v4666 = vor.u32 1.1754944e-38, %v4665
        %v4667 = vsel %vm4664, %v4666, %v4662
        %v4668 = vmul.f32 %v4602, %v4667
        %v4669 = vrcp.pop %v4623
        %v4670 = vmul.f32 %v4623, %v4669
        %v4671 = vsub.f32 1.0, %v4670
        %v4672 = vmul.f32 %v4669, %v4671
        %v4673 = vadd.f32 %v4669, %v4672
        %vm4674 = vweird.f32 %v4623
        %vm4675 = vweird.f32 %v4669
        %vm4676 = vmor %vm4674, %vm4675
        %v4677 = vsel %vm4676, %v4669, %v4673
        %v4678 = vand.u32 2147483647, %v4623
        %vm4679 = vcmp.eq.f32.partialorder %v4678, 8.507059e+37
        %v4680 = vand.u32 %v4623, 2147483648
        %v4681 = vor.u32 1.1754944e-38, %v4680
        %v4682 = vsel %vm4679, %v4681, %v4677
        %v4683 = vmul.f32 %v4604, %v4682
        %v4684 = vrcp.pop %v4626
        %v4685 = vmul.f32 %v4626, %v4684
        %v4686 = vsub.f32 1.0, %v4685
        %v4687 = vmul.f32 %v4684, %v4686
        %v4688 = vadd.f32 %v4684, %v4687
        %vm4689 = vweird.f32 %v4626
        %vm4690 = vweird.f32 %v4684
        %vm4691 = vmor %vm4689, %vm4690
        %v4692 = vsel %vm4691, %v4684, %v4688
        %v4693 = vand.u32 2147483647, %v4626
        %vm4694 = vcmp.eq.f32.partialorder %v4693, 8.507059e+37
        %v4695 = vand.u32 %v4626, 2147483648
        %v4696 = vor.u32 1.1754944e-38, %v4695
        %v4697 = vsel %vm4694, %v4696, %v4692
        %v4698 = vmul.f32 %v4606, %v4697
        %v4699 = vrcp.pop %v4629
        %v4700 = vmul.f32 %v4629, %v4699
        %v4701 = vsub.f32 1.0, %v4700
        %v4702 = vmul.f32 %v4699, %v4701
        %v4703 = vadd.f32 %v4699, %v4702
        %vm4704 = vweird.f32 %v4629
        %vm4705 = vweird.f32 %v4699
        %vm4706 = vmor %vm4704, %vm4705
        %v4707 = vsel %vm4706, %v4699, %v4703
        %v4708 = vand.u32 2147483647, %v4629
        %vm4709 = vcmp.eq.f32.partialorder %v4708, 8.507059e+37
        %v4710 = vand.u32 %v4629, 2147483648
        %v4711 = vor.u32 1.1754944e-38, %v4710
        %v4712 = vsel %vm4709, %v4711, %v4707
        %v4713 = vmul.f32 %v4608, %v4712
        %v4714 = vrcp.pop %v4632
        %v4715 = vmul.f32 %v4632, %v4714
        %v4716 = vsub.f32 1.0, %v4715
        %v4717 = vmul.f32 %v4714, %v4716
        %v4718 = vadd.f32 %v4714, %v4717
        %vm4719 = vweird.f32 %v4632
        %vm4720 = vweird.f32 %v4714
        %vm4721 = vmor %vm4719, %vm4720
        %v4722 = vsel %vm4721, %v4714, %v4718
        %v4723 = vand.u32 2147483647, %v4632
        %vm4724 = vcmp.eq.f32.partialorder %v4723, 8.507059e+37
        %v4725 = vand.u32 %v4632, 2147483648
        %v4726 = vor.u32 1.1754944e-38, %v4725
        %v4727 = vsel %vm4724, %v4726, %v4722
        %v4728 = vmul.f32 %v4610, %v4727
        %v4729 = vrcp.pop %v4635
        %v4730 = vmul.f32 %v4635, %v4729
        %v4731 = vsub.f32 1.0, %v4730
        %v4732 = vmul.f32 %v4729, %v4731
        %v4733 = vadd.f32 %v4729, %v4732
        %vm4734 = vweird.f32 %v4635
        %vm4735 = vweird.f32 %v4729
        %vm4736 = vmor %vm4734, %vm4735
        %v4737 = vsel %vm4736, %v4729, %v4733
        %v4738 = vand.u32 2147483647, %v4635
        %vm4739 = vcmp.eq.f32.partialorder %v4738, 8.507059e+37
        %v4740 = vand.u32 %v4635, 2147483648
        %v4741 = vor.u32 1.1754944e-38, %v4740
        %v4742 = vsel %vm4739, %v4741, %v4737
        %v4743 = vmul.f32 %v4612, %v4742
        %v4744 = vrcp.pop %v4638
        %v4745 = vmul.f32 %v4638, %v4744
        %v4746 = vsub.f32 1.0, %v4745
        %v4747 = vmul.f32 %v4744, %v4746
        %v4748 = vadd.f32 %v4744, %v4747
        %vm4749 = vweird.f32 %v4638
        %vm4750 = vweird.f32 %v4744
        %vm4751 = vmor %vm4749, %vm4750
        %v4752 = vsel %vm4751, %v4744, %v4748
        %v4753 = vand.u32 2147483647, %v4638
        %vm4754 = vcmp.eq.f32.partialorder %v4753, 8.507059e+37
        %v4755 = vand.u32 %v4638, 2147483648
        %v4756 = vor.u32 1.1754944e-38, %v4755
        %v4757 = vsel %vm4754, %v4756, %v4752
        %v4758 = vmul.f32 %v4614, %v4757
        %v4759 = vld [vmem:[#allocation15] sm:$0xff]
        %v4760 = vld [vmem:[#allocation15 + $0x8] sm:$0xff]
        %v4761 = vld [vmem:[#allocation15 + $0x10] sm:$0xff]
        %v4762 = vld [vmem:[#allocation15 + $0x18] sm:$0xff]
        %v4763 = vld [vmem:[#allocation15 + $0x20] sm:$0xff]
        %v4764 = vld [vmem:[#allocation15 + $0x28] sm:$0xff]
        %v4765 = vld [vmem:[#allocation15 + $0x30] sm:$0xff]
        %v4766 = vld [vmem:[#allocation15 + $0x38] sm:$0xff]
        %v4767 = vld [vmem:[%s13] sm:$0x1]
        %v4769 = vperm.slane %v4767, 0
        %4771 = vmatpush.msra.mxu0 0.0
        %4772 = vmatpush.msra.mxu0 0.0
        %4773 = vmatpush.msra.mxu0 0.0
        %4774 = vmatpush.msra.mxu0 0.0
        %4775 = vmatpush.msra.mxu0 0.0
        %4776 = vmatpush.msra.mxu0 0.0
        %4777 = vmatpush.msra.mxu0 0.0
        %4778 = vmatpush.msra.mxu0 0.0
        %4779 = vmatpush.msra.mxu0 %v4766
        %4780 = vmatpush.msra.mxu0 %v4765
        %4781 = vmatpush.msra.mxu0 %v4764
        %4782 = vmatpush.msra.mxu0 %v4763
        %4783 = vmatpush.msra.mxu0 %v4762
        %4784 = vmatpush.msra.mxu0 %v4761
        %4785 = vmatpush.msra.mxu0 %v4760
        %4786 = vmatpush.msra.mxu0 %v4759
        %4787 = vmatmul.f32.gmra.mxu0 %v4168
        %v4788 = vpop.f32.mrf.mxu0
        %v4789 = vadd.f32 %v4769, %v4788
        %4790 = vdwg.mxu0
        %v4791 = vmax.f32 %v4789, 0.0
        %v4792 = vld [vmem:[#allocation17] sm:$0xff]
        %v4793 = vld [vmem:[#allocation17 + $0x8] sm:$0xff]
        %v4794 = vld [vmem:[#allocation17 + $0x10] sm:$0xff]
        %v4795 = vld [vmem:[#allocation17 + $0x18] sm:$0xff]
        %v4796 = vld [vmem:[%s15] sm:$0x1]
        %v4798 = vperm.slane %v4796, 0
        %4800 = vmatpush.msra.mxu0 0.0
        %4801 = vmatpush.msra.mxu0 0.0
        %4802 = vmatpush.msra.mxu0 0.0
        %4803 = vmatpush.msra.mxu0 0.0
        %4804 = vmatpush.msra.mxu0 0.0
        %4805 = vmatpush.msra.mxu0 0.0
        %4806 = vmatpush.msra.mxu0 0.0
        %4807 = vmatpush.msra.mxu0 0.0
        %4808 = vmatpush.msra.mxu0 0.0
        %4809 = vmatpush.msra.mxu0 0.0
        %4810 = vmatpush.msra.mxu0 0.0
        %4811 = vmatpush.msra.mxu0 0.0
        %4812 = vmatpush.msra.mxu0 %v4795
        %4813 = vmatpush.msra.mxu0 %v4794
        %4814 = vmatpush.msra.mxu0 %v4793
        %4815 = vmatpush.msra.mxu0 %v4792
        %4816 = vmatmul.f32.gmra.mxu0 %v4200
        %v4817 = vpop.f32.mrf.mxu0
        %v4818 = vadd.f32 %v4798, %v4817
        %4819 = vmatmul.f32.gmra.mxu0 %v4203
        %v4820 = vpop.f32.mrf.mxu0
        %v4821 = vadd.f32 %v4798, %v4820
        %4822 = vmatmul.f32.gmra.mxu0 %v4206
        %v4823 = vpop.f32.mrf.mxu0
        %v4824 = vadd.f32 %v4798, %v4823
        %4825 = vmatmul.f32.gmra.mxu0 %v4209
        %v4826 = vpop.f32.mrf.mxu0
        %v4827 = vadd.f32 %v4798, %v4826
        %4828 = vmatmul.f32.gmra.mxu0 %v4212
        %v4829 = vpop.f32.mrf.mxu0
        %v4830 = vadd.f32 %v4798, %v4829
        %4831 = vmatmul.f32.gmra.mxu0 %v4215
        %v4832 = vpop.f32.mrf.mxu0
        %v4833 = vadd.f32 %v4798, %v4832
        %4834 = vmatmul.f32.gmra.mxu0 %v4218
        %v4835 = vpop.f32.mrf.mxu0
        %v4836 = vadd.f32 %v4798, %v4835
        %4837 = vmatmul.f32.gmra.mxu0 %v4221
        %v4838 = vpop.f32.mrf.mxu0
        %v4839 = vadd.f32 %v4798, %v4838
        %4840 = vdwg.mxu0
        %v4841 = vmax.f32 %v4818, 0.0
        %v4842 = vmax.f32 %v4821, 0.0
        %v4843 = vmax.f32 %v4824, 0.0
        %v4844 = vmax.f32 %v4827, 0.0
        %v4845 = vmax.f32 %v4830, 0.0
        %v4846 = vmax.f32 %v4833, 0.0
        %v4847 = vmax.f32 %v4836, 0.0
        %v4848 = vmax.f32 %v4839, 0.0
        %vm4849 = vcmask 64512
        %v4851 = vsel %vm4849, %v4653, 0
        %4853 = vmatpush.msra.mxu0 0.0
        %4854 = vmatpush.msra.mxu0 0.0
        %4855 = vmatpush.msra.mxu0 0.0
        %4856 = vmatpush.msra.mxu0 0.0
        %4857 = vmatpush.msra.mxu0 0.0
        %4858 = vmatpush.msra.mxu0 0.0
        %4859 = vmatpush.msra.mxu0 0.0
        %4860 = vmatpush.msra.mxu0 0.0
        %4861 = vmatpush.msra.mxu0 0.0
        %4862 = vmatpush.msra.mxu0 0.0
        %4863 = vmatpush.msra.mxu0 0.0
        %4864 = vmatpush.msra.mxu0 0.0
        %4865 = vmatpush.msra.mxu0 0.0
        %4866 = vmatpush.msra.mxu0 0.0
        %4867 = vmatpush.msra.mxu0 0.0
        %4868 = vmatpush.msra.mxu0 %v4841
        %4869 = vmatmul.f32.gmra.mxu0 %v4851
        %v4870 = vpop.f32.mrf.mxu0
        %v4871 = vadd.f32 0.0, %v4870
        %4872 = vdwg.mxu0
        %v4874 = vsel %vm4849, %v4668, 0
        %4876 = vmatpush.msra.mxu0 0.0
        %4877 = vmatpush.msra.mxu0 0.0
        %4878 = vmatpush.msra.mxu0 0.0
        %4879 = vmatpush.msra.mxu0 0.0
        %4880 = vmatpush.msra.mxu0 0.0
        %4881 = vmatpush.msra.mxu0 0.0
        %4882 = vmatpush.msra.mxu0 0.0
        %4883 = vmatpush.msra.mxu0 0.0
        %4884 = vmatpush.msra.mxu0 0.0
        %4885 = vmatpush.msra.mxu0 0.0
        %4886 = vmatpush.msra.mxu0 0.0
        %4887 = vmatpush.msra.mxu0 0.0
        %4888 = vmatpush.msra.mxu0 0.0
        %4889 = vmatpush.msra.mxu0 0.0
        %4890 = vmatpush.msra.mxu0 0.0
        %4891 = vmatpush.msra.mxu0 %v4842
        %4892 = vmatmul.f32.gmra.mxu0 %v4874
        %v4893 = vpop.f32.mrf.mxu0
        %v4894 = vadd.f32 0.0, %v4893
        %4895 = vdwg.mxu0
        %v4897 = vsel %vm4849, %v4683, 0
        %4899 = vmatpush.msra.mxu0 0.0
        %4900 = vmatpush.msra.mxu0 0.0
        %4901 = vmatpush.msra.mxu0 0.0
        %4902 = vmatpush.msra.mxu0 0.0
        %4903 = vmatpush.msra.mxu0 0.0
        %4904 = vmatpush.msra.mxu0 0.0
        %4905 = vmatpush.msra.mxu0 0.0
        %4906 = vmatpush.msra.mxu0 0.0
        %4907 = vmatpush.msra.mxu0 0.0
        %4908 = vmatpush.msra.mxu0 0.0
        %4909 = vmatpush.msra.mxu0 0.0
        %4910 = vmatpush.msra.mxu0 0.0
        %4911 = vmatpush.msra.mxu0 0.0
        %4912 = vmatpush.msra.mxu0 0.0
        %4913 = vmatpush.msra.mxu0 0.0
        %4914 = vmatpush.msra.mxu0 %v4843
        %4915 = vmatmul.f32.gmra.mxu0 %v4897
        %v4916 = vpop.f32.mrf.mxu0
        %v4917 = vadd.f32 0.0, %v4916
        %4918 = vdwg.mxu0
        %v4920 = vsel %vm4849, %v4698, 0
        %4922 = vmatpush.msra.mxu0 0.0
        %4923 = vmatpush.msra.mxu0 0.0
        %4924 = vmatpush.msra.mxu0 0.0
        %4925 = vmatpush.msra.mxu0 0.0
        %4926 = vmatpush.msra.mxu0 0.0
        %4927 = vmatpush.msra.mxu0 0.0
        %4928 = vmatpush.msra.mxu0 0.0
        %4929 = vmatpush.msra.mxu0 0.0
        %4930 = vmatpush.msra.mxu0 0.0
        %4931 = vmatpush.msra.mxu0 0.0
        %4932 = vmatpush.msra.mxu0 0.0
        %4933 = vmatpush.msra.mxu0 0.0
        %4934 = vmatpush.msra.mxu0 0.0
        %4935 = vmatpush.msra.mxu0 0.0
        %4936 = vmatpush.msra.mxu0 0.0
        %4937 = vmatpush.msra.mxu0 %v4844
        %4938 = vmatmul.f32.gmra.mxu0 %v4920
        %v4939 = vpop.f32.mrf.mxu0
        %v4940 = vadd.f32 0.0, %v4939
        %4941 = vdwg.mxu0
        %v4943 = vsel %vm4849, %v4713, 0
        %4945 = vmatpush.msra.mxu0 0.0
        %4946 = vmatpush.msra.mxu0 0.0
        %4947 = vmatpush.msra.mxu0 0.0
        %4948 = vmatpush.msra.mxu0 0.0
        %4949 = vmatpush.msra.mxu0 0.0
        %4950 = vmatpush.msra.mxu0 0.0
        %4951 = vmatpush.msra.mxu0 0.0
        %4952 = vmatpush.msra.mxu0 0.0
        %4953 = vmatpush.msra.mxu0 0.0
        %4954 = vmatpush.msra.mxu0 0.0
        %4955 = vmatpush.msra.mxu0 0.0
        %4956 = vmatpush.msra.mxu0 0.0
        %4957 = vmatpush.msra.mxu0 0.0
        %4958 = vmatpush.msra.mxu0 0.0
        %4959 = vmatpush.msra.mxu0 0.0
        %4960 = vmatpush.msra.mxu0 %v4845
        %4961 = vmatmul.f32.gmra.mxu0 %v4943
        %v4962 = vpop.f32.mrf.mxu0
        %v4963 = vadd.f32 0.0, %v4962
        %4964 = vdwg.mxu0
        %v4966 = vsel %vm4849, %v4728, 0
        %4968 = vmatpush.msra.mxu0 0.0
        %4969 = vmatpush.msra.mxu0 0.0
        %4970 = vmatpush.msra.mxu0 0.0
        %4971 = vmatpush.msra.mxu0 0.0
        %4972 = vmatpush.msra.mxu0 0.0
        %4973 = vmatpush.msra.mxu0 0.0
        %4974 = vmatpush.msra.mxu0 0.0
        %4975 = vmatpush.msra.mxu0 0.0
        %4976 = vmatpush.msra.mxu0 0.0
        %4977 = vmatpush.msra.mxu0 0.0
        %4978 = vmatpush.msra.mxu0 0.0
        %4979 = vmatpush.msra.mxu0 0.0
        %4980 = vmatpush.msra.mxu0 0.0
        %4981 = vmatpush.msra.mxu0 0.0
        %4982 = vmatpush.msra.mxu0 0.0
        %4983 = vmatpush.msra.mxu0 %v4846
        %4984 = vmatmul.f32.gmra.mxu0 %v4966
        %v4985 = vpop.f32.mrf.mxu0
        %v4986 = vadd.f32 0.0, %v4985
        %4987 = vdwg.mxu0
        %v4989 = vsel %vm4849, %v4743, 0
        %4991 = vmatpush.msra.mxu0 0.0
        %4992 = vmatpush.msra.mxu0 0.0
        %4993 = vmatpush.msra.mxu0 0.0
        %4994 = vmatpush.msra.mxu0 0.0
        %4995 = vmatpush.msra.mxu0 0.0
        %4996 = vmatpush.msra.mxu0 0.0
        %4997 = vmatpush.msra.mxu0 0.0
        %4998 = vmatpush.msra.mxu0 0.0
        %4999 = vmatpush.msra.mxu0 0.0
        %5000 = vmatpush.msra.mxu0 0.0
        %5001 = vmatpush.msra.mxu0 0.0
        %5002 = vmatpush.msra.mxu0 0.0
        %5003 = vmatpush.msra.mxu0 0.0
        %5004 = vmatpush.msra.mxu0 0.0
        %5005 = vmatpush.msra.mxu0 0.0
        %5006 = vmatpush.msra.mxu0 %v4847
        %5007 = vmatmul.f32.gmra.mxu0 %v4989
        %v5008 = vpop.f32.mrf.mxu0
        %v5009 = vadd.f32 0.0, %v5008
        %5010 = vdwg.mxu0
        %v5012 = vsel %vm4849, %v4758, 0
        %5014 = vmatpush.msra.mxu0 0.0
        %5015 = vmatpush.msra.mxu0 0.0
        %5016 = vmatpush.msra.mxu0 0.0
        %5017 = vmatpush.msra.mxu0 0.0
        %5018 = vmatpush.msra.mxu0 0.0
        %5019 = vmatpush.msra.mxu0 0.0
        %5020 = vmatpush.msra.mxu0 0.0
        %5021 = vmatpush.msra.mxu0 0.0
        %5022 = vmatpush.msra.mxu0 0.0
        %5023 = vmatpush.msra.mxu0 0.0
        %5024 = vmatpush.msra.mxu0 0.0
        %5025 = vmatpush.msra.mxu0 0.0
        %5026 = vmatpush.msra.mxu0 0.0
        %5027 = vmatpush.msra.mxu0 0.0
        %5028 = vmatpush.msra.mxu0 0.0
        %5029 = vmatpush.msra.mxu0 %v4848
        %5030 = vmatmul.f32.gmra.mxu0 %v5012
        %v5031 = vpop.f32.mrf.mxu0
        %v5032 = vadd.f32 0.0, %v5031
        %5033 = vdwg.mxu0
        %v5042 = vrot.slane %v4894, 7
        %v5043 = vsel %vm1242, %v5042, %v4871
        %v5044 = vrot.slane %v4917, 6
        %v5045 = vsel %vm1245, %v5044, %v5043
        %v5046 = vrot.slane %v4940, 5
        %v5047 = vsel %vm1248, %v5046, %v5045
        %v5048 = vrot.slane %v4963, 4
        %v5049 = vsel %vm1251, %v5048, %v5047
        %v5050 = vrot.slane %v4986, 3
        %v5051 = vsel %vm1254, %v5050, %v5049
        %v5052 = vrot.slane %v5009, 2
        %v5053 = vsel %vm1257, %v5052, %v5051
        %v5054 = vrot.slane %v5032, 1
        %v5055 = vsel %vm1260, %v5054, %v5053
        %v5057 = vmul.f32 %v4791, %v5055
        %v5058 = vld [vmem:[#allocation18] sm:$0xff]
        %v5059 = vld [vmem:[#allocation18 + $0x8] sm:$0xff]
        %v5060 = vld [vmem:[#allocation18 + $0x10] sm:$0xff]
        %v5061 = vld [vmem:[#allocation18 + $0x18] sm:$0xff]
        %v5062 = vld [vmem:[%s17] sm:$0x1]
        %v5064 = vperm.slane %v5062, 0
        %v5067 = vsel %vm788, %v5057, 0
        %5069 = vmatpush.msra.mxu0 0.0
        %5070 = vmatpush.msra.mxu0 0.0
        %5071 = vmatpush.msra.mxu0 0.0
        %5072 = vmatpush.msra.mxu0 0.0
        %5073 = vmatpush.msra.mxu0 0.0
        %5074 = vmatpush.msra.mxu0 0.0
        %5075 = vmatpush.msra.mxu0 0.0
        %5076 = vmatpush.msra.mxu0 0.0
        %5077 = vmatpush.msra.mxu0 0.0
        %5078 = vmatpush.msra.mxu0 0.0
        %5079 = vmatpush.msra.mxu0 0.0
        %5080 = vmatpush.msra.mxu0 0.0
        %5081 = vmatpush.msra.mxu0 %v5061
        %5082 = vmatpush.msra.mxu0 %v5060
        %5083 = vmatpush.msra.mxu0 %v5059
        %5084 = vmatpush.msra.mxu0 %v5058
        %5085 = vmatmul.f32.gmra.mxu0 %v5067
        %v5086 = vpop.f32.mrf.mxu0
        %v5087 = vadd.f32 %v5064, %v5086
        %5088 = vdwg.mxu0
        %v5090 = vrot.slane %v5087, 1
        %v5091 = vrot.slane %v5087, 2
        %v5092 = vrot.slane %v5087, 3
        %v5093 = vrot.slane %v5087, 4
        %v5094 = vrot.slane %v5087, 5
        %v5095 = vrot.slane %v5087, 6
        %v5096 = vrot.slane %v5087, 7
        %v5097 = vperm.slane %v5087, 0
        %v5098 = vperm.slane %v5090, 0
        %v5099 = vperm.slane %v5091, 0
        %v5100 = vperm.slane %v5092, 0
        %v5101 = vperm.slane %v5093, 0
        %v5102 = vperm.slane %v5094, 0
        %v5103 = vperm.slane %v5095, 0
        %v5104 = vperm.slane %v5096, 0
        %v5113 = vadd.f32 %v4146, %v5097
        %v5114 = vadd.f32 %v4147, %v5098
        %v5115 = vadd.f32 %v4148, %v5099
        %v5116 = vadd.f32 %v4149, %v5100
        %v5117 = vadd.f32 %v4150, %v5101
        %v5118 = vadd.f32 %v4151, %v5102
        %v5119 = vadd.f32 %v4152, %v5103
        %v5120 = vadd.f32 %v4153, %v5104
        %s5121 = scalar_lea.vmem [#allocation17], 32
        %v5122 = vld [vmem:[%s5121] sm:$0xff]
        %v5123 = vld [vmem:[%s5121 + $0x8] sm:$0xff]
        %v5124 = vld [vmem:[%s5121 + $0x10] sm:$0xff]
        %v5125 = vld [vmem:[%s5121 + $0x18] sm:$0xff]
        %s5126 = scalar_lea.vmem %s15, 1
        %v5127 = vld [vmem:[%s5126] sm:$0x1]
        %v5129 = vperm.slane %v5127, 0
        %v5132 = vsel %vm788, %v5113, 0
        %v5135 = vsel %vm788, %v5114, 0
        %v5138 = vsel %vm788, %v5115, 0
        %v5141 = vsel %vm788, %v5116, 0
        %v5144 = vsel %vm788, %v5117, 0
        %v5147 = vsel %vm788, %v5118, 0
        %v5150 = vsel %vm788, %v5119, 0
        %v5153 = vsel %vm788, %v5120, 0
        %5155 = vmatpush.msra.mxu0 0.0
        %5156 = vmatpush.msra.mxu0 0.0
        %5157 = vmatpush.msra.mxu0 0.0
        %5158 = vmatpush.msra.mxu0 0.0
        %5159 = vmatpush.msra.mxu0 0.0
        %5160 = vmatpush.msra.mxu0 0.0
        %5161 = vmatpush.msra.mxu0 0.0
        %5162 = vmatpush.msra.mxu0 0.0
        %5163 = vmatpush.msra.mxu0 0.0
        %5164 = vmatpush.msra.mxu0 0.0
        %5165 = vmatpush.msra.mxu0 0.0
        %5166 = vmatpush.msra.mxu0 0.0
        %5167 = vmatpush.msra.mxu0 %v5125
        %5168 = vmatpush.msra.mxu0 %v5124
        %5169 = vmatpush.msra.mxu0 %v5123
        %5170 = vmatpush.msra.mxu0 %v5122
        %5171 = vmatmul.f32.gmra.mxu0 %v5132
        %v5172 = vpop.f32.mrf.mxu0
        %v5173 = vadd.f32 %v5129, %v5172
        %5174 = vmatmul.f32.gmra.mxu0 %v5135
        %v5175 = vpop.f32.mrf.mxu0
        %v5176 = vadd.f32 %v5129, %v5175
        %5177 = vmatmul.f32.gmra.mxu0 %v5138
        %v5178 = vpop.f32.mrf.mxu0
        %v5179 = vadd.f32 %v5129, %v5178
        %5180 = vmatmul.f32.gmra.mxu0 %v5141
        %v5181 = vpop.f32.mrf.mxu0
        %v5182 = vadd.f32 %v5129, %v5181
        %5183 = vmatmul.f32.gmra.mxu0 %v5144
        %v5184 = vpop.f32.mrf.mxu0
        %v5185 = vadd.f32 %v5129, %v5184
        %5186 = vmatmul.f32.gmra.mxu0 %v5147
        %v5187 = vpop.f32.mrf.mxu0
        %v5188 = vadd.f32 %v5129, %v5187
        %5189 = vmatmul.f32.gmra.mxu0 %v5150
        %v5190 = vpop.f32.mrf.mxu0
        %v5191 = vadd.f32 %v5129, %v5190
        %5192 = vmatmul.f32.gmra.mxu0 %v5153
        %v5193 = vpop.f32.mrf.mxu0
        %v5194 = vadd.f32 %v5129, %v5193
        %5195 = vdwg.mxu0
        %v5196 = vmax.f32 %v5173, 0.0
        %v5197 = vmax.f32 %v5176, 0.0
        %v5198 = vmax.f32 %v5179, 0.0
        %v5199 = vmax.f32 %v5182, 0.0
        %v5200 = vmax.f32 %v5185, 0.0
        %v5201 = vmax.f32 %v5188, 0.0
        %v5202 = vmax.f32 %v5191, 0.0
        %v5203 = vmax.f32 %v5194, 0.0
        %v5204 = vrot.slane %v4653, 1
        %v5205 = vsel %vm4849, %v5204, 0
        %5207 = vmatpush.msra.mxu0 0.0
        %5208 = vmatpush.msra.mxu0 0.0
        %5209 = vmatpush.msra.mxu0 0.0
        %5210 = vmatpush.msra.mxu0 0.0
        %5211 = vmatpush.msra.mxu0 0.0
        %5212 = vmatpush.msra.mxu0 0.0
        %5213 = vmatpush.msra.mxu0 0.0
        %5214 = vmatpush.msra.mxu0 0.0
        %5215 = vmatpush.msra.mxu0 0.0
        %5216 = vmatpush.msra.mxu0 0.0
        %5217 = vmatpush.msra.mxu0 0.0
        %5218 = vmatpush.msra.mxu0 0.0
        %5219 = vmatpush.msra.mxu0 0.0
        %5220 = vmatpush.msra.mxu0 0.0
        %5221 = vmatpush.msra.mxu0 0.0
        %5222 = vmatpush.msra.mxu0 %v5196
        %5223 = vmatmul.f32.gmra.mxu0 %v5205
        %v5224 = vpop.f32.mrf.mxu0
        %v5225 = vadd.f32 0.0, %v5224
        %5226 = vdwg.mxu0
        %v5227 = vrot.slane %v4668, 1
        %v5228 = vsel %vm4849, %v5227, 0
        %5230 = vmatpush.msra.mxu0 0.0
        %5231 = vmatpush.msra.mxu0 0.0
        %5232 = vmatpush.msra.mxu0 0.0
        %5233 = vmatpush.msra.mxu0 0.0
        %5234 = vmatpush.msra.mxu0 0.0
        %5235 = vmatpush.msra.mxu0 0.0
        %5236 = vmatpush.msra.mxu0 0.0
        %5237 = vmatpush.msra.mxu0 0.0
        %5238 = vmatpush.msra.mxu0 0.0
        %5239 = vmatpush.msra.mxu0 0.0
        %5240 = vmatpush.msra.mxu0 0.0
        %5241 = vmatpush.msra.mxu0 0.0
        %5242 = vmatpush.msra.mxu0 0.0
        %5243 = vmatpush.msra.mxu0 0.0
        %5244 = vmatpush.msra.mxu0 0.0
        %5245 = vmatpush.msra.mxu0 %v5197
        %5246 = vmatmul.f32.gmra.mxu0 %v5228
        %v5247 = vpop.f32.mrf.mxu0
        %v5248 = vadd.f32 0.0, %v5247
        %5249 = vdwg.mxu0
        %v5250 = vrot.slane %v4683, 1
        %v5251 = vsel %vm4849, %v5250, 0
        %5253 = vmatpush.msra.mxu0 0.0
        %5254 = vmatpush.msra.mxu0 0.0
        %5255 = vmatpush.msra.mxu0 0.0
        %5256 = vmatpush.msra.mxu0 0.0
        %5257 = vmatpush.msra.mxu0 0.0
        %5258 = vmatpush.msra.mxu0 0.0
        %5259 = vmatpush.msra.mxu0 0.0
        %5260 = vmatpush.msra.mxu0 0.0
        %5261 = vmatpush.msra.mxu0 0.0
        %5262 = vmatpush.msra.mxu0 0.0
        %5263 = vmatpush.msra.mxu0 0.0
        %5264 = vmatpush.msra.mxu0 0.0
        %5265 = vmatpush.msra.mxu0 0.0
        %5266 = vmatpush.msra.mxu0 0.0
        %5267 = vmatpush.msra.mxu0 0.0
        %5268 = vmatpush.msra.mxu0 %v5198
        %5269 = vmatmul.f32.gmra.mxu0 %v5251
        %v5270 = vpop.f32.mrf.mxu0
        %v5271 = vadd.f32 0.0, %v5270
        %5272 = vdwg.mxu0
        %v5273 = vrot.slane %v4698, 1
        %v5274 = vsel %vm4849, %v5273, 0
        %5276 = vmatpush.msra.mxu0 0.0
        %5277 = vmatpush.msra.mxu0 0.0
        %5278 = vmatpush.msra.mxu0 0.0
        %5279 = vmatpush.msra.mxu0 0.0
        %5280 = vmatpush.msra.mxu0 0.0
        %5281 = vmatpush.msra.mxu0 0.0
        %5282 = vmatpush.msra.mxu0 0.0
        %5283 = vmatpush.msra.mxu0 0.0
        %5284 = vmatpush.msra.mxu0 0.0
        %5285 = vmatpush.msra.mxu0 0.0
        %5286 = vmatpush.msra.mxu0 0.0
        %5287 = vmatpush.msra.mxu0 0.0
        %5288 = vmatpush.msra.mxu0 0.0
        %5289 = vmatpush.msra.mxu0 0.0
        %5290 = vmatpush.msra.mxu0 0.0
        %5291 = vmatpush.msra.mxu0 %v5199
        %5292 = vmatmul.f32.gmra.mxu0 %v5274
        %v5293 = vpop.f32.mrf.mxu0
        %v5294 = vadd.f32 0.0, %v5293
        %5295 = vdwg.mxu0
        %v5296 = vrot.slane %v4713, 1
        %v5297 = vsel %vm4849, %v5296, 0
        %5299 = vmatpush.msra.mxu0 0.0
        %5300 = vmatpush.msra.mxu0 0.0
        %5301 = vmatpush.msra.mxu0 0.0
        %5302 = vmatpush.msra.mxu0 0.0
        %5303 = vmatpush.msra.mxu0 0.0
        %5304 = vmatpush.msra.mxu0 0.0
        %5305 = vmatpush.msra.mxu0 0.0
        %5306 = vmatpush.msra.mxu0 0.0
        %5307 = vmatpush.msra.mxu0 0.0
        %5308 = vmatpush.msra.mxu0 0.0
        %5309 = vmatpush.msra.mxu0 0.0
        %5310 = vmatpush.msra.mxu0 0.0
        %5311 = vmatpush.msra.mxu0 0.0
        %5312 = vmatpush.msra.mxu0 0.0
        %5313 = vmatpush.msra.mxu0 0.0
        %5314 = vmatpush.msra.mxu0 %v5200
        %5315 = vmatmul.f32.gmra.mxu0 %v5297
        %v5316 = vpop.f32.mrf.mxu0
        %v5317 = vadd.f32 0.0, %v5316
        %5318 = vdwg.mxu0
        %v5319 = vrot.slane %v4728, 1
        %v5320 = vsel %vm4849, %v5319, 0
        %5322 = vmatpush.msra.mxu0 0.0
        %5323 = vmatpush.msra.mxu0 0.0
        %5324 = vmatpush.msra.mxu0 0.0
        %5325 = vmatpush.msra.mxu0 0.0
        %5326 = vmatpush.msra.mxu0 0.0
        %5327 = vmatpush.msra.mxu0 0.0
        %5328 = vmatpush.msra.mxu0 0.0
        %5329 = vmatpush.msra.mxu0 0.0
        %5330 = vmatpush.msra.mxu0 0.0
        %5331 = vmatpush.msra.mxu0 0.0
        %5332 = vmatpush.msra.mxu0 0.0
        %5333 = vmatpush.msra.mxu0 0.0
        %5334 = vmatpush.msra.mxu0 0.0
        %5335 = vmatpush.msra.mxu0 0.0
        %5336 = vmatpush.msra.mxu0 0.0
        %5337 = vmatpush.msra.mxu0 %v5201
        %5338 = vmatmul.f32.gmra.mxu0 %v5320
        %v5339 = vpop.f32.mrf.mxu0
        %v5340 = vadd.f32 0.0, %v5339
        %5341 = vdwg.mxu0
        %v5342 = vrot.slane %v4743, 1
        %v5343 = vsel %vm4849, %v5342, 0
        %5345 = vmatpush.msra.mxu0 0.0
        %5346 = vmatpush.msra.mxu0 0.0
        %5347 = vmatpush.msra.mxu0 0.0
        %5348 = vmatpush.msra.mxu0 0.0
        %5349 = vmatpush.msra.mxu0 0.0
        %5350 = vmatpush.msra.mxu0 0.0
        %5351 = vmatpush.msra.mxu0 0.0
        %5352 = vmatpush.msra.mxu0 0.0
        %5353 = vmatpush.msra.mxu0 0.0
        %5354 = vmatpush.msra.mxu0 0.0
        %5355 = vmatpush.msra.mxu0 0.0
        %5356 = vmatpush.msra.mxu0 0.0
        %5357 = vmatpush.msra.mxu0 0.0
        %5358 = vmatpush.msra.mxu0 0.0
        %5359 = vmatpush.msra.mxu0 0.0
        %5360 = vmatpush.msra.mxu0 %v5202
        %5361 = vmatmul.f32.gmra.mxu0 %v5343
        %v5362 = vpop.f32.mrf.mxu0
        %v5363 = vadd.f32 0.0, %v5362
        %5364 = vdwg.mxu0
        %v5365 = vrot.slane %v4758, 1
        %v5366 = vsel %vm4849, %v5365, 0
        %5368 = vmatpush.msra.mxu0 0.0
        %5369 = vmatpush.msra.mxu0 0.0
        %5370 = vmatpush.msra.mxu0 0.0
        %5371 = vmatpush.msra.mxu0 0.0
        %5372 = vmatpush.msra.mxu0 0.0
        %5373 = vmatpush.msra.mxu0 0.0
        %5374 = vmatpush.msra.mxu0 0.0
        %5375 = vmatpush.msra.mxu0 0.0
        %5376 = vmatpush.msra.mxu0 0.0
        %5377 = vmatpush.msra.mxu0 0.0
        %5378 = vmatpush.msra.mxu0 0.0
        %5379 = vmatpush.msra.mxu0 0.0
        %5380 = vmatpush.msra.mxu0 0.0
        %5381 = vmatpush.msra.mxu0 0.0
        %5382 = vmatpush.msra.mxu0 0.0
        %5383 = vmatpush.msra.mxu0 %v5203
        %5384 = vmatmul.f32.gmra.mxu0 %v5366
        %v5385 = vpop.f32.mrf.mxu0
        %v5386 = vadd.f32 0.0, %v5385
        %5387 = vdwg.mxu0
        %v5396 = vrot.slane %v5248, 7
        %v5397 = vsel %vm1242, %v5396, %v5225
        %v5398 = vrot.slane %v5271, 6
        %v5399 = vsel %vm1245, %v5398, %v5397
        %v5400 = vrot.slane %v5294, 5
        %v5401 = vsel %vm1248, %v5400, %v5399
        %v5402 = vrot.slane %v5317, 4
        %v5403 = vsel %vm1251, %v5402, %v5401
        %v5404 = vrot.slane %v5340, 3
        %v5405 = vsel %vm1254, %v5404, %v5403
        %v5406 = vrot.slane %v5363, 2
        %v5407 = vsel %vm1257, %v5406, %v5405
        %v5408 = vrot.slane %v5386, 1
        %v5409 = vsel %vm1260, %v5408, %v5407
        %5410 = vrot.lane.b32.xlu0 %v5409, 32
        %v5411 = vpop.permute.xlu0 %5410
        %v5413 = vmul.f32 %v4791, %v5411
        %s5414 = scalar_lea.vmem [#allocation18], 32
        %v5415 = vld [vmem:[%s5414] sm:$0xff]
        %v5416 = vld [vmem:[%s5414 + $0x8] sm:$0xff]
        %v5417 = vld [vmem:[%s5414 + $0x10] sm:$0xff]
        %v5418 = vld [vmem:[%s5414 + $0x18] sm:$0xff]
        %s5419 = scalar_lea.vmem %s17, 1
        %v5420 = vld [vmem:[%s5419] sm:$0x1]
        %v5422 = vperm.slane %v5420, 0
        %5425 = vrot.lane.b32.xlu0 %v5413, 96
        %v5426 = vpop.permute.xlu0 %5425
        %v5427 = vsel %vm788, %v5426, 0
        %5429 = vmatpush.msra.mxu0 0.0
        %5430 = vmatpush.msra.mxu0 0.0
        %5431 = vmatpush.msra.mxu0 0.0
        %5432 = vmatpush.msra.mxu0 0.0
        %5433 = vmatpush.msra.mxu0 0.0
        %5434 = vmatpush.msra.mxu0 0.0
        %5435 = vmatpush.msra.mxu0 0.0
        %5436 = vmatpush.msra.mxu0 0.0
        %5437 = vmatpush.msra.mxu0 0.0
        %5438 = vmatpush.msra.mxu0 0.0
        %5439 = vmatpush.msra.mxu0 0.0
        %5440 = vmatpush.msra.mxu0 0.0
        %5441 = vmatpush.msra.mxu0 %v5418
        %5442 = vmatpush.msra.mxu0 %v5417
        %5443 = vmatpush.msra.mxu0 %v5416
        %5444 = vmatpush.msra.mxu0 %v5415
        %5445 = vmatmul.f32.gmra.mxu0 %v5427
        %v5446 = vpop.f32.mrf.mxu0
        %v5447 = vadd.f32 %v5422, %v5446
        %5448 = vdwg.mxu0
        %v5450 = vrot.slane %v5447, 1
        %v5451 = vrot.slane %v5447, 2
        %v5452 = vrot.slane %v5447, 3
        %v5453 = vrot.slane %v5447, 4
        %v5454 = vrot.slane %v5447, 5
        %v5455 = vrot.slane %v5447, 6
        %v5456 = vrot.slane %v5447, 7
        %v5457 = vperm.slane %v5447, 0
        %v5458 = vperm.slane %v5450, 0
        %v5459 = vperm.slane %v5451, 0
        %v5460 = vperm.slane %v5452, 0
        %v5461 = vperm.slane %v5453, 0
        %v5462 = vperm.slane %v5454, 0
        %v5463 = vperm.slane %v5455, 0
        %v5464 = vperm.slane %v5456, 0
        %v5473 = vadd.f32 %v5113, %v5457
        %v5474 = vadd.f32 %v5114, %v5458
        %v5475 = vadd.f32 %v5115, %v5459
        %v5476 = vadd.f32 %v5116, %v5460
        %v5477 = vadd.f32 %v5117, %v5461
        %v5478 = vadd.f32 %v5118, %v5462
        %v5479 = vadd.f32 %v5119, %v5463
        %v5480 = vadd.f32 %v5120, %v5464
        %v5481 = vsel %vm788, %v5473, 0.0
        %v5482 = vrot.slane %v5481, 4
        %v5483 = vadd.f32 %v5481, %v5482
        %v5484 = vrot.slane %v5483, 2
        %v5485 = vadd.f32 %v5483, %v5484
        %v5486 = vrot.slane %v5485, 1
        %v5487 = vadd.f32 %v5485, %v5486
        %v5488 = vsel %vm788, %v5474, 0.0
        %v5489 = vrot.slane %v5488, 4
        %v5490 = vadd.f32 %v5488, %v5489
        %v5491 = vrot.slane %v5490, 2
        %v5492 = vadd.f32 %v5490, %v5491
        %v5493 = vrot.slane %v5492, 1
        %v5494 = vadd.f32 %v5492, %v5493
        %v5495 = vsel %vm788, %v5475, 0.0
        %v5496 = vrot.slane %v5495, 4
        %v5497 = vadd.f32 %v5495, %v5496
        %v5498 = vrot.slane %v5497, 2
        %v5499 = vadd.f32 %v5497, %v5498
        %v5500 = vrot.slane %v5499, 1
        %v5501 = vadd.f32 %v5499, %v5500
        %v5502 = vsel %vm788, %v5476, 0.0
        %v5503 = vrot.slane %v5502, 4
        %v5504 = vadd.f32 %v5502, %v5503
        %v5505 = vrot.slane %v5504, 2
        %v5506 = vadd.f32 %v5504, %v5505
        %v5507 = vrot.slane %v5506, 1
        %v5508 = vadd.f32 %v5506, %v5507
        %v5509 = vsel %vm788, %v5477, 0.0
        %v5510 = vrot.slane %v5509, 4
        %v5511 = vadd.f32 %v5509, %v5510
        %v5512 = vrot.slane %v5511, 2
        %v5513 = vadd.f32 %v5511, %v5512
        %v5514 = vrot.slane %v5513, 1
        %v5515 = vadd.f32 %v5513, %v5514
        %v5516 = vsel %vm788, %v5478, 0.0
        %v5517 = vrot.slane %v5516, 4
        %v5518 = vadd.f32 %v5516, %v5517
        %v5519 = vrot.slane %v5518, 2
        %v5520 = vadd.f32 %v5518, %v5519
        %v5521 = vrot.slane %v5520, 1
        %v5522 = vadd.f32 %v5520, %v5521
        %v5523 = vsel %vm788, %v5479, 0.0
        %v5524 = vrot.slane %v5523, 4
        %v5525 = vadd.f32 %v5523, %v5524
        %v5526 = vrot.slane %v5525, 2
        %v5527 = vadd.f32 %v5525, %v5526
        %v5528 = vrot.slane %v5527, 1
        %v5529 = vadd.f32 %v5527, %v5528
        %v5530 = vsel %vm788, %v5480, 0.0
        %v5531 = vrot.slane %v5530, 4
        %v5532 = vadd.f32 %v5530, %v5531
        %v5533 = vrot.slane %v5532, 2
        %v5534 = vadd.f32 %v5532, %v5533
        %v5535 = vrot.slane %v5534, 1
        %v5536 = vadd.f32 %v5534, %v5535
        %v5545 = vsel %vm1242, %v5494, %v5487
        %v5546 = vsel %vm1245, %v5501, %v5545
        %v5547 = vsel %vm1248, %v5508, %v5546
        %v5548 = vsel %vm1251, %v5515, %v5547
        %v5549 = vsel %vm1254, %v5522, %v5548
        %v5550 = vsel %vm1257, %v5529, %v5549
        %v5551 = vsel %vm1260, %v5536, %v5550
        %5553 = vst.msk [vmem:[%s764] sm:$0xff] %vm788, %v5551
        %s5554 = sand.u32 %s438, 1
        %s5555 = scalar_lea.sflag [#allocation5], %s5554
        %s5556 = sand.u32 %s438, 1
        %s5557 = smul.addr %s5556, 8
        %s5558 = scalar_lea.vmem [#allocation20], %s5557
        // Predicated region
        $region133: #{tpu_custom_call.1} parent=91 // pred_check
          %p5559 = pneg %p448
        $region134: #{tpu_custom_call.1} parent=91 // pred_check_branch
          %5561 = sbr.rel (%p5559) target = $region136
        $region135: #{tpu_custom_call.1} parent=91 // pred_region
          %5563 = vsyncadd %s5555, 0
          %s5564 = smul.addr %s42, 8
          %s5565 = scalar_lea.hbm %s18, %s5564
          %s5567 = sshll.u32 %s5558, 4
          %s5568 = int_to_ptr.vmem [resolvable:$true] %s5567
          %s5569 = sshll.u32 %s5565, 4
          %s5570 = int_to_ptr.hbm [resolvable:$true] %s5569
          %5572 = dma.vmem_to_hbm [thread:$0]  %s5568, 128, %s5570, %s5555
        $region136: #{tpu_custom_call.1} parent=91 // pred_fallthru
          _
      $region92: #{tpu_custom_call.1} parent=5 // pred_fallthru
        _
      %p5573 = scmp.le.s32.totalorder 2, %s37
      // Predicated region
      $region137: #{tpu_custom_call.1} parent=5 // pred_check
        %p5574 = pneg %p5573
      $region138: #{tpu_custom_call.1} parent=5 // pred_check_branch
        %5576 = sbr.rel (%p5574) target = $region140
      $region139: #{tpu_custom_call.1} parent=5 // pred_region
        %s5577 = ssub.s32 %s37, 2
        // Predicated region
        $region141: #{tpu_custom_call.1} parent=139 // pred_check
          %p5578 = pneg %p454
        $region142: #{tpu_custom_call.1} parent=139 // pred_check_branch
          %5580 = sbr.rel (%p5578) target = $region144
        $region143: #{tpu_custom_call.1} parent=139 // pred_region
          %s5581 = sand.u32 %s439, 1
          %s5582 = scalar_lea.sflag [#allocation5], %s5581
          %s5583 = sand.u32 %s439, 1
          %s5584 = smul.addr %s5583, 8
          %s5585 = scalar_lea.vmem [#allocation20], %s5584
          %5587 = dma.done %s5582, 128
        $region144: #{tpu_custom_call.1} parent=139 // pred_fallthru
          _
      $region140: #{tpu_custom_call.1} parent=5 // pred_fallthru
        _
    $region6: #{tpu_custom_call.1} parent=1 // loop_footer
      %s41 = sadd.s32 1, %s37
    $region7: #{tpu_custom_call.1} parent=1 // loop_footer_branch
      %36 = sbr.rel target = $region3
    $region8: #{tpu_custom_call.1} parent=1 // loop_exit
      _
    %5588 = vsyncpa [#allocation4], 1
    %s5589 = scalar_lea.sflag [#allocation4], 1
    %5590 = vsyncpa %s5589, 1
    %5591 = vsyncpa [#allocation7], 1
    %s5592 = scalar_lea.sflag [#allocation7], 1
    %5593 = vsyncpa %s5592, 1
    %5594 = vsyncpa [#allocation10], 1
    %5595 = vsyncpa [#allocation13], 1
    %5596 = vsyncpa [#allocation16], 1
    %5597 = vsyncpa [#allocation19], 1
    %5598 = vsyncpa [#allocation5], 1
    %s5599 = scalar_lea.sflag [#allocation5], 1
    %5600 = vsyncpa %s5599, 1

</llo_original>
